<compile_context>
chip_gen: v7x
topology: tpu7x:2x2x1
jax: 0.10.0
libtpu: 0.0.40
codegen_flags: <defaults>
</compile_context>

<pallas_src>
import functools

import jax
import jax.numpy as jnp
from jax import lax
from jax.experimental import pallas as pl
from jax.experimental.pallas import tpu as pltpu

F_PAD = 128                     # lane-dense hidden width
O_PAD = 128                     # lane-dense classifier width (real classes sliced out)
VMEM_LIMIT = 32 * 1024 * 1024   # explicit scoped-VMEM limit (safe on v5e/v6e/v7x)


# ---------------------------------------------------------------------------
# helpers
# ---------------------------------------------------------------------------
def _round_up(x, m):
    return ((x + m - 1) // m) * m


def _sigmoid(z):
    # exp on the EUP; exact divide keeps numerics environment-independent.
    return 1.0 / (1.0 + jnp.exp(-z))


def _pick_node_tile(n_pad, max_deg, fp):
    """Largest node tile in {128,256,512} such that the [max_deg, tn, fp] f32
    gathered-neighbour block stays under ~4 MiB and, when possible, there are
    >= 4 node tiles so v7x's two TensorCores both get work."""
    cap_elems = (4 << 20) // 4
    tn = 512
    while tn > 128 and (n_pad % tn != 0
                        or max_deg * tn * fp > cap_elems
                        or n_pad // tn < 4):
        tn //= 2
    return tn


# ---------------------------------------------------------------------------
# Pallas kernels
# ---------------------------------------------------------------------------
def node_linear_kernel(h_ref, w_ref, out_ref):
    """c = h @ Wc for one node tile (the 'x_j' half of the folded EdgeConv)."""
    out_ref[...] = jnp.dot(h_ref[...], w_ref[...],
                           preferred_element_type=jnp.float32)


def edgeconv_max_kernel(h_ref, wa_ref, b_ref, cg_ref, valid_ref, out_ref):
    """EdgeConv(Linear+Sigmoid, aggr='max') for one node tile, folded form.

    h     : [TN, Cin]   node features of this tile
    wa    : [Cin, F]    W_top - W_bot   (the 'x_i' half)
    b     : [1, F]
    cg    : [D, TN, F]  c[src] gathered per padded incoming-neighbour slot
    valid : [D, TN, 1]  1.0 where the slot holds a real edge, else 0.0
    out   : [TN, F]
    """
    a = jnp.dot(h_ref[...], wa_ref[...],
                preferred_element_type=jnp.float32) + b_ref[...]

    def fold(d, acc):
        msg = _sigmoid(a + cg_ref[d])                     # [TN, F]
        # messages are > 0, so 0 is both the running-max identity and the
        # PyG fill value for nodes with no incoming edge.
        return jnp.maximum(acc, msg * valid_ref[d])

    d_total = cg_ref.shape[0]
    acc = jnp.zeros(out_ref.shape, jnp.float32)
    if d_total <= 8:                 # small static unroll, only [TN,F] temps
        for d in range(d_total):
            acc = fold(d, acc)
    else:                            # bound live ranges for high-degree graphs
        acc = lax.fori_loop(0, d_total, fold, acc, unroll=4)
    out_ref[...] = acc


def pool_linear_kernel(batch_ref, h_ref, w_ref, b_ref, out_ref, acc_ref, *,
                       num_graphs):
    """Running graph max-pool over node tiles; output Linear on the last tile.

    batch : [TN, 1] int32 (graph id per node, -1 for padded nodes)
    h     : [TN, F]   w: [F, O_PAD]   b: [1, O_PAD]
    out   : [G_pad, O_PAD]            acc: [G_pad, F] VMEM scratch
    """
    ni = pl.program_id(0)

    @pl.when(ni == 0)
    def _():
        acc_ref[...] = jnp.zeros_like(acc_ref)    # h >= 0 -> 0 is the identity

    h = h_ref[...]
    batch = batch_ref[...]                        # [TN, 1]
    for g in range(num_graphs):                   # 2-D temps only
        gmax = jnp.max(jnp.where(batch == g, h, 0.0), axis=0, keepdims=True)
        acc_ref[g:g + 1, :] = jnp.maximum(acc_ref[g:g + 1, :], gmax)
    # TODO(synk): for large num_graphs use contiguous per-graph node slices via
    # scalar prefetch instead of the per-graph compare loop.

    @pl.when(ni == pl.num_programs(0) - 1)
    def _():
        out_ref[...] = jnp.dot(acc_ref[...], w_ref[...],
                               preferred_element_type=jnp.float32) + b_ref[...]


# ---------------------------------------------------------------------------
# pallas_call wrappers
# ---------------------------------------------------------------------------
def node_linear(h, wc, tn):
    n, cin = h.shape
    fp = wc.shape[1]
    return pl.pallas_call(
        node_linear_kernel,
        out_shape=jax.ShapeDtypeStruct((n, fp), jnp.float32),
        grid_spec=pltpu.PrefetchScalarGridSpec(
            num_scalar_prefetch=0,
            grid=(n // tn,),
            in_specs=[
                pl.BlockSpec((tn, cin), lambda i: (i, 0)),
                pl.BlockSpec((cin, fp), lambda i: (0, 0)),
            ],
            out_specs=pl.BlockSpec((tn, fp), lambda i: (i, 0)),
        ),
        compiler_params=pltpu.CompilerParams(
            dimension_semantics=("parallel",),
            vmem_limit_bytes=VMEM_LIMIT),
    )(h, wc)


def edgeconv_max(h, wa, b, cg, valid, tn):
    n, cin = h.shape
    fp = wa.shape[1]
    d = cg.shape[0]
    return pl.pallas_call(
        edgeconv_max_kernel,
        out_shape=jax.ShapeDtypeStruct((n, fp), jnp.float32),
        grid_spec=pltpu.PrefetchScalarGridSpec(
            num_scalar_prefetch=0,
            grid=(n // tn,),
            in_specs=[
                pl.BlockSpec((tn, cin), lambda i: (i, 0)),       # h tile
                pl.BlockSpec((cin, fp), lambda i: (0, 0)),       # Wa
                pl.BlockSpec((1, fp), lambda i: (0, 0)),         # bias
                pl.BlockSpec((d, tn, fp), lambda i: (0, i, 0)),  # gathered c[src]
                pl.BlockSpec((d, tn, 1), lambda i: (0, i, 0)),   # slot validity
            ],
            out_specs=pl.BlockSpec((tn, fp), lambda i: (i, 0)),
        ),
        compiler_params=pltpu.CompilerParams(
            dimension_semantics=("parallel",),
            vmem_limit_bytes=VMEM_LIMIT),
    )(h, wa, b, cg, valid)


def pool_and_classify(h, batch_col, w_out, b_out, num_graphs, tn):
    n, fp = h.shape
    o_pad = w_out.shape[1]
    g_pad = _round_up(max(num_graphs, 8), 8)
    kernel = functools.partial(pool_linear_kernel, num_graphs=num_graphs)
    return pl.pallas_call(
        kernel,
        out_shape=jax.ShapeDtypeStruct((g_pad, o_pad), jnp.float32),
        grid_spec=pltpu.PrefetchScalarGridSpec(
            num_scalar_prefetch=0,
            grid=(n // tn,),
            in_specs=[
                pl.BlockSpec((tn, 1), lambda i: (i, 0)),      # graph id per node
                pl.BlockSpec((tn, fp), lambda i: (i, 0)),     # node features
                pl.BlockSpec((fp, o_pad), lambda i: (0, 0)),  # classifier weight
                pl.BlockSpec((1, o_pad), lambda i: (0, 0)),   # classifier bias
            ],
            out_specs=pl.BlockSpec((g_pad, o_pad), lambda i: (0, 0)),
            scratch_shapes=[pltpu.VMEM((g_pad, fp), jnp.float32)],
        ),
        compiler_params=pltpu.CompilerParams(
            dimension_semantics=("arbitrary",),
            vmem_limit_bytes=VMEM_LIMIT),
    )(batch_col, h, w_out, b_out)


# ---------------------------------------------------------------------------
# graph preprocessing (done once; topology shared by all 5 layers)
# ---------------------------------------------------------------------------
def prepare_graph(edge_index, n_pad):
    """Padded incoming-neighbour table, layout [max_deg, n_pad, ...] so the
    kernel slices one contiguous [TN, F] slab per neighbour slot."""
    src = edge_index[0].astype(jnp.int32)
    tgt = edge_index[1].astype(jnp.int32)
    e = src.shape[0]

    deg = jnp.zeros((n_pad,), jnp.int32).at[tgt].add(1)
    max_deg = max(int(jax.device_get(jnp.max(deg))), 1)

    order = jnp.argsort(tgt)                    # group edges by target node
    tgt_s, src_s = tgt[order], src[order]
    seg_start = jnp.cumsum(deg) - deg           # first slot of each target
    slot = jnp.arange(e, dtype=jnp.int32) - seg_start[tgt_s]

    nbr = jnp.zeros((n_pad, max_deg), jnp.int32).at[tgt_s, slot].set(src_s)
    valid = jnp.zeros((n_pad, max_deg), jnp.float32).at[tgt_s, slot].set(1.0)
    return nbr.T, valid.T.reshape(max_deg, n_pad, 1), max_deg


# ---------------------------------------------------------------------------
# forward pass (Pallas path)
# ---------------------------------------------------------------------------
@functools.partial(jax.jit, static_argnames=("num_graphs", "num_classes", "tn"))
def best_gnn_forward(x_pad, nbr, valid, batch_col, params, num_graphs,
                     num_classes, tn):
    h = x_pad
    for (wa, wc, b) in params["edge_convs"]:
        c = node_linear(h, wc, tn)                 # c = h @ W_bot        (Pallas)
        cg = c[nbr]                                # c[src] per slot  (XLA gather)
        h = edgeconv_max(h, wa, b, cg, valid, tn)  # sigmoid + segment max (Pallas)
    w_out, b_out = params["output"]
    logits = pool_and_classify(h, batch_col, w_out, b_out, num_graphs, tn)
    return logits[:num_graphs, :num_classes]


# ---------------------------------------------------------------------------
# parameter construction / folding / lane padding
# ---------------------------------------------------------------------------
def init_linear(key, fan_in, fan_out):
    """PyTorch nn.Linear default init: U(-1/sqrt(fan_in), 1/sqrt(fan_in))."""
    kw, kb = jax.random.split(key)
    bound = 1.0 / jnp.sqrt(jnp.float32(fan_in))
    w = jax.random.uniform(kw, (fan_in, fan_out), jnp.float32, -bound, bound)
    b = jax.random.uniform(kb, (fan_out,), jnp.float32, -bound, bound)
    return w, b


def fold_edge_linear(w, b, cin_real, cin_pad, f_pad):
    """Split Linear(2*cin_real -> f) into the folded per-node form and zero-pad
    to lane-dense shapes: z(i<-j) = x_i @ Wa + x_j @ Wc + b, Wa = W_top - W_bot,
    Wc = W_bot.  Zero pad rows/cols keep real lanes exact; padded output lanes
    carry sigmoid(0)=0.5, which the next layer's zero rows ignore."""
    f_real = w.shape[1]
    w_top, w_bot = w[:cin_real], w[cin_real:2 * cin_real]
    wa = jnp.zeros((cin_pad, f_pad), jnp.float32).at[:cin_real, :f_real].set(w_top - w_bot)
    wc = jnp.zeros((cin_pad, f_pad), jnp.float32).at[:cin_real, :f_real].set(w_bot)
    bp = jnp.zeros((1, f_pad), jnp.float32).at[0, :f_real].set(b)
    return wa, wc, bp


def pad_output_linear(w, b, f_pad, o_pad):
    f_real, o_real = w.shape
    wp = jnp.zeros((f_pad, o_pad), jnp.float32).at[:f_real, :o_real].set(w)
    bp = jnp.zeros((1, o_pad), jnp.float32).at[0, :o_real].set(b)
    return wp, bp


# ---------------------------------------------------------------------------
# pure-JAX reference (unpadded parameters) for the correctness check
# ---------------------------------------------------------------------------
def reference_forward(x, edge_index, batch, params, num_graphs):
    src, tgt = edge_index[0], edge_index[1]
    n = x.shape[0]
    h = x
    for (w, b) in params["edge_convs"]:
        x_i, x_j = h[tgt], h[src]
        z = jnp.concatenate([x_i, x_j - x_i], axis=-1) @ w + b
        msg = 1.0 / (1.0 + jnp.exp(-z))
        h = jax.ops.segment_max(msg, tgt, num_segments=n)
        h = jnp.where(jnp.isfinite(h), h, 0.0)
    pooled = jax.ops.segment_max(h, batch, num_segments=num_graphs)
    pooled = jnp.where(jnp.isfinite(pooled), pooled, 0.0)
    w_out, b_out = params["output"]
    return pooled @ w_out + b_out


# ---------------------------------------------------------------------------
if __name__ == "__main__":
    key = jax.random.PRNGKey(0)

    # Module layer sizes: Linear(2*3,64), 2x Linear(2*64,64), Linear(2*64,128),
    # Linear(2*128,128), output Linear(128,10).
    layer_io = [(3, 64), (64, 64), (64, 64), (64, 128), (128, 128)]
    num_classes = 10
    keys = jax.random.split(key, len(layer_io) + 2)
    raw_edge = [init_linear(keys[i], 2 * ci, fo)
                for i, (ci, fo) in enumerate(layer_io)]
    raw_out = init_linear(keys[len(layer_io)], 128, num_classes)
    raw_params = {"edge_convs": raw_edge, "output": raw_out}

    # Folded + lane-padded parameters for the Pallas path (real lanes unchanged).
    folded_edge = []
    for i, ((w, b), (ci, fo)) in enumerate(zip(raw_edge, layer_io)):
        cin_pad = ci if i == 0 else F_PAD     # raw 3-feature input stays unpadded
        folded_edge.append(fold_edge_linear(w, b, ci, cin_pad, F_PAD))
    padded_params = {"edge_convs": folded_edge,
                     "output": pad_output_linear(*raw_out, F_PAD, O_PAD)}

    # Small synthetic batch: 2 ring graphs x 256 nodes -> N=512, E=1024
    # (bidirectional ring edges, so every node has exactly 2 incoming edges).
    num_graphs, nodes_per_graph = 2, 256
    n = num_graphs * nodes_per_graph
    node = jnp.arange(n, dtype=jnp.int32)
    gid = node // nodes_per_graph
    nxt = gid * nodes_per_graph + (node + 1) % nodes_per_graph
    edge_index = jnp.stack([jnp.concatenate([node, nxt]),
                            jnp.concatenate([nxt, node])]).astype(jnp.int32)
    batch = gid
    x = jax.random.normal(keys[len(layer_io) + 1], (n, 3), jnp.float32)

    # ---- Pallas path: pad nodes, build the neighbour table once -------------
    n_pad = _round_up(n, 128)
    x_pad = jnp.zeros((n_pad, x.shape[1]), jnp.float32).at[:n].set(x)
    batch_col = jnp.full((n_pad, 1), -1, jnp.int32).at[:n, 0].set(batch)
    nbr, valid, max_deg = prepare_graph(edge_index, n_pad)
    tn = _pick_node_tile(n_pad, max_deg, F_PAD)

    out = jax.block_until_ready(
        best_gnn_forward(x_pad, nbr, valid, batch_col, padded_params,
                         num_graphs=num_graphs, num_classes=num_classes, tn=tn))
    assert out.shape == (num_graphs, num_classes), out.shape

    ref = jax.block_until_ready(
        reference_forward(x, edge_index, batch, raw_params, num_graphs))
    assert jnp.allclose(out, ref, rtol=5e-3, atol=5e-3), (out, ref)

    print("KERNEL_OK")
</pallas_src>

<mosaic_0001>
module attributes {stable_mosaic.version = 11 : i64} {
  func.func @node_linear_kernel(%arg0: i32, %arg1: memref<128x3xf32, #tpu.memory_space<vmem>>, %arg2: memref<3x128xf32, #tpu.memory_space<vmem>>, %arg3: memref<128x128xf32, #tpu.memory_space<vmem>>) attributes {dimension_semantics = [#tpu.dimension_semantics<parallel>], iteration_bounds = array<i64: 4>, scalar_prefetch = 0 : i64, scratch_operands = 0 : i64, tpu.core_type = #tpu.core_type<tc>, window_params = [{transform_indices = @transform_0, window_bounds = array<i64: 128, 3>}, {pipeline_mode = #tpu.pipeline_mode<synchronous>, transform_indices = @transform_1, window_bounds = array<i64: 3, 128>}, {transform_indices = @transform_2, window_bounds = array<i64: 128, 128>}]} {
    %c0 = arith.constant 0 : index
    %c0_0 = arith.constant 0 : index
    %0 = vector.load %arg1[%c0, %c0_0] : memref<128x3xf32, #tpu.memory_space<vmem>>, vector<128x3xf32>
    %c0_1 = arith.constant 0 : index
    %c0_2 = arith.constant 0 : index
    %1 = vector.load %arg2[%c0_1, %c0_2] : memref<3x128xf32, #tpu.memory_space<vmem>>, vector<3x128xf32>
    %cst = arith.constant dense<0.000000e+00> : vector<128x128xf32>
    %2 = tpu.matmul %0, %1, %cst {dimension_numbers = #tpu.dot_dimension_numbers<[1], [0], [0], [1], [0, 0, 1, 1], [], []>} : vector<128x3xf32>, vector<3x128xf32>, vector<128x128xf32> -> vector<128x128xf32>
    %c0_3 = arith.constant 0 : index
    %c0_4 = arith.constant 0 : index
    %3 = vector.load %arg3[%c0_3, %c0_4] : memref<128x128xf32, #tpu.memory_space<vmem>>, vector<128x128xf32>
    tpu.vector_store %arg3[%c0_3, %c0_4], %2 {strides = array<i32>} : memref<128x128xf32, #tpu.memory_space<vmem>>, vector<128x128xf32>,
    return
  }
  func.func @transform_0(%arg0: i32) -> (i32, i32) {
    %c0_i32 = arith.constant 0 : i32
    %c0_i32_0 = arith.constant 0 : i32
    return %arg0, %c0_i32 : i32, i32
  }
  func.func @transform_1(%arg0: i32) -> (i32, i32) {
    %c0_i32 = arith.constant 0 : i32
    %c0_i32_0 = arith.constant 0 : i32
    %c0_i32_1 = arith.constant 0 : i32
    return %c0_i32, %c0_i32_0 : i32, i32
  }
  func.func @transform_2(%arg0: i32) -> (i32, i32) {
    %c0_i32 = arith.constant 0 : i32
    %c0_i32_0 = arith.constant 0 : i32
    return %arg0, %c0_i32 : i32, i32
  }
}

module attributes {stable_mosaic.version = 11 : i64} {
  func.func @node_linear_kernel(%arg0: i32, %arg1: memref<128x128xf32, #tpu.memory_space<vmem>>, %arg2: memref<128x128xf32, #tpu.memory_space<vmem>>, %arg3: memref<128x128xf32, #tpu.memory_space<vmem>>) attributes {dimension_semantics = [#tpu.dimension_semantics<parallel>], iteration_bounds = array<i64: 4>, scalar_prefetch = 0 : i64, scratch_operands = 0 : i64, tpu.core_type = #tpu.core_type<tc>, window_params = [{transform_indices = @transform_0, window_bounds = array<i64: 128, 128>}, {pipeline_mode = #tpu.pipeline_mode<synchronous>, transform_indices = @transform_1, window_bounds = array<i64: 128, 128>}, {transform_indices = @transform_2, window_bounds = array<i64: 128, 128>}]} {
    %c0 = arith.constant 0 : index
    %c0_0 = arith.constant 0 : index
    %0 = vector.load %arg1[%c0, %c0_0] : memref<128x128xf32, #tpu.memory_space<vmem>>, vector<128x128xf32>
    %c0_1 = arith.constant 0 : index
    %c0_2 = arith.constant 0 : index
    %1 = vector.load %arg2[%c0_1, %c0_2] : memref<128x128xf32, #tpu.memory_space<vmem>>, vector<128x128xf32>
    %cst = arith.constant dense<0.000000e+00> : vector<128x128xf32>
    %2 = tpu.matmul %0, %1, %cst {dimension_numbers = #tpu.dot_dimension_numbers<[1], [0], [0], [1], [0, 0, 1, 1], [], []>} : vector<128x128xf32>, vector<128x128xf32>, vector<128x128xf32> -> vector<128x128xf32>
    %c0_3 = arith.constant 0 : index
    %c0_4 = arith.constant 0 : index
    %3 = vector.load %arg3[%c0_3, %c0_4] : memref<128x128xf32, #tpu.memory_space<vmem>>, vector<128x128xf32>
    tpu.vector_store %arg3[%c0_3, %c0_4], %2 {strides = array<i32>} : memref<128x128xf32, #tpu.memory_space<vmem>>, vector<128x128xf32>,
    return
  }
  func.func @transform_0(%arg0: i32) -> (i32, i32) {
    %c0_i32 = arith.constant 0 : i32
    %c0_i32_0 = arith.constant 0 : i32
    return %arg0, %c0_i32 : i32, i32
  }
  func.func @transform_1(%arg0: i32) -> (i32, i32) {
    %c0_i32 = arith.constant 0 : i32
    %c0_i32_0 = arith.constant 0 : i32
    %c0_i32_1 = arith.constant 0 : i32
    return %c0_i32, %c0_i32_0 : i32, i32
  }
  func.func @transform_2(%arg0: i32) -> (i32, i32) {
    %c0_i32 = arith.constant 0 : i32
    %c0_i32_0 = arith.constant 0 : i32
    return %arg0, %c0_i32 : i32, i32
  }
}

module attributes {stable_mosaic.version = 11 : i64} {
  func.func @edgeconv_max_kernel(%arg0: i32, %arg1: memref<128x3xf32, #tpu.memory_space<vmem>>, %arg2: memref<3x128xf32, #tpu.memory_space<vmem>>, %arg3: memref<1x128xf32, #tpu.memory_space<vmem>>, %arg4: memref<2x128x128xf32, #tpu.memory_space<vmem>>, %arg5: memref<2x128x1xf32, #tpu.memory_space<vmem>>, %arg6: memref<128x128xf32, #tpu.memory_space<vmem>>) attributes {dimension_semantics = [#tpu.dimension_semantics<parallel>], iteration_bounds = array<i64: 4>, scalar_prefetch = 0 : i64, scratch_operands = 0 : i64, tpu.core_type = #tpu.core_type<tc>, window_params = [{transform_indices = @transform_0, window_bounds = array<i64: 128, 3>}, {pipeline_mode = #tpu.pipeline_mode<synchronous>, transform_indices = @transform_1, window_bounds = array<i64: 3, 128>}, {pipeline_mode = #tpu.pipeline_mode<synchronous>, transform_indices = @transform_2, window_bounds = array<i64: 1, 128>}, {transform_indices = @transform_3, window_bounds = array<i64: 2, 128, 128>}, {transform_indices = @transform_4, window_bounds = array<i64: 2, 128, 1>}, {transform_indices = @transform_5, window_bounds = array<i64: 128, 128>}]} {
    %c0 = arith.constant 0 : index
    %c0_0 = arith.constant 0 : index
    %0 = vector.load %arg1[%c0, %c0_0] : memref<128x3xf32, #tpu.memory_space<vmem>>, vector<128x3xf32>
    %c0_1 = arith.constant 0 : index
    %c0_2 = arith.constant 0 : index
    %1 = vector.load %arg2[%c0_1, %c0_2] : memref<3x128xf32, #tpu.memory_space<vmem>>, vector<3x128xf32>
    %cst = arith.constant dense<0.000000e+00> : vector<128x128xf32>
    %2 = tpu.matmul %0, %1, %cst {dimension_numbers = #tpu.dot_dimension_numbers<[1], [0], [0], [1], [0, 0, 1, 1], [], []>} : vector<128x3xf32>, vector<3x128xf32>, vector<128x128xf32> -> vector<128x128xf32>
    %c0_3 = arith.constant 0 : index
    %c0_4 = arith.constant 0 : index
    %3 = vector.load %arg3[%c0_3, %c0_4] : memref<1x128xf32, #tpu.memory_space<vmem>>, vector<1x128xf32>
    %4 = vector.broadcast %3 : vector<1x128xf32> to vector<128x128xf32>
    %5 = arith.addf %2, %4 : vector<128x128xf32>
    %cst_5 = arith.constant 0.000000e+00 : f32
    %6 = vector.broadcast %cst_5 : f32 to vector<128x128xf32>
    %c0_6 = arith.constant 0 : index
    %c0_7 = arith.constant 0 : index
    %c0_8 = arith.constant 0 : index
    %7 = vector.load %arg4[%c0_6, %c0_7, %c0_8] : memref<2x128x128xf32, #tpu.memory_space<vmem>>, vector<1x128x128xf32>
    %8 = vector.shape_cast %7 : vector<1x128x128xf32> to vector<128x128xf32>
    %9 = arith.addf %5, %8 : vector<128x128xf32>
    %cst_9 = arith.constant 0.000000e+00 : f32
    %10 = vector.broadcast %cst_9 : f32 to vector<128x128xf32>
    %11 = arith.subf %10, %9 : vector<128x128xf32>
    %12 = math.exp %11 : vector<128x128xf32>
    %cst_10 = arith.constant 1.000000e+00 : f32
    %13 = vector.broadcast %cst_10 : f32 to vector<128x128xf32>
    %14 = arith.addf %13, %12 : vector<128x128xf32>
    %cst_11 = arith.constant 1.000000e+00 : f32
    %15 = vector.broadcast %cst_11 : f32 to vector<128x128xf32>
    %16 = arith.divf %15, %14 : vector<128x128xf32>
    %c0_12 = arith.constant 0 : index
    %c0_13 = arith.constant 0 : index
    %c0_14 = arith.constant 0 : index
    %17 = vector.load %arg5[%c0_12, %c0_13, %c0_14] : memref<2x128x1xf32, #tpu.memory_space<vmem>>, vector<1x128x1xf32>
    %18 = vector.shape_cast %17 : vector<1x128x1xf32> to vector<128x1xf32>
    %19 = vector.broadcast %18 : vector<128x1xf32> to vector<128x128xf32>
    %20 = arith.mulf %16, %19 : vector<128x128xf32>
    %21 = arith.maximumf %6, %20 : vector<128x128xf32>
    %c1 = arith.constant 1 : index
    %c0_15 = arith.constant 0 : index
    %c0_16 = arith.constant 0 : index
    %22 = vector.load %arg4[%c1, %c0_15, %c0_16] : memref<2x128x128xf32, #tpu.memory_space<vmem>>, vector<1x128x128xf32>
    %23 = vector.shape_cast %22 : vector<1x128x128xf32> to vector<128x128xf32>
    %24 = arith.addf %5, %23 : vector<128x128xf32>
    %cst_17 = arith.constant 0.000000e+00 : f32
    %25 = vector.broadcast %cst_17 : f32 to vector<128x128xf32>
    %26 = arith.subf %25, %24 : vector<128x128xf32>
    %27 = math.exp %26 : vector<128x128xf32>
    %cst_18 = arith.constant 1.000000e+00 : f32
    %28 = vector.broadcast %cst_18 : f32 to vector<128x128xf32>
    %29 = arith.addf %28, %27 : vector<128x128xf32>
    %cst_19 = arith.constant 1.000000e+00 : f32
    %30 = vector.broadcast %cst_19 : f32 to vector<128x128xf32>
    %31 = arith.divf %30, %29 : vector<128x128xf32>
    %c1_20 = arith.constant 1 : index
    %c0_21 = arith.constant 0 : index
    %c0_22 = arith.constant 0 : index
    %32 = vector.load %arg5[%c1_20, %c0_21, %c0_22] : memref<2x128x1xf32, #tpu.memory_space<vmem>>, vector<1x128x1xf32>
    %33 = vector.shape_cast %32 : vector<1x128x1xf32> to vector<128x1xf32>
    %34 = vector.broadcast %33 : vector<128x1xf32> to vector<128x128xf32>
    %35 = arith.mulf %31, %34 : vector<128x128xf32>
    %36 = arith.maximumf %21, %35 : vector<128x128xf32>
    %c0_23 = arith.constant 0 : index
    %c0_24 = arith.constant 0 : index
    %37 = vector.load %arg6[%c0_23, %c0_24] : memref<128x128xf32, #tpu.memory_space<vmem>>, vector<128x128xf32>
    tpu.vector_store %arg6[%c0_23, %c0_24], %36 {strides = array<i32>} : memref<128x128xf32, #tpu.memory_space<vmem>>, vector<128x128xf32>,
    return
  }
  func.func @transform_0(%arg0: i32) -> (i32, i32) {
    %c0_i32 = arith.constant 0 : i32
    %c0_i32_0 = arith.constant 0 : i32
    return %arg0, %c0_i32 : i32, i32
  }
  func.func @transform_1(%arg0: i32) -> (i32, i32) {
    %c0_i32 = arith.constant 0 : i32
    %c0_i32_0 = arith.constant 0 : i32
    %c0_i32_1 = arith.constant 0 : i32
    return %c0_i32, %c0_i32_0 : i32, i32
  }
  func.func @transform_2(%arg0: i32) -> (i32, i32) {
    %c0_i32 = arith.constant 0 : i32
    %c0_i32_0 = arith.constant 0 : i32
    %c0_i32_1 = arith.constant 0 : i32
    return %c0_i32, %c0_i32_0 : i32, i32
  }
  func.func @transform_3(%arg0: i32) -> (i32, i32, i32) {
    %c0_i32 = arith.constant 0 : i32
    %c0_i32_0 = arith.constant 0 : i32
    %c0_i32_1 = arith.constant 0 : i32
    return %c0_i32, %arg0, %c0_i32_0 : i32, i32, i32
  }
  func.func @transform_4(%arg0: i32) -> (i32, i32, i32) {
    %c0_i32 = arith.constant 0 : i32
    %c0_i32_0 = arith.constant 0 : i32
    %c0_i32_1 = arith.constant 0 : i32
    return %c0_i32, %arg0, %c0_i32_0 : i32, i32, i32
  }
  func.func @transform_5(%arg0: i32) -> (i32, i32) {
    %c0_i32 = arith.constant 0 : i32
    %c0_i32_0 = arith.constant 0 : i32
    return %arg0, %c0_i32 : i32, i32
  }
}

module attributes {stable_mosaic.version = 11 : i64} {
  func.func @edgeconv_max_kernel(%arg0: i32, %arg1: memref<128x128xf32, #tpu.memory_space<vmem>>, %arg2: memref<128x128xf32, #tpu.memory_space<vmem>>, %arg3: memref<1x128xf32, #tpu.memory_space<vmem>>, %arg4: memref<2x128x128xf32, #tpu.memory_space<vmem>>, %arg5: memref<2x128x1xf32, #tpu.memory_space<vmem>>, %arg6: memref<128x128xf32, #tpu.memory_space<vmem>>) attributes {dimension_semantics = [#tpu.dimension_semantics<parallel>], iteration_bounds = array<i64: 4>, scalar_prefetch = 0 : i64, scratch_operands = 0 : i64, tpu.core_type = #tpu.core_type<tc>, window_params = [{transform_indices = @transform_0, window_bounds = array<i64: 128, 128>}, {pipeline_mode = #tpu.pipeline_mode<synchronous>, transform_indices = @transform_1, window_bounds = array<i64: 128, 128>}, {pipeline_mode = #tpu.pipeline_mode<synchronous>, transform_indices = @transform_2, window_bounds = array<i64: 1, 128>}, {transform_indices = @transform_3, window_bounds = array<i64: 2, 128, 128>}, {transform_indices = @transform_4, window_bounds = array<i64: 2, 128, 1>}, {transform_indices = @transform_5, window_bounds = array<i64: 128, 128>}]} {
    %c0 = arith.constant 0 : index
    %c0_0 = arith.constant 0 : index
    %0 = vector.load %arg1[%c0, %c0_0] : memref<128x128xf32, #tpu.memory_space<vmem>>, vector<128x128xf32>
    %c0_1 = arith.constant 0 : index
    %c0_2 = arith.constant 0 : index
    %1 = vector.load %arg2[%c0_1, %c0_2] : memref<128x128xf32, #tpu.memory_space<vmem>>, vector<128x128xf32>
    %cst = arith.constant dense<0.000000e+00> : vector<128x128xf32>
    %2 = tpu.matmul %0, %1, %cst {dimension_numbers = #tpu.dot_dimension_numbers<[1], [0], [0], [1], [0, 0, 1, 1], [], []>} : vector<128x128xf32>, vector<128x128xf32>, vector<128x128xf32> -> vector<128x128xf32>
    %c0_3 = arith.constant 0 : index
    %c0_4 = arith.constant 0 : index
    %3 = vector.load %arg3[%c0_3, %c0_4] : memref<1x128xf32, #tpu.memory_space<vmem>>, vector<1x128xf32>
    %4 = vector.broadcast %3 : vector<1x128xf32> to vector<128x128xf32>
    %5 = arith.addf %2, %4 : vector<128x128xf32>
    %cst_5 = arith.constant 0.000000e+00 : f32
    %6 = vector.broadcast %cst_5 : f32 to vector<128x128xf32>
    %c0_6 = arith.constant 0 : index
    %c0_7 = arith.constant 0 : index
    %c0_8 = arith.constant 0 : index
    %7 = vector.load %arg4[%c0_6, %c0_7, %c0_8] : memref<2x128x128xf32, #tpu.memory_space<vmem>>, vector<1x128x128xf32>
    %8 = vector.shape_cast %7 : vector<1x128x128xf32> to vector<128x128xf32>
    %9 = arith.addf %5, %8 : vector<128x128xf32>
    %cst_9 = arith.constant 0.000000e+00 : f32
    %10 = vector.broadcast %cst_9 : f32 to vector<128x128xf32>
    %11 = arith.subf %10, %9 : vector<128x128xf32>
    %12 = math.exp %11 : vector<128x128xf32>
    %cst_10 = arith.constant 1.000000e+00 : f32
    %13 = vector.broadcast %cst_10 : f32 to vector<128x128xf32>
    %14 = arith.addf %13, %12 : vector<128x128xf32>
    %cst_11 = arith.constant 1.000000e+00 : f32
    %15 = vector.broadcast %cst_11 : f32 to vector<128x128xf32>
    %16 = arith.divf %15, %14 : vector<128x128xf32>
    %c0_12 = arith.constant 0 : index
    %c0_13 = arith.constant 0 : index
    %c0_14 = arith.constant 0 : index
    %17 = vector.load %arg5[%c0_12, %c0_13, %c0_14] : memref<2x128x1xf32, #tpu.memory_space<vmem>>, vector<1x128x1xf32>
    %18 = vector.shape_cast %17 : vector<1x128x1xf32> to vector<128x1xf32>
    %19 = vector.broadcast %18 : vector<128x1xf32> to vector<128x128xf32>
    %20 = arith.mulf %16, %19 : vector<128x128xf32>
    %21 = arith.maximumf %6, %20 : vector<128x128xf32>
    %c1 = arith.constant 1 : index
    %c0_15 = arith.constant 0 : index
    %c0_16 = arith.constant 0 : index
    %22 = vector.load %arg4[%c1, %c0_15, %c0_16] : memref<2x128x128xf32, #tpu.memory_space<vmem>>, vector<1x128x128xf32>
    %23 = vector.shape_cast %22 : vector<1x128x128xf32> to vector<128x128xf32>
    %24 = arith.addf %5, %23 : vector<128x128xf32>
    %cst_17 = arith.constant 0.000000e+00 : f32
    %25 = vector.broadcast %cst_17 : f32 to vector<128x128xf32>
    %26 = arith.subf %25, %24 : vector<128x128xf32>
    %27 = math.exp %26 : vector<128x128xf32>
    %cst_18 = arith.constant 1.000000e+00 : f32
    %28 = vector.broadcast %cst_18 : f32 to vector<128x128xf32>
    %29 = arith.addf %28, %27 : vector<128x128xf32>
    %cst_19 = arith.constant 1.000000e+00 : f32
    %30 = vector.broadcast %cst_19 : f32 to vector<128x128xf32>
    %31 = arith.divf %30, %29 : vector<128x128xf32>
    %c1_20 = arith.constant 1 : index
    %c0_21 = arith.constant 0 : index
    %c0_22 = arith.constant 0 : index
    %32 = vector.load %arg5[%c1_20, %c0_21, %c0_22] : memref<2x128x1xf32, #tpu.memory_space<vmem>>, vector<1x128x1xf32>
    %33 = vector.shape_cast %32 : vector<1x128x1xf32> to vector<128x1xf32>
    %34 = vector.broadcast %33 : vector<128x1xf32> to vector<128x128xf32>
    %35 = arith.mulf %31, %34 : vector<128x128xf32>
    %36 = arith.maximumf %21, %35 : vector<128x128xf32>
    %c0_23 = arith.constant 0 : index
    %c0_24 = arith.constant 0 : index
    %37 = vector.load %arg6[%c0_23, %c0_24] : memref<128x128xf32, #tpu.memory_space<vmem>>, vector<128x128xf32>
    tpu.vector_store %arg6[%c0_23, %c0_24], %36 {strides = array<i32>} : memref<128x128xf32, #tpu.memory_space<vmem>>, vector<128x128xf32>,
    return
  }
  func.func @transform_0(%arg0: i32) -> (i32, i32) {
    %c0_i32 = arith.constant 0 : i32
    %c0_i32_0 = arith.constant 0 : i32
    return %arg0, %c0_i32 : i32, i32
  }
  func.func @transform_1(%arg0: i32) -> (i32, i32) {
    %c0_i32 = arith.constant 0 : i32
    %c0_i32_0 = arith.constant 0 : i32
    %c0_i32_1 = arith.constant 0 : i32
    return %c0_i32, %c0_i32_0 : i32, i32
  }
  func.func @transform_2(%arg0: i32) -> (i32, i32) {
    %c0_i32 = arith.constant 0 : i32
    %c0_i32_0 = arith.constant 0 : i32
    %c0_i32_1 = arith.constant 0 : i32
    return %c0_i32, %c0_i32_0 : i32, i32
  }
  func.func @transform_3(%arg0: i32) -> (i32, i32, i32) {
    %c0_i32 = arith.constant 0 : i32
    %c0_i32_0 = arith.constant 0 : i32
    %c0_i32_1 = arith.constant 0 : i32
    return %c0_i32, %arg0, %c0_i32_0 : i32, i32, i32
  }
  func.func @transform_4(%arg0: i32) -> (i32, i32, i32) {
    %c0_i32 = arith.constant 0 : i32
    %c0_i32_0 = arith.constant 0 : i32
    %c0_i32_1 = arith.constant 0 : i32
    return %c0_i32, %arg0, %c0_i32_0 : i32, i32, i32
  }
  func.func @transform_5(%arg0: i32) -> (i32, i32) {
    %c0_i32 = arith.constant 0 : i32
    %c0_i32_0 = arith.constant 0 : i32
    return %arg0, %c0_i32 : i32, i32
  }
}

module attributes {stable_mosaic.version = 11 : i64} {
  func.func @pool_linear_kernel(%arg0: i32, %arg1: memref<128x1xi32, #tpu.memory_space<vmem>>, %arg2: memref<128x128xf32, #tpu.memory_space<vmem>>, %arg3: memref<128x128xf32, #tpu.memory_space<vmem>>, %arg4: memref<1x128xf32, #tpu.memory_space<vmem>>, %arg5: memref<8x128xf32, #tpu.memory_space<vmem>>, %arg6: memref<8x128xf32, #tpu.memory_space<vmem>>) attributes {dimension_semantics = [#tpu.dimension_semantics<arbitrary>], iteration_bounds = array<i64: 4>, scalar_prefetch = 0 : i64, scratch_operands = 1 : i64, tpu.core_type = #tpu.core_type<tc>, window_params = [{transform_indices = @transform_0, window_bounds = array<i64: 128, 1>}, {transform_indices = @transform_1, window_bounds = array<i64: 128, 128>}, {pipeline_mode = #tpu.pipeline_mode<synchronous>, transform_indices = @transform_2, window_bounds = array<i64: 128, 128>}, {pipeline_mode = #tpu.pipeline_mode<synchronous>, transform_indices = @transform_3, window_bounds = array<i64: 1, 128>}, {pipeline_mode = #tpu.pipeline_mode<synchronous>, transform_indices = @transform_4, window_bounds = array<i64: 8, 128>}]} {
    %c0_i32 = arith.constant 0 : i32
    %0 = arith.cmpi eq, %arg0, %c0_i32 : i32
    %1 = arith.extui %0 : i1 to i32
    %c0_i32_0 = arith.constant 0 : i32
    %2 = arith.cmpi ne, %1, %c0_i32_0 : i32
    scf.if %2 {
      %cst_16 = arith.constant 0.000000e+00 : f32
      %30 = vector.broadcast %cst_16 : f32 to vector<8x128xf32>
      %c0_17 = arith.constant 0 : index
      %c0_18 = arith.constant 0 : index
      %31 = vector.load %arg6[%c0_17, %c0_18] : memref<8x128xf32, #tpu.memory_space<vmem>>, vector<8x128xf32>
      tpu.vector_store %arg6[%c0_17, %c0_18], %30 {strides = array<i32>} : memref<8x128xf32, #tpu.memory_space<vmem>>, vector<8x128xf32>,
    } else {
    }
    %c0 = arith.constant 0 : index
    %c0_1 = arith.constant 0 : index
    %3 = vector.load %arg2[%c0, %c0_1] : memref<128x128xf32, #tpu.memory_space<vmem>>, vector<128x128xf32>
    %c0_2 = arith.constant 0 : index
    %c0_3 = arith.constant 0 : index
    %4 = vector.load %arg1[%c0_2, %c0_3] : memref<128x1xi32, #tpu.memory_space<vmem>>, vector<128x1xi32>
    %c0_i32_4 = arith.constant 0 : i32
    %5 = vector.broadcast %c0_i32_4 : i32 to vector<128x1xi32>
    %6 = arith.cmpi eq, %4, %5 : vector<128x1xi32>
    %cst = arith.constant 0.000000e+00 : f32
    %7 = vector.shape_cast %6 : vector<128x1xi1> to vector<128x1xi1>
    %8 = vector.broadcast %7 : vector<128x1xi1> to vector<128x128xi1>
    %9 = vector.broadcast %cst : f32 to vector<128x128xf32>
    %10 = arith.select %8, %3, %9 : vector<128x128xi1>, vector<128x128xf32>
    %cst_5 = arith.constant dense<0xFF800000> : vector<128xf32>
    %11 = vector.multi_reduction <maximumf>, %10, %cst_5 [0] : vector<128x128xf32> to vector<128xf32>
    %12 = vector.shape_cast %11 : vector<128xf32> to vector<1x128xf32>
    %c0_6 = arith.constant 0 : index
    %c0_7 = arith.constant 0 : index
    %13 = vector.load %arg6[%c0_6, %c0_7] : memref<8x128xf32, #tpu.memory_space<vmem>>, vector<1x128xf32>
    %14 = arith.maximumf %13, %12 : vector<1x128xf32>
    %c0_8 = arith.constant 0 : index
    %c0_9 = arith.constant 0 : index
    %15 = vector.load %arg6[%c0_8, %c0_9] : memref<8x128xf32, #tpu.memory_space<vmem>>, vector<1x128xf32>
    tpu.vector_store %arg6[%c0_8, %c0_9], %14 {strides = array<i32>} : memref<8x128xf32, #tpu.memory_space<vmem>>, vector<1x128xf32>,
    %c1_i32 = arith.constant 1 : i32
    %16 = vector.broadcast %c1_i32 : i32 to vector<128x1xi32>
    %17 = arith.cmpi eq, %4, %16 : vector<128x1xi32>
    %cst_10 = arith.constant 0.000000e+00 : f32
    %18 = vector.shape_cast %17 : vector<128x1xi1> to vector<128x1xi1>
    %19 = vector.broadcast %18 : vector<128x1xi1> to vector<128x128xi1>
    %20 = vector.broadcast %cst_10 : f32 to vector<128x128xf32>
    %21 = arith.select %19, %3, %20 : vector<128x128xi1>, vector<128x128xf32>
    %cst_11 = arith.constant dense<0xFF800000> : vector<128xf32>
    %22 = vector.multi_reduction <maximumf>, %21, %cst_11 [0] : vector<128x128xf32> to vector<128xf32>
    %23 = vector.shape_cast %22 : vector<128xf32> to vector<1x128xf32>
    %c1 = arith.constant 1 : index
    %c0_12 = arith.constant 0 : index
    %24 = vector.load %arg6[%c1, %c0_12] : memref<8x128xf32, #tpu.memory_space<vmem>>, vector<1x128xf32>
    %25 = arith.maximumf %24, %23 : vector<1x128xf32>
    %c1_13 = arith.constant 1 : index
    %c0_14 = arith.constant 0 : index
    %26 = vector.load %arg6[%c1_13, %c0_14] : memref<8x128xf32, #tpu.memory_space<vmem>>, vector<1x128xf32>
    tpu.vector_store %arg6[%c1_13, %c0_14], %25 {strides = array<i32>} : memref<8x128xf32, #tpu.memory_space<vmem>>, vector<1x128xf32>,
    %c3_i32 = arith.constant 3 : i32
    %27 = arith.cmpi eq, %arg0, %c3_i32 : i32
    %28 = arith.extui %27 : i1 to i32
    %c0_i32_15 = arith.constant 0 : i32
    %29 = arith.cmpi ne, %28, %c0_i32_15 : i32
    scf.if %29 {
      %c0_16 = arith.constant 0 : index
      %c0_17 = arith.constant 0 : index
      %30 = vector.load %arg6[%c0_16, %c0_17] : memref<8x128xf32, #tpu.memory_space<vmem>>, vector<8x128xf32>
      %c0_18 = arith.constant 0 : index
      %c0_19 = arith.constant 0 : index
      %31 = vector.load %arg3[%c0_18, %c0_19] : memref<128x128xf32, #tpu.memory_space<vmem>>, vector<128x128xf32>
      %cst_20 = arith.constant dense<0.000000e+00> : vector<8x128xf32>
      %32 = tpu.matmul %30, %31, %cst_20 {dimension_numbers = #tpu.dot_dimension_numbers<[1], [0], [0], [1], [0, 0, 1, 1], [], []>} : vector<8x128xf32>, vector<128x128xf32>, vector<8x128xf32> -> vector<8x128xf32>
      %c0_21 = arith.constant 0 : index
      %c0_22 = arith.constant 0 : index
      %33 = vector.load %arg4[%c0_21, %c0_22] : memref<1x128xf32, #tpu.memory_space<vmem>>, vector<1x128xf32>
      %34 = vector.broadcast %33 : vector<1x128xf32> to vector<8x128xf32>
      %35 = arith.addf %32, %34 : vector<8x128xf32>
      %c0_23 = arith.constant 0 : index
      %c0_24 = arith.constant 0 : index
      %36 = vector.load %arg5[%c0_23, %c0_24] : memref<8x128xf32, #tpu.memory_space<vmem>>, vector<8x128xf32>
      tpu.vector_store %arg5[%c0_23, %c0_24], %35 {strides = array<i32>} : memref<8x128xf32, #tpu.memory_space<vmem>>, vector<8x128xf32>,
    } else {
    }
    return
  }
  func.func @transform_0(%arg0: i32) -> (i32, i32) {
    %c0_i32 = arith.constant 0 : i32
    %c0_i32_0 = arith.constant 0 : i32
    return %arg0, %c0_i32 : i32, i32
  }
  func.func @transform_1(%arg0: i32) -> (i32, i32) {
    %c0_i32 = arith.constant 0 : i32
    %c0_i32_0 = arith.constant 0 : i32
    return %arg0, %c0_i32 : i32, i32
  }
  func.func @transform_2(%arg0: i32) -> (i32, i32) {
    %c0_i32 = arith.constant 0 : i32
    %c0_i32_0 = arith.constant 0 : i32
    %c0_i32_1 = arith.constant 0 : i32
    return %c0_i32, %c0_i32_0 : i32, i32
  }
  func.func @transform_3(%arg0: i32) -> (i32, i32) {
    %c0_i32 = arith.constant 0 : i32
    %c0_i32_0 = arith.constant 0 : i32
    %c0_i32_1 = arith.constant 0 : i32
    return %c0_i32, %c0_i32_0 : i32, i32
  }
  func.func @transform_4(%arg0: i32) -> (i32, i32) {
    %c0_i32 = arith.constant 0 : i32
    %c0_i32_0 = arith.constant 0 : i32
    %c0_i32_1 = arith.constant 0 : i32
    return %c0_i32, %c0_i32_0 : i32, i32
  }
}

</mosaic_0001>

<llo_original>
// kernel: best_gnn_forward.13
$region0: #{best_gnn_forward.13}
  #allocation0 [shape = 'u32[]', space=smem, size = 0x4, offset = 0x4, fixed_abs, tag = 'smem constant byte address 0x4 - core index']
  #allocation1 [shape = 'u32[144,128]{1,0:T(1,128)}', space=vmem, size = 0x12000, scoped, tag = 'internal scratch']
  %s0 = inlined_call_operand.vmem [shape: f32[512,128], index: 0, kind: input, shape index: {}]
  %s1 = inlined_call_operand.vmem [shape: f32[128,128], index: 1, kind: input, shape index: {}]
  %s2 = inlined_call_operand.vmem [shape: f32[512,128], index: 2, kind: output, shape index: {}]
  %s3 = sld [smem:[#allocation0]]
  $region41: #{best_gnn_forward.13} parent=0
    _
  %s5 = ssub.s32 1, %s3
  %s6 = scalar_select 0, %s5, %s3
  loop: start=0, step=1, limit=6
  $region2: #{best_gnn_forward.13} parent=0 // loop_pre_header
    _
  $region3: #{best_gnn_forward.13} parent=0 // loop_header
    %s8 = sphi 0, %s12
    %p9 = scmp.ge.s32.totalorder %s8, 6
    %s18 = sphi 0, %s20
    %s21 = sphi 0, %s18
    %s22 = sphi 0, %s21
    %s38 = sphi 0, %s22
    %s42 = sphi 0, %s42
    %s44 = sphi 0, %s42
    %s45 = sphi 0, %s44
    %s59 = sphi 0, %s45
    %s65 = sphi 0, %s67
    %s68 = sphi 0, %s65
    %s69 = sphi 0, %s68
    %s85 = sphi 0, %s69
  $region4: #{best_gnn_forward.13} parent=0 // loop_header_branch
    %11 = sbr.rel (%p9) target = $region8
  $region5: #{best_gnn_forward.13} parent=0 // loop_body
    %s13 = ssub.s32 %s8, 1
    %s14 = ssub.s32 %s8, 2
    %s15 = sadd.s32 %s8, 1
    %s16 = ssub.s32 %s8, %s15
    %p17 = scmp.eq.s32.totalorder %s16, 0
    %s19 = sadd.s32 %s18, 1
    %s20 = scalar_select %p17, %s18, %s19
    %p23 = pneg %p17
    %p24 = scmp.eq.s32.totalorder %s8, 3
    %p25 = por %p23, %p24
    %p26 = scmp.ne.s32.totalorder %s18, %s21
    %p27 = scmp.eq.s32.totalorder %s8, 0
    %p28 = por %p26, %p27
    %p29 = scmp.ne.s32.totalorder %s18, %s21
    %p30 = scmp.eq.s32.totalorder %s13, 3
    %p31 = por %p29, %p30
    %p32 = scmp.ne.s32.totalorder %s21, %s22
    %p33 = scmp.eq.s32.totalorder %s13, 0
    %p34 = por %p32, %p33
    %p35 = scmp.ne.s32.totalorder %s21, %s22
    %p36 = scmp.eq.s32.totalorder %s14, 3
    %p37 = por %p35, %p36
    %p39 = scmp.ne.s32.totalorder %s22, %s38
    %p40 = scmp.eq.s32.totalorder %s14, 0
    %p41 = por %p39, %p40
    %s43 = sadd.s32 %s42, 1
    %p46 = scmp.eq.s32.totalorder %s8, 3
    %p47 = scmp.ne.s32.totalorder %s42, %s44
    %p48 = scmp.eq.s32.totalorder %s8, 0
    %p49 = por %p47, %p48
    %p50 = scmp.ne.s32.totalorder %s42, %s44
    %p51 = scmp.eq.s32.totalorder %s13, 3
    %p52 = por %p50, %p51
    %p53 = scmp.ne.s32.totalorder %s44, %s45
    %p54 = scmp.eq.s32.totalorder %s13, 0
    %p55 = por %p53, %p54
    %p56 = scmp.ne.s32.totalorder %s44, %s45
    %p57 = scmp.eq.s32.totalorder %s14, 3
    %p58 = por %p56, %p57
    %p60 = scmp.ne.s32.totalorder %s45, %s59
    %p61 = scmp.eq.s32.totalorder %s14, 0
    %p62 = por %p60, %p61
    %s63 = ssub.s32 %s8, %s15
    %p64 = scmp.eq.s32.totalorder %s63, 0
    %s66 = sadd.s32 %s65, 1
    %s67 = scalar_select %p64, %s65, %s66
    %p70 = pneg %p64
    %p71 = scmp.eq.s32.totalorder %s8, 3
    %p72 = por %p70, %p71
    %p73 = scmp.ne.s32.totalorder %s65, %s68
    %p74 = scmp.eq.s32.totalorder %s8, 0
    %p75 = por %p73, %p74
    %p76 = scmp.ne.s32.totalorder %s65, %s68
    %p77 = scmp.eq.s32.totalorder %s13, 3
    %p78 = por %p76, %p77
    %p79 = scmp.ne.s32.totalorder %s68, %s69
    %p80 = scmp.eq.s32.totalorder %s13, 0
    %p81 = por %p79, %p80
    %p82 = scmp.ne.s32.totalorder %s68, %s69
    %p83 = scmp.eq.s32.totalorder %s14, 3
    %p84 = por %p82, %p83
    %p86 = scmp.ne.s32.totalorder %s69, %s85
    %p87 = scmp.eq.s32.totalorder %s14, 0
    %p88 = por %p86, %p87
    %p89 = scmp.le.s32.totalorder 1, %s8
    %p90 = scmp.lt.s32.totalorder %s8, 5
    %p91 = pnand %p89, %p90
    %p92 = pneg %p91
    // Predicated region
    $region9: #{best_gnn_forward.13} parent=5 // pred_check
      _
    $region10: #{best_gnn_forward.13} parent=5 // pred_check_branch
      %94 = sbr.rel (%p91) target = $region12
    $region11: #{best_gnn_forward.13} parent=5 // pred_region
      %s95 = ssub.s32 %s8, 1
      // Predicated region
      $region13: #{best_gnn_forward.13} parent=11 // pred_check
        %p96 = pneg %p55
      $region14: #{best_gnn_forward.13} parent=11 // pred_check_branch
        %98 = sbr.rel (%p96) target = $region16
      $region15: #{best_gnn_forward.13} parent=11 // pred_region
        _
      $region16: #{best_gnn_forward.13} parent=11 // pred_fallthru
        _
    $region12: #{best_gnn_forward.13} parent=5 // pred_fallthru
      _
    %p99 = scmp.lt.s32.totalorder %s8, 4
    // Predicated region
    $region17: #{best_gnn_forward.13} parent=5 // pred_check
      %p100 = pneg %p99
    $region18: #{best_gnn_forward.13} parent=5 // pred_check_branch
      %102 = sbr.rel (%p100) target = $region20
    $region19: #{best_gnn_forward.13} parent=5 // pred_region
      // Predicated region
      $region21: #{best_gnn_forward.13} parent=19 // pred_check
        %p103 = pneg %p28
      $region22: #{best_gnn_forward.13} parent=19 // pred_check_branch
        %105 = sbr.rel (%p103) target = $region24
      $region23: #{best_gnn_forward.13} parent=19 // pred_region
        %s106 = smul.u32 16, %s8
        %p107 = scmp.lt.s32.totalorder %s106, 63
        %s108 = scalar_select %p107, %s106, 63
        %s109 = smul.addr %s108, 8
        %s110 = scalar_lea.vmem %s0, %s109
        %s111 = smul.u32 16, %s8
      $region24: #{best_gnn_forward.13} parent=19 // pred_fallthru
        _
    $region20: #{best_gnn_forward.13} parent=5 // pred_fallthru
      _
    %p112 = scmp.le.s32.totalorder 1, %s8
    %p113 = scmp.lt.s32.totalorder %s8, 5
    %p114 = pnand %p112, %p113
    %p115 = pneg %p114
    // Predicated region
    $region25: #{best_gnn_forward.13} parent=5 // pred_check
      _
    $region26: #{best_gnn_forward.13} parent=5 // pred_check_branch
      %117 = sbr.rel (%p114) target = $region28
    $region27: #{best_gnn_forward.13} parent=5 // pred_region
      %s118 = ssub.s32 %s8, 1
      %s119 = smul.u32 16, %s13
      %p120 = scmp.lt.s32.totalorder %s119, 63
      %s121 = scalar_select %p120, %s119, 63
      %s122 = smul.addr %s121, 8
      %s123 = scalar_lea.vmem %s0, %s122
      %p124 = pneg %p34
      %p125 = pneg %p31
      %p126 = pneg %p55
      %p127 = pneg %p52
      %p128 = pneg %p81
      %p129 = pneg %p78
      %s130 = smul.u32 16, %s13
      %p131 = scmp.lt.s32.totalorder %s130, 63
      %s132 = scalar_select %p131, %s130, 63
      %s133 = smul.addr %s132, 8
      %s134 = scalar_lea.vmem %s2, %s133
      %s135 = smul.u32 16, %s13
      %p136 = scmp.lt.s32.totalorder %s135, 63
      %s137 = scalar_select %p136, %s135, 63
      %s138 = smul.addr %s137, 8
      %s139 = scalar_lea.vmem %s0, %s138
      %s140 = smul.u32 16, %s13
      %s141 = smul.u32 16, %s13
      %p142 = scmp.lt.s32.totalorder %s141, 63
      %s143 = scalar_select %p142, %s141, 63
      %s144 = smul.addr %s143, 8
      %s145 = scalar_lea.vmem %s2, %s144
      %s146 = smul.u32 16, %s13
      %v147 = vld [vmem:[%s139] sm:$0xff]
      %v148 = vld [vmem:[%s139 + $0x8] sm:$0xff]
      %v149 = vld [vmem:[%s139 + $0x10] sm:$0xff]
      %v150 = vld [vmem:[%s139 + $0x18] sm:$0xff]
      %v151 = vld [vmem:[%s139 + $0x20] sm:$0xff]
      %v152 = vld [vmem:[%s139 + $0x28] sm:$0xff]
      %v153 = vld [vmem:[%s139 + $0x30] sm:$0xff]
      %v154 = vld [vmem:[%s139 + $0x38] sm:$0xff]
      %v155 = vld [vmem:[%s139 + $0x40] sm:$0xff]
      %v156 = vld [vmem:[%s139 + $0x48] sm:$0xff]
      %v157 = vld [vmem:[%s139 + $0x50] sm:$0xff]
      %v158 = vld [vmem:[%s139 + $0x58] sm:$0xff]
      %v159 = vld [vmem:[%s139 + $0x60] sm:$0xff]
      %v160 = vld [vmem:[%s139 + $0x68] sm:$0xff]
      %v161 = vld [vmem:[%s139 + $0x70] sm:$0xff]
      %v162 = vld [vmem:[%s139 + $0x78] sm:$0xff]
      %v163 = vld [vmem:[%s1] sm:$0xff]
      %v164 = vld [vmem:[%s1 + $0x8] sm:$0xff]
      %v165 = vld [vmem:[%s1 + $0x10] sm:$0xff]
      %v166 = vld [vmem:[%s1 + $0x18] sm:$0xff]
      %v167 = vld [vmem:[%s1 + $0x20] sm:$0xff]
      %v168 = vld [vmem:[%s1 + $0x28] sm:$0xff]
      %v169 = vld [vmem:[%s1 + $0x30] sm:$0xff]
      %v170 = vld [vmem:[%s1 + $0x38] sm:$0xff]
      %v171 = vld [vmem:[%s1 + $0x40] sm:$0xff]
      %v172 = vld [vmem:[%s1 + $0x48] sm:$0xff]
      %v173 = vld [vmem:[%s1 + $0x50] sm:$0xff]
      %v174 = vld [vmem:[%s1 + $0x58] sm:$0xff]
      %v175 = vld [vmem:[%s1 + $0x60] sm:$0xff]
      %v176 = vld [vmem:[%s1 + $0x68] sm:$0xff]
      %v177 = vld [vmem:[%s1 + $0x70] sm:$0xff]
      %v178 = vld [vmem:[%s1 + $0x78] sm:$0xff]
      %179 = vmatprep.subr.mxu0 0.0
      %180 = vmatpush1.msra.mxu0 %v163
      %181 = vmatprep.subr.mxu0 0.0
      %182 = vmatpush1.msra.mxu0 %v164
      %183 = vmatprep.subr.mxu0 0.0
      %184 = vmatpush1.msra.mxu0 %v165
      %185 = vmatprep.subr.mxu0 0.0
      %186 = vmatpush1.msra.mxu0 %v166
      %187 = vmatprep.subr.mxu0 0.0
      %188 = vmatpush1.msra.mxu0 %v167
      %189 = vmatprep.subr.mxu0 0.0
      %190 = vmatpush1.msra.mxu0 %v168
      %191 = vmatprep.subr.mxu0 0.0
      %192 = vmatpush1.msra.mxu0 %v169
      %193 = vmatprep.subr.mxu0 0.0
      %194 = vmatpush1.msra.mxu0 %v170
      %195 = vmatprep.subr.mxu0 0.0
      %196 = vmatpush1.msra.mxu0 %v171
      %197 = vmatprep.subr.mxu0 0.0
      %198 = vmatpush1.msra.mxu0 %v172
      %199 = vmatprep.subr.mxu0 0.0
      %200 = vmatpush1.msra.mxu0 %v173
      %201 = vmatprep.subr.mxu0 0.0
      %202 = vmatpush1.msra.mxu0 %v174
      %203 = vmatprep.subr.mxu0 0.0
      %204 = vmatpush1.msra.mxu0 %v175
      %205 = vmatprep.subr.mxu0 0.0
      %206 = vmatpush1.msra.mxu0 %v176
      %207 = vmatprep.subr.mxu0 0.0
      %208 = vmatpush1.msra.mxu0 %v177
      %209 = vmatprep.subr.mxu0 0.0
      %210 = vmatpush1.msra.mxu0 %v178
      %211 = vmatprep.subr.mxu0 0.0
      %212 = vmatpush1.msra.mxu0 0.0
      %213 = vmatprep.subr.mxu0 0.0
      %214 = vmatpush1.msra.mxu0 0.0
      %215 = vmatprep.subr.mxu0 0.0
      %216 = vmatpush1.msra.mxu0 0.0
      %217 = vmatprep.subr.mxu0 0.0
      %218 = vmatpush1.msra.mxu0 0.0
      %219 = vmatprep.subr.mxu0 0.0
      %220 = vmatpush1.msra.mxu0 0.0
      %221 = vmatprep.subr.mxu0 0.0
      %222 = vmatpush1.msra.mxu0 0.0
      %223 = vmatprep.subr.mxu0 0.0
      %224 = vmatpush1.msra.mxu0 0.0
      %225 = vmatprep.subr.mxu0 0.0
      %226 = vmatpush1.msra.mxu0 0.0
      %227 = vmatprep.subr.mxu0 0.0
      %228 = vmatpush1.msra.mxu0 0.0
      %229 = vmatprep.subr.mxu0 0.0
      %230 = vmatpush1.msra.mxu0 0.0
      %231 = vmatprep.subr.mxu0 0.0
      %232 = vmatpush1.msra.mxu0 0.0
      %233 = vmatprep.subr.mxu0 0.0
      %234 = vmatpush1.msra.mxu0 0.0
      %235 = vmatprep.subr.mxu0 0.0
      %236 = vmatpush1.msra.mxu0 0.0
      %237 = vmatprep.subr.mxu0 0.0
      %238 = vmatpush1.msra.mxu0 0.0
      %239 = vmatprep.subr.mxu0 0.0
      %240 = vmatpush1.msra.mxu0 0.0
      %241 = vmatprep.subr.mxu0 0.0
      %242 = vmatpush1.msra.mxu0 0.0
      %243 = vmatprep.mubr.f32.mxu0 0.0
      %244 = vmatmul.mubr.f32.gmra.mrb[0].mxu0 %v147
      %v245 = vpop.f32.mrb[0].mxu0
      %v246 = vadd.f32 0.0, %v245
      %v247 = vpop.f32.mrb[0].mxu0
      %248 = vmatprep.mubr.f32.mxu0 0.0
      %249 = vmatmul.mubr.f32.gmra.mrb[0].mxu0 %v148
      %v250 = vpop.f32.mrb[0].mxu0
      %v251 = vadd.f32 0.0, %v250
      %v252 = vpop.f32.mrb[0].mxu0
      %253 = vmatprep.mubr.f32.mxu0 0.0
      %254 = vmatmul.mubr.f32.gmra.mrb[0].mxu0 %v149
      %v255 = vpop.f32.mrb[0].mxu0
      %v256 = vadd.f32 0.0, %v255
      %v257 = vpop.f32.mrb[0].mxu0
      %258 = vmatprep.mubr.f32.mxu0 0.0
      %259 = vmatmul.mubr.f32.gmra.mrb[0].mxu0 %v150
      %v260 = vpop.f32.mrb[0].mxu0
      %v261 = vadd.f32 0.0, %v260
      %v262 = vpop.f32.mrb[0].mxu0
      %263 = vmatprep.mubr.f32.mxu0 0.0
      %264 = vmatmul.mubr.f32.gmra.mrb[0].mxu0 %v151
      %v265 = vpop.f32.mrb[0].mxu0
      %v266 = vadd.f32 0.0, %v265
      %v267 = vpop.f32.mrb[0].mxu0
      %268 = vmatprep.mubr.f32.mxu0 0.0
      %269 = vmatmul.mubr.f32.gmra.mrb[0].mxu0 %v152
      %v270 = vpop.f32.mrb[0].mxu0
      %v271 = vadd.f32 0.0, %v270
      %v272 = vpop.f32.mrb[0].mxu0
      %273 = vmatprep.mubr.f32.mxu0 0.0
      %274 = vmatmul.mubr.f32.gmra.mrb[0].mxu0 %v153
      %v275 = vpop.f32.mrb[0].mxu0
      %v276 = vadd.f32 0.0, %v275
      %v277 = vpop.f32.mrb[0].mxu0
      %278 = vmatprep.mubr.f32.mxu0 0.0
      %279 = vmatmul.mubr.f32.gmra.mrb[0].mxu0 %v154
      %v280 = vpop.f32.mrb[0].mxu0
      %v281 = vadd.f32 0.0, %v280
      %v282 = vpop.f32.mrb[0].mxu0
      %283 = vmatprep.mubr.f32.mxu0 0.0
      %284 = vmatmul.mubr.f32.gmra.mrb[0].mxu0 %v155
      %v285 = vpop.f32.mrb[0].mxu0
      %v286 = vadd.f32 0.0, %v285
      %v287 = vpop.f32.mrb[0].mxu0
      %288 = vmatprep.mubr.f32.mxu0 0.0
      %289 = vmatmul.mubr.f32.gmra.mrb[0].mxu0 %v156
      %v290 = vpop.f32.mrb[0].mxu0
      %v291 = vadd.f32 0.0, %v290
      %v292 = vpop.f32.mrb[0].mxu0
      %293 = vmatprep.mubr.f32.mxu0 0.0
      %294 = vmatmul.mubr.f32.gmra.mrb[0].mxu0 %v157
      %v295 = vpop.f32.mrb[0].mxu0
      %v296 = vadd.f32 0.0, %v295
      %v297 = vpop.f32.mrb[0].mxu0
      %298 = vmatprep.mubr.f32.mxu0 0.0
      %299 = vmatmul.mubr.f32.gmra.mrb[0].mxu0 %v158
      %v300 = vpop.f32.mrb[0].mxu0
      %v301 = vadd.f32 0.0, %v300
      %v302 = vpop.f32.mrb[0].mxu0
      %303 = vmatprep.mubr.f32.mxu0 0.0
      %304 = vmatmul.mubr.f32.gmra.mrb[0].mxu0 %v159
      %v305 = vpop.f32.mrb[0].mxu0
      %v306 = vadd.f32 0.0, %v305
      %v307 = vpop.f32.mrb[0].mxu0
      %308 = vmatprep.mubr.f32.mxu0 0.0
      %309 = vmatmul.mubr.f32.gmra.mrb[0].mxu0 %v160
      %v310 = vpop.f32.mrb[0].mxu0
      %v311 = vadd.f32 0.0, %v310
      %v312 = vpop.f32.mrb[0].mxu0
      %313 = vmatprep.mubr.f32.mxu0 0.0
      %314 = vmatmul.mubr.f32.gmra.mrb[0].mxu0 %v161
      %v315 = vpop.f32.mrb[0].mxu0
      %v316 = vadd.f32 0.0, %v315
      %v317 = vpop.f32.mrb[0].mxu0
      %318 = vmatprep.mubr.f32.mxu0 0.0
      %319 = vmatmul.mubr.f32.gmra.mrb[0].mxu0 %v162
      %v320 = vpop.f32.mrb[0].mxu0
      %v321 = vadd.f32 0.0, %v320
      %v322 = vpop.f32.mrb[0].mxu0
      %323 = vdwg.mxu0
      %324 = vst [vmem:[%s145] sm:$0xff] %v246
      %325 = vst [vmem:[%s145 + $0x8] sm:$0xff] %v251
      %326 = vst [vmem:[%s145 + $0x10] sm:$0xff] %v256
      %327 = vst [vmem:[%s145 + $0x18] sm:$0xff] %v261
      %328 = vst [vmem:[%s145 + $0x20] sm:$0xff] %v266
      %329 = vst [vmem:[%s145 + $0x28] sm:$0xff] %v271
      %330 = vst [vmem:[%s145 + $0x30] sm:$0xff] %v276
      %331 = vst [vmem:[%s145 + $0x38] sm:$0xff] %v281
      %332 = vst [vmem:[%s145 + $0x40] sm:$0xff] %v286
      %333 = vst [vmem:[%s145 + $0x48] sm:$0xff] %v291
      %334 = vst [vmem:[%s145 + $0x50] sm:$0xff] %v296
      %335 = vst [vmem:[%s145 + $0x58] sm:$0xff] %v301
      %336 = vst [vmem:[%s145 + $0x60] sm:$0xff] %v306
      %337 = vst [vmem:[%s145 + $0x68] sm:$0xff] %v311
      %338 = vst [vmem:[%s145 + $0x70] sm:$0xff] %v316
      %339 = vst [vmem:[%s145 + $0x78] sm:$0xff] %v321
      %s340 = smul.u32 16, %s13
      %p341 = scmp.lt.s32.totalorder %s340, 63
      %s342 = scalar_select %p341, %s340, 63
      %s343 = smul.addr %s342, 8
      %s344 = scalar_lea.vmem %s2, %s343
      // Predicated region
      $region29: #{best_gnn_forward.13} parent=27 // pred_check
        %p345 = pneg %p78
      $region30: #{best_gnn_forward.13} parent=27 // pred_check_branch
        %347 = sbr.rel (%p345) target = $region32
      $region31: #{best_gnn_forward.13} parent=27 // pred_region
        %s348 = smul.u32 16, %s13
      $region32: #{best_gnn_forward.13} parent=27 // pred_fallthru
        _
    $region28: #{best_gnn_forward.13} parent=5 // pred_fallthru
      _
    %p349 = scmp.le.s32.totalorder 2, %s8
    // Predicated region
    $region33: #{best_gnn_forward.13} parent=5 // pred_check
      %p350 = pneg %p349
    $region34: #{best_gnn_forward.13} parent=5 // pred_check_branch
      %352 = sbr.rel (%p350) target = $region36
    $region35: #{best_gnn_forward.13} parent=5 // pred_region
      %s353 = ssub.s32 %s8, 2
      // Predicated region
      $region37: #{best_gnn_forward.13} parent=35 // pred_check
        %p354 = pneg %p84
      $region38: #{best_gnn_forward.13} parent=35 // pred_check_branch
        %356 = sbr.rel (%p354) target = $region40
      $region39: #{best_gnn_forward.13} parent=35 // pred_region
        %s357 = smul.u32 16, %s14
        %p358 = scmp.lt.s32.totalorder %s357, 63
        %s359 = scalar_select %p358, %s357, 63
        %s360 = smul.addr %s359, 8
        %s361 = scalar_lea.vmem %s2, %s360
      $region40: #{best_gnn_forward.13} parent=35 // pred_fallthru
        _
    $region36: #{best_gnn_forward.13} parent=5 // pred_fallthru
      _
  $region6: #{best_gnn_forward.13} parent=0 // loop_footer
    %s12 = sadd.s32 1, %s8
  $region7: #{best_gnn_forward.13} parent=0 // loop_footer_branch
    %7 = sbr.rel target = $region3
  $region8: #{best_gnn_forward.13} parent=0 // loop_exit
    _

// kernel: best_gnn_forward.11
$region0: #{best_gnn_forward.11}
  #allocation0 [shape = 'u32[]', space=smem, size = 0x4, offset = 0x4, fixed_abs, tag = 'smem constant byte address 0x4 - core index']
  #allocation1 [shape = 'u32[144,128]{1,0:T(1,128)}', space=vmem, size = 0x12000, scoped, tag = 'internal scratch']
  %s0 = inlined_call_operand.vmem [shape: f32[512,3], index: 0, kind: input, shape index: {}]
  %s1 = inlined_call_operand.vmem [shape: f32[3,128], index: 1, kind: input, shape index: {}]
  %s2 = inlined_call_operand.vmem [shape: f32[512,128], index: 2, kind: output, shape index: {}]
  %s3 = sld [smem:[#allocation0]]
  $region41: #{best_gnn_forward.11} parent=0
    _
  %s5 = ssub.s32 1, %s3
  %s6 = scalar_select 0, %s5, %s3
  loop: start=0, step=1, limit=6
  $region2: #{best_gnn_forward.11} parent=0 // loop_pre_header
    _
  $region3: #{best_gnn_forward.11} parent=0 // loop_header
    %s8 = sphi 0, %s12
    %p9 = scmp.ge.s32.totalorder %s8, 6
    %s18 = sphi 0, %s20
    %s21 = sphi 0, %s18
    %s22 = sphi 0, %s21
    %s38 = sphi 0, %s22
    %s42 = sphi 0, %s42
    %s44 = sphi 0, %s42
    %s45 = sphi 0, %s44
    %s59 = sphi 0, %s45
    %s65 = sphi 0, %s67
    %s68 = sphi 0, %s65
    %s69 = sphi 0, %s68
    %s85 = sphi 0, %s69
  $region4: #{best_gnn_forward.11} parent=0 // loop_header_branch
    %11 = sbr.rel (%p9) target = $region8
  $region5: #{best_gnn_forward.11} parent=0 // loop_body
    %s13 = ssub.s32 %s8, 1
    %s14 = ssub.s32 %s8, 2
    %s15 = sadd.s32 %s8, 1
    %s16 = ssub.s32 %s8, %s15
    %p17 = scmp.eq.s32.totalorder %s16, 0
    %s19 = sadd.s32 %s18, 1
    %s20 = scalar_select %p17, %s18, %s19
    %p23 = pneg %p17
    %p24 = scmp.eq.s32.totalorder %s8, 3
    %p25 = por %p23, %p24
    %p26 = scmp.ne.s32.totalorder %s18, %s21
    %p27 = scmp.eq.s32.totalorder %s8, 0
    %p28 = por %p26, %p27
    %p29 = scmp.ne.s32.totalorder %s18, %s21
    %p30 = scmp.eq.s32.totalorder %s13, 3
    %p31 = por %p29, %p30
    %p32 = scmp.ne.s32.totalorder %s21, %s22
    %p33 = scmp.eq.s32.totalorder %s13, 0
    %p34 = por %p32, %p33
    %p35 = scmp.ne.s32.totalorder %s21, %s22
    %p36 = scmp.eq.s32.totalorder %s14, 3
    %p37 = por %p35, %p36
    %p39 = scmp.ne.s32.totalorder %s22, %s38
    %p40 = scmp.eq.s32.totalorder %s14, 0
    %p41 = por %p39, %p40
    %s43 = sadd.s32 %s42, 1
    %p46 = scmp.eq.s32.totalorder %s8, 3
    %p47 = scmp.ne.s32.totalorder %s42, %s44
    %p48 = scmp.eq.s32.totalorder %s8, 0
    %p49 = por %p47, %p48
    %p50 = scmp.ne.s32.totalorder %s42, %s44
    %p51 = scmp.eq.s32.totalorder %s13, 3
    %p52 = por %p50, %p51
    %p53 = scmp.ne.s32.totalorder %s44, %s45
    %p54 = scmp.eq.s32.totalorder %s13, 0
    %p55 = por %p53, %p54
    %p56 = scmp.ne.s32.totalorder %s44, %s45
    %p57 = scmp.eq.s32.totalorder %s14, 3
    %p58 = por %p56, %p57
    %p60 = scmp.ne.s32.totalorder %s45, %s59
    %p61 = scmp.eq.s32.totalorder %s14, 0
    %p62 = por %p60, %p61
    %s63 = ssub.s32 %s8, %s15
    %p64 = scmp.eq.s32.totalorder %s63, 0
    %s66 = sadd.s32 %s65, 1
    %s67 = scalar_select %p64, %s65, %s66
    %p70 = pneg %p64
    %p71 = scmp.eq.s32.totalorder %s8, 3
    %p72 = por %p70, %p71
    %p73 = scmp.ne.s32.totalorder %s65, %s68
    %p74 = scmp.eq.s32.totalorder %s8, 0
    %p75 = por %p73, %p74
    %p76 = scmp.ne.s32.totalorder %s65, %s68
    %p77 = scmp.eq.s32.totalorder %s13, 3
    %p78 = por %p76, %p77
    %p79 = scmp.ne.s32.totalorder %s68, %s69
    %p80 = scmp.eq.s32.totalorder %s13, 0
    %p81 = por %p79, %p80
    %p82 = scmp.ne.s32.totalorder %s68, %s69
    %p83 = scmp.eq.s32.totalorder %s14, 3
    %p84 = por %p82, %p83
    %p86 = scmp.ne.s32.totalorder %s69, %s85
    %p87 = scmp.eq.s32.totalorder %s14, 0
    %p88 = por %p86, %p87
    %p89 = scmp.le.s32.totalorder 1, %s8
    %p90 = scmp.lt.s32.totalorder %s8, 5
    %p91 = pnand %p89, %p90
    %p92 = pneg %p91
    // Predicated region
    $region9: #{best_gnn_forward.11} parent=5 // pred_check
      _
    $region10: #{best_gnn_forward.11} parent=5 // pred_check_branch
      %94 = sbr.rel (%p91) target = $region12
    $region11: #{best_gnn_forward.11} parent=5 // pred_region
      %s95 = ssub.s32 %s8, 1
      // Predicated region
      $region13: #{best_gnn_forward.11} parent=11 // pred_check
        %p96 = pneg %p55
      $region14: #{best_gnn_forward.11} parent=11 // pred_check_branch
        %98 = sbr.rel (%p96) target = $region16
      $region15: #{best_gnn_forward.11} parent=11 // pred_region
        _
      $region16: #{best_gnn_forward.11} parent=11 // pred_fallthru
        _
    $region12: #{best_gnn_forward.11} parent=5 // pred_fallthru
      _
    %p99 = scmp.lt.s32.totalorder %s8, 4
    // Predicated region
    $region17: #{best_gnn_forward.11} parent=5 // pred_check
      %p100 = pneg %p99
    $region18: #{best_gnn_forward.11} parent=5 // pred_check_branch
      %102 = sbr.rel (%p100) target = $region20
    $region19: #{best_gnn_forward.11} parent=5 // pred_region
      // Predicated region
      $region21: #{best_gnn_forward.11} parent=19 // pred_check
        %p103 = pneg %p28
      $region22: #{best_gnn_forward.11} parent=19 // pred_check_branch
        %105 = sbr.rel (%p103) target = $region24
      $region23: #{best_gnn_forward.11} parent=19 // pred_region
        %s106 = smul.u32 16, %s8
        %p107 = scmp.lt.s32.totalorder %s106, 63
        %s108 = scalar_select %p107, %s106, 63
        %s109 = smul.addr %s108, 8
        %s110 = scalar_lea.vmem %s0, %s109
        %s111 = smul.u32 16, %s8
      $region24: #{best_gnn_forward.11} parent=19 // pred_fallthru
        _
    $region20: #{best_gnn_forward.11} parent=5 // pred_fallthru
      _
    %p112 = scmp.le.s32.totalorder 1, %s8
    %p113 = scmp.lt.s32.totalorder %s8, 5
    %p114 = pnand %p112, %p113
    %p115 = pneg %p114
    // Predicated region
    $region25: #{best_gnn_forward.11} parent=5 // pred_check
      _
    $region26: #{best_gnn_forward.11} parent=5 // pred_check_branch
      %117 = sbr.rel (%p114) target = $region28
    $region27: #{best_gnn_forward.11} parent=5 // pred_region
      %s118 = ssub.s32 %s8, 1
      %s119 = smul.u32 16, %s13
      %p120 = scmp.lt.s32.totalorder %s119, 63
      %s121 = scalar_select %p120, %s119, 63
      %s122 = smul.addr %s121, 8
      %s123 = scalar_lea.vmem %s0, %s122
      %p124 = pneg %p34
      %p125 = pneg %p31
      %p126 = pneg %p55
      %p127 = pneg %p52
      %p128 = pneg %p81
      %p129 = pneg %p78
      %s130 = smul.u32 16, %s13
      %p131 = scmp.lt.s32.totalorder %s130, 63
      %s132 = scalar_select %p131, %s130, 63
      %s133 = smul.addr %s132, 8
      %s134 = scalar_lea.vmem %s2, %s133
      %s135 = smul.u32 16, %s13
      %p136 = scmp.lt.s32.totalorder %s135, 63
      %s137 = scalar_select %p136, %s135, 63
      %s138 = smul.addr %s137, 8
      %s139 = scalar_lea.vmem %s0, %s138
      %s140 = smul.u32 16, %s13
      %s141 = smul.u32 16, %s13
      %p142 = scmp.lt.s32.totalorder %s141, 63
      %s143 = scalar_select %p142, %s141, 63
      %s144 = smul.addr %s143, 8
      %s145 = scalar_lea.vmem %s2, %s144
      %s146 = smul.u32 16, %s13
      %v147 = vld [vmem:[%s139] sm:$0xff]
      %v148 = vld [vmem:[%s139 + $0x8] sm:$0xff]
      %v149 = vld [vmem:[%s139 + $0x10] sm:$0xff]
      %v150 = vld [vmem:[%s139 + $0x18] sm:$0xff]
      %v151 = vld [vmem:[%s139 + $0x20] sm:$0xff]
      %v152 = vld [vmem:[%s139 + $0x28] sm:$0xff]
      %v153 = vld [vmem:[%s139 + $0x30] sm:$0xff]
      %v154 = vld [vmem:[%s139 + $0x38] sm:$0xff]
      %v155 = vld [vmem:[%s139 + $0x40] sm:$0xff]
      %v156 = vld [vmem:[%s139 + $0x48] sm:$0xff]
      %v157 = vld [vmem:[%s139 + $0x50] sm:$0xff]
      %v158 = vld [vmem:[%s139 + $0x58] sm:$0xff]
      %v159 = vld [vmem:[%s139 + $0x60] sm:$0xff]
      %v160 = vld [vmem:[%s139 + $0x68] sm:$0xff]
      %v161 = vld [vmem:[%s139 + $0x70] sm:$0xff]
      %v162 = vld [vmem:[%s139 + $0x78] sm:$0xff]
      %v163 = vld [vmem:[%s1] sm:$0x7]
      %vm164 = vcmask 23552
      %v166 = vsel %vm164, %v147, 0
      %v169 = vsel %vm164, %v148, 0
      %v172 = vsel %vm164, %v149, 0
      %v175 = vsel %vm164, %v150, 0
      %v178 = vsel %vm164, %v151, 0
      %v181 = vsel %vm164, %v152, 0
      %v184 = vsel %vm164, %v153, 0
      %v187 = vsel %vm164, %v154, 0
      %v190 = vsel %vm164, %v155, 0
      %v193 = vsel %vm164, %v156, 0
      %v196 = vsel %vm164, %v157, 0
      %v199 = vsel %vm164, %v158, 0
      %v202 = vsel %vm164, %v159, 0
      %v205 = vsel %vm164, %v160, 0
      %v208 = vsel %vm164, %v161, 0
      %v211 = vsel %vm164, %v162, 0
      %vm213 = vcmask 1042432
      %v215 = vsel %vm213, %v163, 0
      %217 = vmatprep.subr.mxu0 0.0
      %218 = vmatpush1.msra.mxu0 %v215
      %219 = vmatprep.subr.mxu0 0.0
      %220 = vmatpush1.msra.mxu0 0.0
      %221 = vmatprep.subr.mxu0 0.0
      %222 = vmatpush1.msra.mxu0 0.0
      %223 = vmatprep.subr.mxu0 0.0
      %224 = vmatpush1.msra.mxu0 0.0
      %225 = vmatprep.subr.mxu0 0.0
      %226 = vmatpush1.msra.mxu0 0.0
      %227 = vmatprep.subr.mxu0 0.0
      %228 = vmatpush1.msra.mxu0 0.0
      %229 = vmatprep.subr.mxu0 0.0
      %230 = vmatpush1.msra.mxu0 0.0
      %231 = vmatprep.subr.mxu0 0.0
      %232 = vmatpush1.msra.mxu0 0.0
      %233 = vmatprep.subr.mxu0 0.0
      %234 = vmatpush1.msra.mxu0 0.0
      %235 = vmatprep.subr.mxu0 0.0
      %236 = vmatpush1.msra.mxu0 0.0
      %237 = vmatprep.subr.mxu0 0.0
      %238 = vmatpush1.msra.mxu0 0.0
      %239 = vmatprep.subr.mxu0 0.0
      %240 = vmatpush1.msra.mxu0 0.0
      %241 = vmatprep.subr.mxu0 0.0
      %242 = vmatpush1.msra.mxu0 0.0
      %243 = vmatprep.subr.mxu0 0.0
      %244 = vmatpush1.msra.mxu0 0.0
      %245 = vmatprep.subr.mxu0 0.0
      %246 = vmatpush1.msra.mxu0 0.0
      %247 = vmatprep.subr.mxu0 0.0
      %248 = vmatpush1.msra.mxu0 0.0
      %249 = vmatprep.subr.mxu0 0.0
      %250 = vmatpush1.msra.mxu0 0.0
      %251 = vmatprep.subr.mxu0 0.0
      %252 = vmatpush1.msra.mxu0 0.0
      %253 = vmatprep.subr.mxu0 0.0
      %254 = vmatpush1.msra.mxu0 0.0
      %255 = vmatprep.subr.mxu0 0.0
      %256 = vmatpush1.msra.mxu0 0.0
      %257 = vmatprep.subr.mxu0 0.0
      %258 = vmatpush1.msra.mxu0 0.0
      %259 = vmatprep.subr.mxu0 0.0
      %260 = vmatpush1.msra.mxu0 0.0
      %261 = vmatprep.subr.mxu0 0.0
      %262 = vmatpush1.msra.mxu0 0.0
      %263 = vmatprep.subr.mxu0 0.0
      %264 = vmatpush1.msra.mxu0 0.0
      %265 = vmatprep.subr.mxu0 0.0
      %266 = vmatpush1.msra.mxu0 0.0
      %267 = vmatprep.subr.mxu0 0.0
      %268 = vmatpush1.msra.mxu0 0.0
      %269 = vmatprep.subr.mxu0 0.0
      %270 = vmatpush1.msra.mxu0 0.0
      %271 = vmatprep.subr.mxu0 0.0
      %272 = vmatpush1.msra.mxu0 0.0
      %273 = vmatprep.subr.mxu0 0.0
      %274 = vmatpush1.msra.mxu0 0.0
      %275 = vmatprep.subr.mxu0 0.0
      %276 = vmatpush1.msra.mxu0 0.0
      %277 = vmatprep.subr.mxu0 0.0
      %278 = vmatpush1.msra.mxu0 0.0
      %279 = vmatprep.subr.mxu0 0.0
      %280 = vmatpush1.msra.mxu0 0.0
      %281 = vmatprep.mubr.f32.mxu0 0.0
      %282 = vmatmul.mubr.f32.gmra.mrb[0].mxu0 %v166
      %v283 = vpop.f32.mrb[0].mxu0
      %v284 = vadd.f32 0.0, %v283
      %v285 = vpop.f32.mrb[0].mxu0
      %286 = vmatprep.mubr.f32.mxu0 0.0
      %287 = vmatmul.mubr.f32.gmra.mrb[0].mxu0 %v169
      %v288 = vpop.f32.mrb[0].mxu0
      %v289 = vadd.f32 0.0, %v288
      %v290 = vpop.f32.mrb[0].mxu0
      %291 = vmatprep.mubr.f32.mxu0 0.0
      %292 = vmatmul.mubr.f32.gmra.mrb[0].mxu0 %v172
      %v293 = vpop.f32.mrb[0].mxu0
      %v294 = vadd.f32 0.0, %v293
      %v295 = vpop.f32.mrb[0].mxu0
      %296 = vmatprep.mubr.f32.mxu0 0.0
      %297 = vmatmul.mubr.f32.gmra.mrb[0].mxu0 %v175
      %v298 = vpop.f32.mrb[0].mxu0
      %v299 = vadd.f32 0.0, %v298
      %v300 = vpop.f32.mrb[0].mxu0
      %301 = vmatprep.mubr.f32.mxu0 0.0
      %302 = vmatmul.mubr.f32.gmra.mrb[0].mxu0 %v178
      %v303 = vpop.f32.mrb[0].mxu0
      %v304 = vadd.f32 0.0, %v303
      %v305 = vpop.f32.mrb[0].mxu0
      %306 = vmatprep.mubr.f32.mxu0 0.0
      %307 = vmatmul.mubr.f32.gmra.mrb[0].mxu0 %v181
      %v308 = vpop.f32.mrb[0].mxu0
      %v309 = vadd.f32 0.0, %v308
      %v310 = vpop.f32.mrb[0].mxu0
      %311 = vmatprep.mubr.f32.mxu0 0.0
      %312 = vmatmul.mubr.f32.gmra.mrb[0].mxu0 %v184
      %v313 = vpop.f32.mrb[0].mxu0
      %v314 = vadd.f32 0.0, %v313
      %v315 = vpop.f32.mrb[0].mxu0
      %316 = vmatprep.mubr.f32.mxu0 0.0
      %317 = vmatmul.mubr.f32.gmra.mrb[0].mxu0 %v187
      %v318 = vpop.f32.mrb[0].mxu0
      %v319 = vadd.f32 0.0, %v318
      %v320 = vpop.f32.mrb[0].mxu0
      %321 = vmatprep.mubr.f32.mxu0 0.0
      %322 = vmatmul.mubr.f32.gmra.mrb[0].mxu0 %v190
      %v323 = vpop.f32.mrb[0].mxu0
      %v324 = vadd.f32 0.0, %v323
      %v325 = vpop.f32.mrb[0].mxu0
      %326 = vmatprep.mubr.f32.mxu0 0.0
      %327 = vmatmul.mubr.f32.gmra.mrb[0].mxu0 %v193
      %v328 = vpop.f32.mrb[0].mxu0
      %v329 = vadd.f32 0.0, %v328
      %v330 = vpop.f32.mrb[0].mxu0
      %331 = vmatprep.mubr.f32.mxu0 0.0
      %332 = vmatmul.mubr.f32.gmra.mrb[0].mxu0 %v196
      %v333 = vpop.f32.mrb[0].mxu0
      %v334 = vadd.f32 0.0, %v333
      %v335 = vpop.f32.mrb[0].mxu0
      %336 = vmatprep.mubr.f32.mxu0 0.0
      %337 = vmatmul.mubr.f32.gmra.mrb[0].mxu0 %v199
      %v338 = vpop.f32.mrb[0].mxu0
      %v339 = vadd.f32 0.0, %v338
      %v340 = vpop.f32.mrb[0].mxu0
      %341 = vmatprep.mubr.f32.mxu0 0.0
      %342 = vmatmul.mubr.f32.gmra.mrb[0].mxu0 %v202
      %v343 = vpop.f32.mrb[0].mxu0
      %v344 = vadd.f32 0.0, %v343
      %v345 = vpop.f32.mrb[0].mxu0
      %346 = vmatprep.mubr.f32.mxu0 0.0
      %347 = vmatmul.mubr.f32.gmra.mrb[0].mxu0 %v205
      %v348 = vpop.f32.mrb[0].mxu0
      %v349 = vadd.f32 0.0, %v348
      %v350 = vpop.f32.mrb[0].mxu0
      %351 = vmatprep.mubr.f32.mxu0 0.0
      %352 = vmatmul.mubr.f32.gmra.mrb[0].mxu0 %v208
      %v353 = vpop.f32.mrb[0].mxu0
      %v354 = vadd.f32 0.0, %v353
      %v355 = vpop.f32.mrb[0].mxu0
      %356 = vmatprep.mubr.f32.mxu0 0.0
      %357 = vmatmul.mubr.f32.gmra.mrb[0].mxu0 %v211
      %v358 = vpop.f32.mrb[0].mxu0
      %v359 = vadd.f32 0.0, %v358
      %v360 = vpop.f32.mrb[0].mxu0
      %361 = vdwg.mxu0
      %362 = vst [vmem:[%s145] sm:$0xff] %v284
      %363 = vst [vmem:[%s145 + $0x8] sm:$0xff] %v289
      %364 = vst [vmem:[%s145 + $0x10] sm:$0xff] %v294
      %365 = vst [vmem:[%s145 + $0x18] sm:$0xff] %v299
      %366 = vst [vmem:[%s145 + $0x20] sm:$0xff] %v304
      %367 = vst [vmem:[%s145 + $0x28] sm:$0xff] %v309
      %368 = vst [vmem:[%s145 + $0x30] sm:$0xff] %v314
      %369 = vst [vmem:[%s145 + $0x38] sm:$0xff] %v319
      %370 = vst [vmem:[%s145 + $0x40] sm:$0xff] %v324
      %371 = vst [vmem:[%s145 + $0x48] sm:$0xff] %v329
      %372 = vst [vmem:[%s145 + $0x50] sm:$0xff] %v334
      %373 = vst [vmem:[%s145 + $0x58] sm:$0xff] %v339
      %374 = vst [vmem:[%s145 + $0x60] sm:$0xff] %v344
      %375 = vst [vmem:[%s145 + $0x68] sm:$0xff] %v349
      %376 = vst [vmem:[%s145 + $0x70] sm:$0xff] %v354
      %377 = vst [vmem:[%s145 + $0x78] sm:$0xff] %v359
      %s378 = smul.u32 16, %s13
      %p379 = scmp.lt.s32.totalorder %s378, 63
      %s380 = scalar_select %p379, %s378, 63
      %s381 = smul.addr %s380, 8
      %s382 = scalar_lea.vmem %s2, %s381
      // Predicated region
      $region29: #{best_gnn_forward.11} parent=27 // pred_check
        %p383 = pneg %p78
      $region30: #{best_gnn_forward.11} parent=27 // pred_check_branch
        %385 = sbr.rel (%p383) target = $region32
      $region31: #{best_gnn_forward.11} parent=27 // pred_region
        %s386 = smul.u32 16, %s13
      $region32: #{best_gnn_forward.11} parent=27 // pred_fallthru
        _
    $region28: #{best_gnn_forward.11} parent=5 // pred_fallthru
      _
    %p387 = scmp.le.s32.totalorder 2, %s8
    // Predicated region
    $region33: #{best_gnn_forward.11} parent=5 // pred_check
      %p388 = pneg %p387
    $region34: #{best_gnn_forward.11} parent=5 // pred_check_branch
      %390 = sbr.rel (%p388) target = $region36
    $region35: #{best_gnn_forward.11} parent=5 // pred_region
      %s391 = ssub.s32 %s8, 2
      // Predicated region
      $region37: #{best_gnn_forward.11} parent=35 // pred_check
        %p392 = pneg %p84
      $region38: #{best_gnn_forward.11} parent=35 // pred_check_branch
        %394 = sbr.rel (%p392) target = $region40
      $region39: #{best_gnn_forward.11} parent=35 // pred_region
        %s395 = smul.u32 16, %s14
        %p396 = scmp.lt.s32.totalorder %s395, 63
        %s397 = scalar_select %p396, %s395, 63
        %s398 = smul.addr %s397, 8
        %s399 = scalar_lea.vmem %s2, %s398
      $region40: #{best_gnn_forward.11} parent=35 // pred_fallthru
        _
    $region36: #{best_gnn_forward.11} parent=5 // pred_fallthru
      _
  $region6: #{best_gnn_forward.11} parent=0 // loop_footer
    %s12 = sadd.s32 1, %s8
  $region7: #{best_gnn_forward.11} parent=0 // loop_footer_branch
    %7 = sbr.rel target = $region3
  $region8: #{best_gnn_forward.11} parent=0 // loop_exit
    _

// kernel: best_gnn_forward.12
$region0: #{best_gnn_forward.12}
  #allocation0 [shape = 'u32[]', space=smem, size = 0x4, offset = 0x4, fixed_abs, tag = 'smem constant byte address 0x4 - core index']
  #allocation1 [shape = 'u32[144,128]{1,0:T(1,128)}', space=vmem, size = 0x12000, scoped, tag = 'internal scratch']
  %s0 = inlined_call_operand.vmem [shape: f32[512,3], index: 0, kind: input, shape index: {}]
  %s1 = inlined_call_operand.vmem [shape: f32[3,128], index: 1, kind: input, shape index: {}]
  %s2 = inlined_call_operand.vmem [shape: f32[1,128], index: 2, kind: input, shape index: {}]
  %s3 = inlined_call_operand.vmem [shape: f32[2,512,128], index: 3, kind: input, shape index: {}]
  %s4 = inlined_call_operand.vmem [shape: f32[2,512,1], index: 4, kind: input, shape index: {}]
  %s5 = inlined_call_operand.vmem [shape: f32[512,128], index: 5, kind: output, shape index: {}]
  %s6 = sld [smem:[#allocation0]]
  $region129: #{best_gnn_forward.12} parent=0
    _
  %s8 = ssub.s32 1, %s6
  %s9 = scalar_select 0, %s8, %s6
  $region1: #{best_gnn_forward.12} parent=0
    #allocation2 [shape = 'u8[262144]{0}', space=vmem, size = 0x40000, scoped, tag = 'input window, operand 3']
    #allocation3 [shape = 'u8[262144]{0}', space=vmem, size = 0x40000, scoped, tag = 'input window, operand 4']
    loop: start=0, step=1, limit=6
    $region2: #{best_gnn_forward.12} parent=1 // loop_pre_header
      _
    $region3: #{best_gnn_forward.12} parent=1 // loop_header
      %s11 = sphi 0, %s15
      %p12 = scmp.ge.s32.totalorder %s11, 6
      %s21 = sphi 0, %s23
      %s24 = sphi 0, %s21
      %s25 = sphi 0, %s24
      %s41 = sphi 0, %s25
      %s45 = sphi 0, %s45
      %s47 = sphi 0, %s45
      %s48 = sphi 0, %s47
      %s62 = sphi 0, %s48
      %s66 = sphi 0, %s66
      %s68 = sphi 0, %s66
      %s69 = sphi 0, %s68
      %s83 = sphi 0, %s69
      %s89 = sphi 0, %s91
      %s92 = sphi 0, %s89
      %s93 = sphi 0, %s92
      %s109 = sphi 0, %s93
      %s115 = sphi 0, %s117
      %s118 = sphi 0, %s115
      %s119 = sphi 0, %s118
      %s135 = sphi 0, %s119
      %s141 = sphi 0, %s143
      %s144 = sphi 0, %s141
      %s145 = sphi 0, %s144
      %s161 = sphi 0, %s145
    $region4: #{best_gnn_forward.12} parent=1 // loop_header_branch
      %14 = sbr.rel (%p12) target = $region8
    $region5: #{best_gnn_forward.12} parent=1 // loop_body
      %s16 = ssub.s32 %s11, 1
      %s17 = ssub.s32 %s11, 2
      %s18 = sadd.s32 %s11, 1
      %s19 = ssub.s32 %s11, %s18
      %p20 = scmp.eq.s32.totalorder %s19, 0
      %s22 = sadd.s32 %s21, 1
      %s23 = scalar_select %p20, %s21, %s22
      %p26 = pneg %p20
      %p27 = scmp.eq.s32.totalorder %s11, 3
      %p28 = por %p26, %p27
      %p29 = scmp.ne.s32.totalorder %s21, %s24
      %p30 = scmp.eq.s32.totalorder %s11, 0
      %p31 = por %p29, %p30
      %p32 = scmp.ne.s32.totalorder %s21, %s24
      %p33 = scmp.eq.s32.totalorder %s16, 3
      %p34 = por %p32, %p33
      %p35 = scmp.ne.s32.totalorder %s24, %s25
      %p36 = scmp.eq.s32.totalorder %s16, 0
      %p37 = por %p35, %p36
      %p38 = scmp.ne.s32.totalorder %s24, %s25
      %p39 = scmp.eq.s32.totalorder %s17, 3
      %p40 = por %p38, %p39
      %p42 = scmp.ne.s32.totalorder %s25, %s41
      %p43 = scmp.eq.s32.totalorder %s17, 0
      %p44 = por %p42, %p43
      %s46 = sadd.s32 %s45, 1
      %p49 = scmp.eq.s32.totalorder %s11, 3
      %p50 = scmp.ne.s32.totalorder %s45, %s47
      %p51 = scmp.eq.s32.totalorder %s11, 0
      %p52 = por %p50, %p51
      %p53 = scmp.ne.s32.totalorder %s45, %s47
      %p54 = scmp.eq.s32.totalorder %s16, 3
      %p55 = por %p53, %p54
      %p56 = scmp.ne.s32.totalorder %s47, %s48
      %p57 = scmp.eq.s32.totalorder %s16, 0
      %p58 = por %p56, %p57
      %p59 = scmp.ne.s32.totalorder %s47, %s48
      %p60 = scmp.eq.s32.totalorder %s17, 3
      %p61 = por %p59, %p60
      %p63 = scmp.ne.s32.totalorder %s48, %s62
      %p64 = scmp.eq.s32.totalorder %s17, 0
      %p65 = por %p63, %p64
      %s67 = sadd.s32 %s66, 1
      %p70 = scmp.eq.s32.totalorder %s11, 3
      %p71 = scmp.ne.s32.totalorder %s66, %s68
      %p72 = scmp.eq.s32.totalorder %s11, 0
      %p73 = por %p71, %p72
      %p74 = scmp.ne.s32.totalorder %s66, %s68
      %p75 = scmp.eq.s32.totalorder %s16, 3
      %p76 = por %p74, %p75
      %p77 = scmp.ne.s32.totalorder %s68, %s69
      %p78 = scmp.eq.s32.totalorder %s16, 0
      %p79 = por %p77, %p78
      %p80 = scmp.ne.s32.totalorder %s68, %s69
      %p81 = scmp.eq.s32.totalorder %s17, 3
      %p82 = por %p80, %p81
      %p84 = scmp.ne.s32.totalorder %s69, %s83
      %p85 = scmp.eq.s32.totalorder %s17, 0
      %p86 = por %p84, %p85
      %s87 = ssub.s32 %s11, %s18
      %p88 = scmp.eq.s32.totalorder %s87, 0
      %s90 = sadd.s32 %s89, 1
      %s91 = scalar_select %p88, %s89, %s90
      %p94 = pneg %p88
      %p95 = scmp.eq.s32.totalorder %s11, 3
      %p96 = por %p94, %p95
      %p97 = scmp.ne.s32.totalorder %s89, %s92
      %p98 = scmp.eq.s32.totalorder %s11, 0
      %p99 = por %p97, %p98
      %p100 = scmp.ne.s32.totalorder %s89, %s92
      %p101 = scmp.eq.s32.totalorder %s16, 3
      %p102 = por %p100, %p101
      %p103 = scmp.ne.s32.totalorder %s92, %s93
      %p104 = scmp.eq.s32.totalorder %s16, 0
      %p105 = por %p103, %p104
      %p106 = scmp.ne.s32.totalorder %s92, %s93
      %p107 = scmp.eq.s32.totalorder %s17, 3
      %p108 = por %p106, %p107
      %p110 = scmp.ne.s32.totalorder %s93, %s109
      %p111 = scmp.eq.s32.totalorder %s17, 0
      %p112 = por %p110, %p111
      %s113 = ssub.s32 %s11, %s18
      %p114 = scmp.eq.s32.totalorder %s113, 0
      %s116 = sadd.s32 %s115, 1
      %s117 = scalar_select %p114, %s115, %s116
      %p120 = pneg %p114
      %p121 = scmp.eq.s32.totalorder %s11, 3
      %p122 = por %p120, %p121
      %p123 = scmp.ne.s32.totalorder %s115, %s118
      %p124 = scmp.eq.s32.totalorder %s11, 0
      %p125 = por %p123, %p124
      %p126 = scmp.ne.s32.totalorder %s115, %s118
      %p127 = scmp.eq.s32.totalorder %s16, 3
      %p128 = por %p126, %p127
      %p129 = scmp.ne.s32.totalorder %s118, %s119
      %p130 = scmp.eq.s32.totalorder %s16, 0
      %p131 = por %p129, %p130
      %p132 = scmp.ne.s32.totalorder %s118, %s119
      %p133 = scmp.eq.s32.totalorder %s17, 3
      %p134 = por %p132, %p133
      %p136 = scmp.ne.s32.totalorder %s119, %s135
      %p137 = scmp.eq.s32.totalorder %s17, 0
      %p138 = por %p136, %p137
      %s139 = ssub.s32 %s11, %s18
      %p140 = scmp.eq.s32.totalorder %s139, 0
      %s142 = sadd.s32 %s141, 1
      %s143 = scalar_select %p140, %s141, %s142
      %p146 = pneg %p140
      %p147 = scmp.eq.s32.totalorder %s11, 3
      %p148 = por %p146, %p147
      %p149 = scmp.ne.s32.totalorder %s141, %s144
      %p150 = scmp.eq.s32.totalorder %s11, 0
      %p151 = por %p149, %p150
      %p152 = scmp.ne.s32.totalorder %s141, %s144
      %p153 = scmp.eq.s32.totalorder %s16, 3
      %p154 = por %p152, %p153
      %p155 = scmp.ne.s32.totalorder %s144, %s145
      %p156 = scmp.eq.s32.totalorder %s16, 0
      %p157 = por %p155, %p156
      %p158 = scmp.ne.s32.totalorder %s144, %s145
      %p159 = scmp.eq.s32.totalorder %s17, 3
      %p160 = por %p158, %p159
      %p162 = scmp.ne.s32.totalorder %s145, %s161
      %p163 = scmp.eq.s32.totalorder %s17, 0
      %p164 = por %p162, %p163
      %p165 = scmp.le.s32.totalorder 1, %s11
      %p166 = scmp.lt.s32.totalorder %s11, 5
      %p167 = pnand %p165, %p166
      %p168 = pneg %p167
      // Predicated region
      $region9: #{best_gnn_forward.12} parent=5 // pred_check
        _
      $region10: #{best_gnn_forward.12} parent=5 // pred_check_branch
        %170 = sbr.rel (%p167) target = $region12
      $region11: #{best_gnn_forward.12} parent=5 // pred_region
        %s171 = ssub.s32 %s11, 1
        // Predicated region
        $region13: #{best_gnn_forward.12} parent=11 // pred_check
          %p172 = pneg %p58
        $region14: #{best_gnn_forward.12} parent=11 // pred_check_branch
          %174 = sbr.rel (%p172) target = $region16
        $region15: #{best_gnn_forward.12} parent=11 // pred_region
          _
        $region16: #{best_gnn_forward.12} parent=11 // pred_fallthru
          _
        // Predicated region
        $region17: #{best_gnn_forward.12} parent=11 // pred_check
          %p175 = pneg %p79
        $region18: #{best_gnn_forward.12} parent=11 // pred_check_branch
          %177 = sbr.rel (%p175) target = $region20
        $region19: #{best_gnn_forward.12} parent=11 // pred_region
          _
        $region20: #{best_gnn_forward.12} parent=11 // pred_fallthru
          _
      $region12: #{best_gnn_forward.12} parent=5 // pred_fallthru
        _
      %p178 = scmp.lt.s32.totalorder %s11, 4
      // Predicated region
      $region21: #{best_gnn_forward.12} parent=5 // pred_check
        %p179 = pneg %p178
      $region22: #{best_gnn_forward.12} parent=5 // pred_check_branch
        %181 = sbr.rel (%p179) target = $region24
      $region23: #{best_gnn_forward.12} parent=5 // pred_region
        // Predicated region
        $region25: #{best_gnn_forward.12} parent=23 // pred_check
          %p182 = pneg %p31
        $region26: #{best_gnn_forward.12} parent=23 // pred_check_branch
          %184 = sbr.rel (%p182) target = $region28
        $region27: #{best_gnn_forward.12} parent=23 // pred_region
          %s185 = smul.u32 16, %s11
          %p186 = scmp.lt.s32.totalorder %s185, 63
          %s187 = scalar_select %p186, %s185, 63
          %s188 = smul.addr %s187, 8
          %s189 = scalar_lea.vmem %s0, %s188
          %s190 = smul.u32 16, %s11
        $region28: #{best_gnn_forward.12} parent=23 // pred_fallthru
          _
        // Predicated region
        $region29: #{best_gnn_forward.12} parent=23 // pred_check
          %p191 = pneg %p99
        $region30: #{best_gnn_forward.12} parent=23 // pred_check_branch
          %193 = sbr.rel (%p191) target = $region32
        $region31: #{best_gnn_forward.12} parent=23 // pred_region
          %s194 = sand.u32 %s89, 1
          %s195 = sand.u32 %s89, 1
          %s196 = smul.addr %s195, 256
          %s197 = scalar_lea.vmem [#allocation2], %s196
          %s198 = smul.u32 16, %s11
          %s199 = smul.addr %s198, 8
          %s200 = scalar_lea.vmem %s3, %s199
          // Predicated region
          $region33: #{best_gnn_forward.12} parent=31 // pred_check
            _
          $region34: #{best_gnn_forward.12} parent=31 // pred_check_branch
            %202 = sbr.rel (0) target = $region36
          $region35: #{best_gnn_forward.12} parent=31 // pred_region
            // Predicated region
            $region37: #{best_gnn_forward.12} parent=35 // pred_check
              _
            $region38: #{best_gnn_forward.12} parent=35 // pred_check_branch
              %204 = sbr.rel (0) target = $region40
            $region39: #{best_gnn_forward.12} parent=35 // pred_region
              // Predicated region
              $region52: #{best_gnn_forward.12} parent=39 // pred_check
                _
              $region53: #{best_gnn_forward.12} parent=39 // pred_check_branch
                %281 = sbr.rel (0) target = $region55
              $region54: #{best_gnn_forward.12} parent=39 // pred_region
                loop: start=0, step=1, limit=1
                $region56: #{best_gnn_forward.12} parent=54 // loop_pre_header
                  _
                $region57: #{best_gnn_forward.12} parent=54 // loop_header
                  %s283 = sphi 0, %s287
                  %p284 = scmp.ge.s32.totalorder %s283, 1
                  %s288 = sphi %s200, %s200
                  %s289 = sphi %s197, %s197
                $region58: #{best_gnn_forward.12} parent=54 // loop_header_branch
                  %286 = sbr.rel (%p284) target = $region62
                $region59: #{best_gnn_forward.12} parent=54 // loop_body
                  %v290 = vld [vmem:[%s288] sm:$0xff]
                  %291 = vst [vmem:[%s289] sm:$0xff] %v290
                  %v292 = vld [vmem:[%s288 + $0x8] sm:$0xff]
                  %293 = vst [vmem:[%s289 + $0x8] sm:$0xff] %v292
                  %v294 = vld [vmem:[%s288 + $0x10] sm:$0xff]
                  %295 = vst [vmem:[%s289 + $0x10] sm:$0xff] %v294
                  %v296 = vld [vmem:[%s288 + $0x18] sm:$0xff]
                  %297 = vst [vmem:[%s289 + $0x18] sm:$0xff] %v296
                  %v298 = vld [vmem:[%s288 + $0x20] sm:$0xff]
                  %299 = vst [vmem:[%s289 + $0x20] sm:$0xff] %v298
                  %v300 = vld [vmem:[%s288 + $0x28] sm:$0xff]
                  %301 = vst [vmem:[%s289 + $0x28] sm:$0xff] %v300
                  %v302 = vld [vmem:[%s288 + $0x30] sm:$0xff]
                  %303 = vst [vmem:[%s289 + $0x30] sm:$0xff] %v302
                  %v304 = vld [vmem:[%s288 + $0x38] sm:$0xff]
                  %305 = vst [vmem:[%s289 + $0x38] sm:$0xff] %v304
                  %v306 = vld [vmem:[%s288 + $0x40] sm:$0xff]
                  %307 = vst [vmem:[%s289 + $0x40] sm:$0xff] %v306
                  %v308 = vld [vmem:[%s288 + $0x48] sm:$0xff]
                  %309 = vst [vmem:[%s289 + $0x48] sm:$0xff] %v308
                  %v310 = vld [vmem:[%s288 + $0x50] sm:$0xff]
                  %311 = vst [vmem:[%s289 + $0x50] sm:$0xff] %v310
                  %v312 = vld [vmem:[%s288 + $0x58] sm:$0xff]
                  %313 = vst [vmem:[%s289 + $0x58] sm:$0xff] %v312
                  %v314 = vld [vmem:[%s288 + $0x60] sm:$0xff]
                  %315 = vst [vmem:[%s289 + $0x60] sm:$0xff] %v314
                  %v316 = vld [vmem:[%s288 + $0x68] sm:$0xff]
                  %317 = vst [vmem:[%s289 + $0x68] sm:$0xff] %v316
                  %v318 = vld [vmem:[%s288 + $0x70] sm:$0xff]
                  %319 = vst [vmem:[%s289 + $0x70] sm:$0xff] %v318
                  %v320 = vld [vmem:[%s288 + $0x78] sm:$0xff]
                  %321 = vst [vmem:[%s289 + $0x78] sm:$0xff] %v320
                  %v322 = vld [vmem:[%s288 + $0x200] sm:$0xff]
                  %323 = vst [vmem:[%s289 + $0x80] sm:$0xff] %v322
                  %v324 = vld [vmem:[%s288 + $0x208] sm:$0xff]
                  %325 = vst [vmem:[%s289 + $0x88] sm:$0xff] %v324
                  %v326 = vld [vmem:[%s288 + $0x210] sm:$0xff]
                  %327 = vst [vmem:[%s289 + $0x90] sm:$0xff] %v326
                  %v328 = vld [vmem:[%s288 + $0x218] sm:$0xff]
                  %329 = vst [vmem:[%s289 + $0x98] sm:$0xff] %v328
                  %v330 = vld [vmem:[%s288 + $0x220] sm:$0xff]
                  %331 = vst [vmem:[%s289 + $0xa0] sm:$0xff] %v330
                  %v332 = vld [vmem:[%s288 + $0x228] sm:$0xff]
                  %333 = vst [vmem:[%s289 + $0xa8] sm:$0xff] %v332
                  %v334 = vld [vmem:[%s288 + $0x230] sm:$0xff]
                  %335 = vst [vmem:[%s289 + $0xb0] sm:$0xff] %v334
                  %v336 = vld [vmem:[%s288 + $0x238] sm:$0xff]
                  %337 = vst [vmem:[%s289 + $0xb8] sm:$0xff] %v336
                  %v338 = vld [vmem:[%s288 + $0x240] sm:$0xff]
                  %339 = vst [vmem:[%s289 + $0xc0] sm:$0xff] %v338
                  %v340 = vld [vmem:[%s288 + $0x248] sm:$0xff]
                  %341 = vst [vmem:[%s289 + $0xc8] sm:$0xff] %v340
                  %v342 = vld [vmem:[%s288 + $0x250] sm:$0xff]
                  %343 = vst [vmem:[%s289 + $0xd0] sm:$0xff] %v342
                  %v344 = vld [vmem:[%s288 + $0x258] sm:$0xff]
                  %345 = vst [vmem:[%s289 + $0xd8] sm:$0xff] %v344
                  %v346 = vld [vmem:[%s288 + $0x260] sm:$0xff]
                  %347 = vst [vmem:[%s289 + $0xe0] sm:$0xff] %v346
                  %v348 = vld [vmem:[%s288 + $0x268] sm:$0xff]
                  %349 = vst [vmem:[%s289 + $0xe8] sm:$0xff] %v348
                  %v350 = vld [vmem:[%s288 + $0x270] sm:$0xff]
                  %351 = vst [vmem:[%s289 + $0xf0] sm:$0xff] %v350
                  %v352 = vld [vmem:[%s288 + $0x278] sm:$0xff]
                  %353 = vst [vmem:[%s289 + $0xf8] sm:$0xff] %v352
                $region60: #{best_gnn_forward.12} parent=54 // loop_footer
                  %s287 = sadd.s32 1, %s283
                $region61: #{best_gnn_forward.12} parent=54 // loop_footer_branch
                  %282 = sbr.rel target = $region57
                $region62: #{best_gnn_forward.12} parent=54 // loop_exit
                  _
              $region55: #{best_gnn_forward.12} parent=39 // pred_fallthru
                _
              // Predicated region
              $region63: #{best_gnn_forward.12} parent=39 // pred_check
                _
              $region64: #{best_gnn_forward.12} parent=39 // pred_check_branch
                %355 = sbr.rel target = $region66
              $region65: #{best_gnn_forward.12} parent=39 // pred_region
                _
              $region66: #{best_gnn_forward.12} parent=39 // pred_fallthru
                _
            $region40: #{best_gnn_forward.12} parent=35 // pred_fallthru
              _
            // Predicated region
            $region41: #{best_gnn_forward.12} parent=35 // pred_check
              _
            $region42: #{best_gnn_forward.12} parent=35 // pred_check_branch
              %206 = sbr.rel target = $region44
            $region43: #{best_gnn_forward.12} parent=35 // pred_region
              loop: start=0, step=1, limit=1
              $region45: #{best_gnn_forward.12} parent=43 // loop_pre_header
                _
              $region46: #{best_gnn_forward.12} parent=43 // loop_header
                %s209 = sphi 0, %s213
                %p210 = scmp.ge.s32.totalorder %s209, 1
                %s214 = sphi %s200, %s200
                %s215 = sphi %s197, %s197
              $region47: #{best_gnn_forward.12} parent=43 // loop_header_branch
                %212 = sbr.rel (%p210) target = $region51
              $region48: #{best_gnn_forward.12} parent=43 // loop_body
                %v216 = vld [vmem:[%s214] sm:$0xff]
                %217 = vst [vmem:[%s215] sm:$0xff] %v216
                %v218 = vld [vmem:[%s214 + $0x8] sm:$0xff]
                %219 = vst [vmem:[%s215 + $0x8] sm:$0xff] %v218
                %v220 = vld [vmem:[%s214 + $0x10] sm:$0xff]
                %221 = vst [vmem:[%s215 + $0x10] sm:$0xff] %v220
                %v222 = vld [vmem:[%s214 + $0x18] sm:$0xff]
                %223 = vst [vmem:[%s215 + $0x18] sm:$0xff] %v222
                %v224 = vld [vmem:[%s214 + $0x20] sm:$0xff]
                %225 = vst [vmem:[%s215 + $0x20] sm:$0xff] %v224
                %v226 = vld [vmem:[%s214 + $0x28] sm:$0xff]
                %227 = vst [vmem:[%s215 + $0x28] sm:$0xff] %v226
                %v228 = vld [vmem:[%s214 + $0x30] sm:$0xff]
                %229 = vst [vmem:[%s215 + $0x30] sm:$0xff] %v228
                %v230 = vld [vmem:[%s214 + $0x38] sm:$0xff]
                %231 = vst [vmem:[%s215 + $0x38] sm:$0xff] %v230
                %v232 = vld [vmem:[%s214 + $0x40] sm:$0xff]
                %233 = vst [vmem:[%s215 + $0x40] sm:$0xff] %v232
                %v234 = vld [vmem:[%s214 + $0x48] sm:$0xff]
                %235 = vst [vmem:[%s215 + $0x48] sm:$0xff] %v234
                %v236 = vld [vmem:[%s214 + $0x50] sm:$0xff]
                %237 = vst [vmem:[%s215 + $0x50] sm:$0xff] %v236
                %v238 = vld [vmem:[%s214 + $0x58] sm:$0xff]
                %239 = vst [vmem:[%s215 + $0x58] sm:$0xff] %v238
                %v240 = vld [vmem:[%s214 + $0x60] sm:$0xff]
                %241 = vst [vmem:[%s215 + $0x60] sm:$0xff] %v240
                %v242 = vld [vmem:[%s214 + $0x68] sm:$0xff]
                %243 = vst [vmem:[%s215 + $0x68] sm:$0xff] %v242
                %v244 = vld [vmem:[%s214 + $0x70] sm:$0xff]
                %245 = vst [vmem:[%s215 + $0x70] sm:$0xff] %v244
                %v246 = vld [vmem:[%s214 + $0x78] sm:$0xff]
                %247 = vst [vmem:[%s215 + $0x78] sm:$0xff] %v246
                %v248 = vld [vmem:[%s214 + $0x200] sm:$0xff]
                %249 = vst [vmem:[%s215 + $0x80] sm:$0xff] %v248
                %v250 = vld [vmem:[%s214 + $0x208] sm:$0xff]
                %251 = vst [vmem:[%s215 + $0x88] sm:$0xff] %v250
                %v252 = vld [vmem:[%s214 + $0x210] sm:$0xff]
                %253 = vst [vmem:[%s215 + $0x90] sm:$0xff] %v252
                %v254 = vld [vmem:[%s214 + $0x218] sm:$0xff]
                %255 = vst [vmem:[%s215 + $0x98] sm:$0xff] %v254
                %v256 = vld [vmem:[%s214 + $0x220] sm:$0xff]
                %257 = vst [vmem:[%s215 + $0xa0] sm:$0xff] %v256
                %v258 = vld [vmem:[%s214 + $0x228] sm:$0xff]
                %259 = vst [vmem:[%s215 + $0xa8] sm:$0xff] %v258
                %v260 = vld [vmem:[%s214 + $0x230] sm:$0xff]
                %261 = vst [vmem:[%s215 + $0xb0] sm:$0xff] %v260
                %v262 = vld [vmem:[%s214 + $0x238] sm:$0xff]
                %263 = vst [vmem:[%s215 + $0xb8] sm:$0xff] %v262
                %v264 = vld [vmem:[%s214 + $0x240] sm:$0xff]
                %265 = vst [vmem:[%s215 + $0xc0] sm:$0xff] %v264
                %v266 = vld [vmem:[%s214 + $0x248] sm:$0xff]
                %267 = vst [vmem:[%s215 + $0xc8] sm:$0xff] %v266
                %v268 = vld [vmem:[%s214 + $0x250] sm:$0xff]
                %269 = vst [vmem:[%s215 + $0xd0] sm:$0xff] %v268
                %v270 = vld [vmem:[%s214 + $0x258] sm:$0xff]
                %271 = vst [vmem:[%s215 + $0xd8] sm:$0xff] %v270
                %v272 = vld [vmem:[%s214 + $0x260] sm:$0xff]
                %273 = vst [vmem:[%s215 + $0xe0] sm:$0xff] %v272
                %v274 = vld [vmem:[%s214 + $0x268] sm:$0xff]
                %275 = vst [vmem:[%s215 + $0xe8] sm:$0xff] %v274
                %v276 = vld [vmem:[%s214 + $0x270] sm:$0xff]
                %277 = vst [vmem:[%s215 + $0xf0] sm:$0xff] %v276
                %v278 = vld [vmem:[%s214 + $0x278] sm:$0xff]
                %279 = vst [vmem:[%s215 + $0xf8] sm:$0xff] %v278
              $region49: #{best_gnn_forward.12} parent=43 // loop_footer
                %s213 = sadd.s32 1, %s209
              $region50: #{best_gnn_forward.12} parent=43 // loop_footer_branch
                %208 = sbr.rel target = $region46
              $region51: #{best_gnn_forward.12} parent=43 // loop_exit
                _
            $region44: #{best_gnn_forward.12} parent=35 // pred_fallthru
              _
          $region36: #{best_gnn_forward.12} parent=31 // pred_fallthru
            _
          %356 = vnop
        $region32: #{best_gnn_forward.12} parent=23 // pred_fallthru
          _
        // Predicated region
        $region67: #{best_gnn_forward.12} parent=23 // pred_check
          %p357 = pneg %p125
        $region68: #{best_gnn_forward.12} parent=23 // pred_check_branch
          %359 = sbr.rel (%p357) target = $region70
        $region69: #{best_gnn_forward.12} parent=23 // pred_region
          %s360 = sand.u32 %s115, 1
          %s361 = sand.u32 %s115, 1
          %s362 = smul.addr %s361, 256
          %s363 = scalar_lea.vmem [#allocation3], %s362
          %s364 = smul.u32 16, %s11
          %s365 = smul.addr %s364, 8
          %s366 = scalar_lea.vmem %s4, %s365
          // Predicated region
          $region71: #{best_gnn_forward.12} parent=69 // pred_check
            _
          $region72: #{best_gnn_forward.12} parent=69 // pred_check_branch
            %368 = sbr.rel (0) target = $region74
          $region73: #{best_gnn_forward.12} parent=69 // pred_region
            // Predicated region
            $region75: #{best_gnn_forward.12} parent=73 // pred_check
              _
            $region76: #{best_gnn_forward.12} parent=73 // pred_check_branch
              %370 = sbr.rel (0) target = $region78
            $region77: #{best_gnn_forward.12} parent=73 // pred_region
              // Predicated region
              $region90: #{best_gnn_forward.12} parent=77 // pred_check
                _
              $region91: #{best_gnn_forward.12} parent=77 // pred_check_branch
                %447 = sbr.rel (0) target = $region93
              $region92: #{best_gnn_forward.12} parent=77 // pred_region
                loop: start=0, step=1, limit=1
                $region94: #{best_gnn_forward.12} parent=92 // loop_pre_header
                  _
                $region95: #{best_gnn_forward.12} parent=92 // loop_header
                  %s449 = sphi 0, %s453
                  %p450 = scmp.ge.s32.totalorder %s449, 1
                  %s454 = sphi %s366, %s366
                  %s455 = sphi %s363, %s363
                $region96: #{best_gnn_forward.12} parent=92 // loop_header_branch
                  %452 = sbr.rel (%p450) target = $region100
                $region97: #{best_gnn_forward.12} parent=92 // loop_body
                  %v456 = vld [vmem:[%s454] sm:$0xff]
                  %457 = vst [vmem:[%s455] sm:$0xff] %v456
                  %v458 = vld [vmem:[%s454 + $0x8] sm:$0xff]
                  %459 = vst [vmem:[%s455 + $0x8] sm:$0xff] %v458
                  %v460 = vld [vmem:[%s454 + $0x10] sm:$0xff]
                  %461 = vst [vmem:[%s455 + $0x10] sm:$0xff] %v460
                  %v462 = vld [vmem:[%s454 + $0x18] sm:$0xff]
                  %463 = vst [vmem:[%s455 + $0x18] sm:$0xff] %v462
                  %v464 = vld [vmem:[%s454 + $0x20] sm:$0xff]
                  %465 = vst [vmem:[%s455 + $0x20] sm:$0xff] %v464
                  %v466 = vld [vmem:[%s454 + $0x28] sm:$0xff]
                  %467 = vst [vmem:[%s455 + $0x28] sm:$0xff] %v466
                  %v468 = vld [vmem:[%s454 + $0x30] sm:$0xff]
                  %469 = vst [vmem:[%s455 + $0x30] sm:$0xff] %v468
                  %v470 = vld [vmem:[%s454 + $0x38] sm:$0xff]
                  %471 = vst [vmem:[%s455 + $0x38] sm:$0xff] %v470
                  %v472 = vld [vmem:[%s454 + $0x40] sm:$0xff]
                  %473 = vst [vmem:[%s455 + $0x40] sm:$0xff] %v472
                  %v474 = vld [vmem:[%s454 + $0x48] sm:$0xff]
                  %475 = vst [vmem:[%s455 + $0x48] sm:$0xff] %v474
                  %v476 = vld [vmem:[%s454 + $0x50] sm:$0xff]
                  %477 = vst [vmem:[%s455 + $0x50] sm:$0xff] %v476
                  %v478 = vld [vmem:[%s454 + $0x58] sm:$0xff]
                  %479 = vst [vmem:[%s455 + $0x58] sm:$0xff] %v478
                  %v480 = vld [vmem:[%s454 + $0x60] sm:$0xff]
                  %481 = vst [vmem:[%s455 + $0x60] sm:$0xff] %v480
                  %v482 = vld [vmem:[%s454 + $0x68] sm:$0xff]
                  %483 = vst [vmem:[%s455 + $0x68] sm:$0xff] %v482
                  %v484 = vld [vmem:[%s454 + $0x70] sm:$0xff]
                  %485 = vst [vmem:[%s455 + $0x70] sm:$0xff] %v484
                  %v486 = vld [vmem:[%s454 + $0x78] sm:$0xff]
                  %487 = vst [vmem:[%s455 + $0x78] sm:$0xff] %v486
                  %v488 = vld [vmem:[%s454 + $0x200] sm:$0xff]
                  %489 = vst [vmem:[%s455 + $0x80] sm:$0xff] %v488
                  %v490 = vld [vmem:[%s454 + $0x208] sm:$0xff]
                  %491 = vst [vmem:[%s455 + $0x88] sm:$0xff] %v490
                  %v492 = vld [vmem:[%s454 + $0x210] sm:$0xff]
                  %493 = vst [vmem:[%s455 + $0x90] sm:$0xff] %v492
                  %v494 = vld [vmem:[%s454 + $0x218] sm:$0xff]
                  %495 = vst [vmem:[%s455 + $0x98] sm:$0xff] %v494
                  %v496 = vld [vmem:[%s454 + $0x220] sm:$0xff]
                  %497 = vst [vmem:[%s455 + $0xa0] sm:$0xff] %v496
                  %v498 = vld [vmem:[%s454 + $0x228] sm:$0xff]
                  %499 = vst [vmem:[%s455 + $0xa8] sm:$0xff] %v498
                  %v500 = vld [vmem:[%s454 + $0x230] sm:$0xff]
                  %501 = vst [vmem:[%s455 + $0xb0] sm:$0xff] %v500
                  %v502 = vld [vmem:[%s454 + $0x238] sm:$0xff]
                  %503 = vst [vmem:[%s455 + $0xb8] sm:$0xff] %v502
                  %v504 = vld [vmem:[%s454 + $0x240] sm:$0xff]
                  %505 = vst [vmem:[%s455 + $0xc0] sm:$0xff] %v504
                  %v506 = vld [vmem:[%s454 + $0x248] sm:$0xff]
                  %507 = vst [vmem:[%s455 + $0xc8] sm:$0xff] %v506
                  %v508 = vld [vmem:[%s454 + $0x250] sm:$0xff]
                  %509 = vst [vmem:[%s455 + $0xd0] sm:$0xff] %v508
                  %v510 = vld [vmem:[%s454 + $0x258] sm:$0xff]
                  %511 = vst [vmem:[%s455 + $0xd8] sm:$0xff] %v510
                  %v512 = vld [vmem:[%s454 + $0x260] sm:$0xff]
                  %513 = vst [vmem:[%s455 + $0xe0] sm:$0xff] %v512
                  %v514 = vld [vmem:[%s454 + $0x268] sm:$0xff]
                  %515 = vst [vmem:[%s455 + $0xe8] sm:$0xff] %v514
                  %v516 = vld [vmem:[%s454 + $0x270] sm:$0xff]
                  %517 = vst [vmem:[%s455 + $0xf0] sm:$0xff] %v516
                  %v518 = vld [vmem:[%s454 + $0x278] sm:$0xff]
                  %519 = vst [vmem:[%s455 + $0xf8] sm:$0xff] %v518
                $region98: #{best_gnn_forward.12} parent=92 // loop_footer
                  %s453 = sadd.s32 1, %s449
                $region99: #{best_gnn_forward.12} parent=92 // loop_footer_branch
                  %448 = sbr.rel target = $region95
                $region100: #{best_gnn_forward.12} parent=92 // loop_exit
                  _
              $region93: #{best_gnn_forward.12} parent=77 // pred_fallthru
                _
              // Predicated region
              $region101: #{best_gnn_forward.12} parent=77 // pred_check
                _
              $region102: #{best_gnn_forward.12} parent=77 // pred_check_branch
                %521 = sbr.rel target = $region104
              $region103: #{best_gnn_forward.12} parent=77 // pred_region
                _
              $region104: #{best_gnn_forward.12} parent=77 // pred_fallthru
                _
            $region78: #{best_gnn_forward.12} parent=73 // pred_fallthru
              _
            // Predicated region
            $region79: #{best_gnn_forward.12} parent=73 // pred_check
              _
            $region80: #{best_gnn_forward.12} parent=73 // pred_check_branch
              %372 = sbr.rel target = $region82
            $region81: #{best_gnn_forward.12} parent=73 // pred_region
              loop: start=0, step=1, limit=1
              $region83: #{best_gnn_forward.12} parent=81 // loop_pre_header
                _
              $region84: #{best_gnn_forward.12} parent=81 // loop_header
                %s375 = sphi 0, %s379
                %p376 = scmp.ge.s32.totalorder %s375, 1
                %s380 = sphi %s366, %s366
                %s381 = sphi %s363, %s363
              $region85: #{best_gnn_forward.12} parent=81 // loop_header_branch
                %378 = sbr.rel (%p376) target = $region89
              $region86: #{best_gnn_forward.12} parent=81 // loop_body
                %v382 = vld [vmem:[%s380] sm:$0xff]
                %383 = vst [vmem:[%s381] sm:$0xff] %v382
                %v384 = vld [vmem:[%s380 + $0x8] sm:$0xff]
                %385 = vst [vmem:[%s381 + $0x8] sm:$0xff] %v384
                %v386 = vld [vmem:[%s380 + $0x10] sm:$0xff]
                %387 = vst [vmem:[%s381 + $0x10] sm:$0xff] %v386
                %v388 = vld [vmem:[%s380 + $0x18] sm:$0xff]
                %389 = vst [vmem:[%s381 + $0x18] sm:$0xff] %v388
                %v390 = vld [vmem:[%s380 + $0x20] sm:$0xff]
                %391 = vst [vmem:[%s381 + $0x20] sm:$0xff] %v390
                %v392 = vld [vmem:[%s380 + $0x28] sm:$0xff]
                %393 = vst [vmem:[%s381 + $0x28] sm:$0xff] %v392
                %v394 = vld [vmem:[%s380 + $0x30] sm:$0xff]
                %395 = vst [vmem:[%s381 + $0x30] sm:$0xff] %v394
                %v396 = vld [vmem:[%s380 + $0x38] sm:$0xff]
                %397 = vst [vmem:[%s381 + $0x38] sm:$0xff] %v396
                %v398 = vld [vmem:[%s380 + $0x40] sm:$0xff]
                %399 = vst [vmem:[%s381 + $0x40] sm:$0xff] %v398
                %v400 = vld [vmem:[%s380 + $0x48] sm:$0xff]
                %401 = vst [vmem:[%s381 + $0x48] sm:$0xff] %v400
                %v402 = vld [vmem:[%s380 + $0x50] sm:$0xff]
                %403 = vst [vmem:[%s381 + $0x50] sm:$0xff] %v402
                %v404 = vld [vmem:[%s380 + $0x58] sm:$0xff]
                %405 = vst [vmem:[%s381 + $0x58] sm:$0xff] %v404
                %v406 = vld [vmem:[%s380 + $0x60] sm:$0xff]
                %407 = vst [vmem:[%s381 + $0x60] sm:$0xff] %v406
                %v408 = vld [vmem:[%s380 + $0x68] sm:$0xff]
                %409 = vst [vmem:[%s381 + $0x68] sm:$0xff] %v408
                %v410 = vld [vmem:[%s380 + $0x70] sm:$0xff]
                %411 = vst [vmem:[%s381 + $0x70] sm:$0xff] %v410
                %v412 = vld [vmem:[%s380 + $0x78] sm:$0xff]
                %413 = vst [vmem:[%s381 + $0x78] sm:$0xff] %v412
                %v414 = vld [vmem:[%s380 + $0x200] sm:$0xff]
                %415 = vst [vmem:[%s381 + $0x80] sm:$0xff] %v414
                %v416 = vld [vmem:[%s380 + $0x208] sm:$0xff]
                %417 = vst [vmem:[%s381 + $0x88] sm:$0xff] %v416
                %v418 = vld [vmem:[%s380 + $0x210] sm:$0xff]
                %419 = vst [vmem:[%s381 + $0x90] sm:$0xff] %v418
                %v420 = vld [vmem:[%s380 + $0x218] sm:$0xff]
                %421 = vst [vmem:[%s381 + $0x98] sm:$0xff] %v420
                %v422 = vld [vmem:[%s380 + $0x220] sm:$0xff]
                %423 = vst [vmem:[%s381 + $0xa0] sm:$0xff] %v422
                %v424 = vld [vmem:[%s380 + $0x228] sm:$0xff]
                %425 = vst [vmem:[%s381 + $0xa8] sm:$0xff] %v424
                %v426 = vld [vmem:[%s380 + $0x230] sm:$0xff]
                %427 = vst [vmem:[%s381 + $0xb0] sm:$0xff] %v426
                %v428 = vld [vmem:[%s380 + $0x238] sm:$0xff]
                %429 = vst [vmem:[%s381 + $0xb8] sm:$0xff] %v428
                %v430 = vld [vmem:[%s380 + $0x240] sm:$0xff]
                %431 = vst [vmem:[%s381 + $0xc0] sm:$0xff] %v430
                %v432 = vld [vmem:[%s380 + $0x248] sm:$0xff]
                %433 = vst [vmem:[%s381 + $0xc8] sm:$0xff] %v432
                %v434 = vld [vmem:[%s380 + $0x250] sm:$0xff]
                %435 = vst [vmem:[%s381 + $0xd0] sm:$0xff] %v434
                %v436 = vld [vmem:[%s380 + $0x258] sm:$0xff]
                %437 = vst [vmem:[%s381 + $0xd8] sm:$0xff] %v436
                %v438 = vld [vmem:[%s380 + $0x260] sm:$0xff]
                %439 = vst [vmem:[%s381 + $0xe0] sm:$0xff] %v438
                %v440 = vld [vmem:[%s380 + $0x268] sm:$0xff]
                %441 = vst [vmem:[%s381 + $0xe8] sm:$0xff] %v440
                %v442 = vld [vmem:[%s380 + $0x270] sm:$0xff]
                %443 = vst [vmem:[%s381 + $0xf0] sm:$0xff] %v442
                %v444 = vld [vmem:[%s380 + $0x278] sm:$0xff]
                %445 = vst [vmem:[%s381 + $0xf8] sm:$0xff] %v444
              $region87: #{best_gnn_forward.12} parent=81 // loop_footer
                %s379 = sadd.s32 1, %s375
              $region88: #{best_gnn_forward.12} parent=81 // loop_footer_branch
                %374 = sbr.rel target = $region84
              $region89: #{best_gnn_forward.12} parent=81 // loop_exit
                _
            $region82: #{best_gnn_forward.12} parent=73 // pred_fallthru
              _
          $region74: #{best_gnn_forward.12} parent=69 // pred_fallthru
            _
          %522 = vnop
        $region70: #{best_gnn_forward.12} parent=23 // pred_fallthru
          _
      $region24: #{best_gnn_forward.12} parent=5 // pred_fallthru
        _
      %p523 = scmp.le.s32.totalorder 1, %s11
      %p524 = scmp.lt.s32.totalorder %s11, 5
      %p525 = pnand %p523, %p524
      %p526 = pneg %p525
      // Predicated region
      $region105: #{best_gnn_forward.12} parent=5 // pred_check
        _
      $region106: #{best_gnn_forward.12} parent=5 // pred_check_branch
        %528 = sbr.rel (%p525) target = $region108
      $region107: #{best_gnn_forward.12} parent=5 // pred_region
        %s529 = ssub.s32 %s11, 1
        %s530 = sand.u32 %s92, 1
        %s531 = sand.u32 %s92, 1
        %s532 = smul.addr %s531, 256
        %s533 = scalar_lea.vmem [#allocation2], %s532
        // Predicated region
        $region109: #{best_gnn_forward.12} parent=107 // pred_check
          %p534 = pneg %p105
        $region110: #{best_gnn_forward.12} parent=107 // pred_check_branch
          %536 = sbr.rel (%p534) target = $region112
        $region111: #{best_gnn_forward.12} parent=107 // pred_region
          _
        $region112: #{best_gnn_forward.12} parent=107 // pred_fallthru
          _
        %s537 = sand.u32 %s118, 1
        %s538 = sand.u32 %s118, 1
        %s539 = smul.addr %s538, 256
        %s540 = scalar_lea.vmem [#allocation3], %s539
        // Predicated region
        $region113: #{best_gnn_forward.12} parent=107 // pred_check
          %p541 = pneg %p131
        $region114: #{best_gnn_forward.12} parent=107 // pred_check_branch
          %543 = sbr.rel (%p541) target = $region116
        $region115: #{best_gnn_forward.12} parent=107 // pred_region
          _
        $region116: #{best_gnn_forward.12} parent=107 // pred_fallthru
          _
        %s544 = smul.u32 16, %s16
        %p545 = scmp.lt.s32.totalorder %s544, 63
        %s546 = scalar_select %p545, %s544, 63
        %s547 = smul.addr %s546, 8
        %s548 = scalar_lea.vmem %s0, %s547
        %p549 = pneg %p37
        %p550 = pneg %p34
        %p551 = pneg %p58
        %p552 = pneg %p55
        %p553 = pneg %p79
        %p554 = pneg %p76
        %s555 = sand.u32 %s92, 1
        %s556 = sand.u32 %s92, 1
        %s557 = smul.addr %s556, 256
        %s558 = scalar_lea.vmem [#allocation2], %s557
        %p559 = pneg %p105
        %p560 = pneg %p102
        %s561 = sand.u32 %s118, 1
        %s562 = sand.u32 %s118, 1
        %s563 = smul.addr %s562, 256
        %s564 = scalar_lea.vmem [#allocation3], %s563
        %p565 = pneg %p131
        %p566 = pneg %p128
        %p567 = pneg %p157
        %p568 = pneg %p154
        %s569 = smul.u32 16, %s16
        %p570 = scmp.lt.s32.totalorder %s569, 63
        %s571 = scalar_select %p570, %s569, 63
        %s572 = smul.addr %s571, 8
        %s573 = scalar_lea.vmem %s5, %s572
        %s574 = smul.u32 16, %s16
        %p575 = scmp.lt.s32.totalorder %s574, 63
        %s576 = scalar_select %p575, %s574, 63
        %s577 = smul.addr %s576, 8
        %s578 = scalar_lea.vmem %s0, %s577
        %s579 = smul.u32 16, %s16
        %s580 = smul.u32 16, %s16
        %s581 = smul.u32 16, %s16
        %s582 = smul.u32 16, %s16
        %p583 = scmp.lt.s32.totalorder %s582, 63
        %s584 = scalar_select %p583, %s582, 63
        %s585 = smul.addr %s584, 8
        %s586 = scalar_lea.vmem %s5, %s585
        %s587 = smul.u32 16, %s16
        %v588 = vld [vmem:[%s578] sm:$0xff]
        %v589 = vld [vmem:[%s578 + $0x8] sm:$0xff]
        %v590 = vld [vmem:[%s578 + $0x10] sm:$0xff]
        %v591 = vld [vmem:[%s578 + $0x18] sm:$0xff]
        %v592 = vld [vmem:[%s578 + $0x20] sm:$0xff]
        %v593 = vld [vmem:[%s578 + $0x28] sm:$0xff]
        %v594 = vld [vmem:[%s578 + $0x30] sm:$0xff]
        %v595 = vld [vmem:[%s578 + $0x38] sm:$0xff]
        %v596 = vld [vmem:[%s578 + $0x40] sm:$0xff]
        %v597 = vld [vmem:[%s578 + $0x48] sm:$0xff]
        %v598 = vld [vmem:[%s578 + $0x50] sm:$0xff]
        %v599 = vld [vmem:[%s578 + $0x58] sm:$0xff]
        %v600 = vld [vmem:[%s578 + $0x60] sm:$0xff]
        %v601 = vld [vmem:[%s578 + $0x68] sm:$0xff]
        %v602 = vld [vmem:[%s578 + $0x70] sm:$0xff]
        %v603 = vld [vmem:[%s578 + $0x78] sm:$0xff]
        %v604 = vld [vmem:[%s1] sm:$0x7]
        %v605 = vld [vmem:[%s2] sm:$0x1]
        %v607 = vlaneseq
        %v608 = vshrl.u32 %v607, 7
        %v609 = vsub.s32 0, %v608
        %v610 = vrot.slane %v605, %v609
        %vm612 = vcmask 23552
        %v614 = vsel %vm612, %v588, 0
        %v617 = vsel %vm612, %v589, 0
        %v620 = vsel %vm612, %v590, 0
        %v623 = vsel %vm612, %v591, 0
        %v626 = vsel %vm612, %v592, 0
        %v629 = vsel %vm612, %v593, 0
        %v632 = vsel %vm612, %v594, 0
        %v635 = vsel %vm612, %v595, 0
        %v638 = vsel %vm612, %v596, 0
        %v641 = vsel %vm612, %v597, 0
        %v644 = vsel %vm612, %v598, 0
        %v647 = vsel %vm612, %v599, 0
        %v650 = vsel %vm612, %v600, 0
        %v653 = vsel %vm612, %v601, 0
        %v656 = vsel %vm612, %v602, 0
        %v659 = vsel %vm612, %v603, 0
        %vm661 = vcmask 1042432
        %v663 = vsel %vm661, %v604, 0
        %665 = vmatprep.subr.mxu0 0.0
        %666 = vmatpush1.msra.mxu0 %v663
        %667 = vmatprep.subr.mxu0 0.0
        %668 = vmatpush1.msra.mxu0 0.0
        %669 = vmatprep.subr.mxu0 0.0
        %670 = vmatpush1.msra.mxu0 0.0
        %671 = vmatprep.subr.mxu0 0.0
        %672 = vmatpush1.msra.mxu0 0.0
        %673 = vmatprep.subr.mxu0 0.0
        %674 = vmatpush1.msra.mxu0 0.0
        %675 = vmatprep.subr.mxu0 0.0
        %676 = vmatpush1.msra.mxu0 0.0
        %677 = vmatprep.subr.mxu0 0.0
        %678 = vmatpush1.msra.mxu0 0.0
        %679 = vmatprep.subr.mxu0 0.0
        %680 = vmatpush1.msra.mxu0 0.0
        %681 = vmatprep.subr.mxu0 0.0
        %682 = vmatpush1.msra.mxu0 0.0
        %683 = vmatprep.subr.mxu0 0.0
        %684 = vmatpush1.msra.mxu0 0.0
        %685 = vmatprep.subr.mxu0 0.0
        %686 = vmatpush1.msra.mxu0 0.0
        %687 = vmatprep.subr.mxu0 0.0
        %688 = vmatpush1.msra.mxu0 0.0
        %689 = vmatprep.subr.mxu0 0.0
        %690 = vmatpush1.msra.mxu0 0.0
        %691 = vmatprep.subr.mxu0 0.0
        %692 = vmatpush1.msra.mxu0 0.0
        %693 = vmatprep.subr.mxu0 0.0
        %694 = vmatpush1.msra.mxu0 0.0
        %695 = vmatprep.subr.mxu0 0.0
        %696 = vmatpush1.msra.mxu0 0.0
        %697 = vmatprep.subr.mxu0 0.0
        %698 = vmatpush1.msra.mxu0 0.0
        %699 = vmatprep.subr.mxu0 0.0
        %700 = vmatpush1.msra.mxu0 0.0
        %701 = vmatprep.subr.mxu0 0.0
        %702 = vmatpush1.msra.mxu0 0.0
        %703 = vmatprep.subr.mxu0 0.0
        %704 = vmatpush1.msra.mxu0 0.0
        %705 = vmatprep.subr.mxu0 0.0
        %706 = vmatpush1.msra.mxu0 0.0
        %707 = vmatprep.subr.mxu0 0.0
        %708 = vmatpush1.msra.mxu0 0.0
        %709 = vmatprep.subr.mxu0 0.0
        %710 = vmatpush1.msra.mxu0 0.0
        %711 = vmatprep.subr.mxu0 0.0
        %712 = vmatpush1.msra.mxu0 0.0
        %713 = vmatprep.subr.mxu0 0.0
        %714 = vmatpush1.msra.mxu0 0.0
        %715 = vmatprep.subr.mxu0 0.0
        %716 = vmatpush1.msra.mxu0 0.0
        %717 = vmatprep.subr.mxu0 0.0
        %718 = vmatpush1.msra.mxu0 0.0
        %719 = vmatprep.subr.mxu0 0.0
        %720 = vmatpush1.msra.mxu0 0.0
        %721 = vmatprep.subr.mxu0 0.0
        %722 = vmatpush1.msra.mxu0 0.0
        %723 = vmatprep.subr.mxu0 0.0
        %724 = vmatpush1.msra.mxu0 0.0
        %725 = vmatprep.subr.mxu0 0.0
        %726 = vmatpush1.msra.mxu0 0.0
        %727 = vmatprep.subr.mxu0 0.0
        %728 = vmatpush1.msra.mxu0 0.0
        %729 = vmatprep.mubr.f32.mxu0 0.0
        %730 = vmatmul.mubr.f32.gmra.mrb[0].mxu0 %v614
        %v731 = vpop.f32.mrb[0].mxu0
        %v732 = vadd.f32 %v610, %v731
        %v733 = vpop.f32.mrb[0].mxu0
        %734 = vmatprep.mubr.f32.mxu0 0.0
        %735 = vmatmul.mubr.f32.gmra.mrb[0].mxu0 %v617
        %v736 = vpop.f32.mrb[0].mxu0
        %v737 = vadd.f32 %v610, %v736
        %v738 = vpop.f32.mrb[0].mxu0
        %739 = vmatprep.mubr.f32.mxu0 0.0
        %740 = vmatmul.mubr.f32.gmra.mrb[0].mxu0 %v620
        %v741 = vpop.f32.mrb[0].mxu0
        %v742 = vadd.f32 %v610, %v741
        %v743 = vpop.f32.mrb[0].mxu0
        %744 = vmatprep.mubr.f32.mxu0 0.0
        %745 = vmatmul.mubr.f32.gmra.mrb[0].mxu0 %v623
        %v746 = vpop.f32.mrb[0].mxu0
        %v747 = vadd.f32 %v610, %v746
        %v748 = vpop.f32.mrb[0].mxu0
        %749 = vmatprep.mubr.f32.mxu0 0.0
        %750 = vmatmul.mubr.f32.gmra.mrb[0].mxu0 %v626
        %v751 = vpop.f32.mrb[0].mxu0
        %v752 = vadd.f32 %v610, %v751
        %v753 = vpop.f32.mrb[0].mxu0
        %754 = vmatprep.mubr.f32.mxu0 0.0
        %755 = vmatmul.mubr.f32.gmra.mrb[0].mxu0 %v629
        %v756 = vpop.f32.mrb[0].mxu0
        %v757 = vadd.f32 %v610, %v756
        %v758 = vpop.f32.mrb[0].mxu0
        %759 = vmatprep.mubr.f32.mxu0 0.0
        %760 = vmatmul.mubr.f32.gmra.mrb[0].mxu0 %v632
        %v761 = vpop.f32.mrb[0].mxu0
        %v762 = vadd.f32 %v610, %v761
        %v763 = vpop.f32.mrb[0].mxu0
        %764 = vmatprep.mubr.f32.mxu0 0.0
        %765 = vmatmul.mubr.f32.gmra.mrb[0].mxu0 %v635
        %v766 = vpop.f32.mrb[0].mxu0
        %v767 = vadd.f32 %v610, %v766
        %v768 = vpop.f32.mrb[0].mxu0
        %769 = vmatprep.mubr.f32.mxu0 0.0
        %770 = vmatmul.mubr.f32.gmra.mrb[0].mxu0 %v638
        %v771 = vpop.f32.mrb[0].mxu0
        %v772 = vadd.f32 %v610, %v771
        %v773 = vpop.f32.mrb[0].mxu0
        %774 = vmatprep.mubr.f32.mxu0 0.0
        %775 = vmatmul.mubr.f32.gmra.mrb[0].mxu0 %v641
        %v776 = vpop.f32.mrb[0].mxu0
        %v777 = vadd.f32 %v610, %v776
        %v778 = vpop.f32.mrb[0].mxu0
        %779 = vmatprep.mubr.f32.mxu0 0.0
        %780 = vmatmul.mubr.f32.gmra.mrb[0].mxu0 %v644
        %v781 = vpop.f32.mrb[0].mxu0
        %v782 = vadd.f32 %v610, %v781
        %v783 = vpop.f32.mrb[0].mxu0
        %784 = vmatprep.mubr.f32.mxu0 0.0
        %785 = vmatmul.mubr.f32.gmra.mrb[0].mxu0 %v647
        %v786 = vpop.f32.mrb[0].mxu0
        %v787 = vadd.f32 %v610, %v786
        %v788 = vpop.f32.mrb[0].mxu0
        %789 = vmatprep.mubr.f32.mxu0 0.0
        %790 = vmatmul.mubr.f32.gmra.mrb[0].mxu0 %v650
        %v791 = vpop.f32.mrb[0].mxu0
        %v792 = vadd.f32 %v610, %v791
        %v793 = vpop.f32.mrb[0].mxu0
        %794 = vmatprep.mubr.f32.mxu0 0.0
        %795 = vmatmul.mubr.f32.gmra.mrb[0].mxu0 %v653
        %v796 = vpop.f32.mrb[0].mxu0
        %v797 = vadd.f32 %v610, %v796
        %v798 = vpop.f32.mrb[0].mxu0
        %799 = vmatprep.mubr.f32.mxu0 0.0
        %800 = vmatmul.mubr.f32.gmra.mrb[0].mxu0 %v656
        %v801 = vpop.f32.mrb[0].mxu0
        %v802 = vadd.f32 %v610, %v801
        %v803 = vpop.f32.mrb[0].mxu0
        %804 = vmatprep.mubr.f32.mxu0 0.0
        %805 = vmatmul.mubr.f32.gmra.mrb[0].mxu0 %v659
        %v806 = vpop.f32.mrb[0].mxu0
        %v807 = vadd.f32 %v610, %v806
        %v808 = vpop.f32.mrb[0].mxu0
        %809 = vdwg.mxu0
        %v810 = vld [vmem:[%s533] sm:$0xff]
        %v811 = vld [vmem:[%s533 + $0x8] sm:$0xff]
        %v812 = vld [vmem:[%s533 + $0x10] sm:$0xff]
        %v813 = vld [vmem:[%s533 + $0x18] sm:$0xff]
        %v814 = vld [vmem:[%s533 + $0x20] sm:$0xff]
        %v815 = vld [vmem:[%s533 + $0x28] sm:$0xff]
        %v816 = vld [vmem:[%s533 + $0x30] sm:$0xff]
        %v817 = vld [vmem:[%s533 + $0x38] sm:$0xff]
        %v818 = vld [vmem:[%s533 + $0x40] sm:$0xff]
        %v819 = vld [vmem:[%s533 + $0x48] sm:$0xff]
        %v820 = vld [vmem:[%s533 + $0x50] sm:$0xff]
        %v821 = vld [vmem:[%s533 + $0x58] sm:$0xff]
        %v822 = vld [vmem:[%s533 + $0x60] sm:$0xff]
        %v823 = vld [vmem:[%s533 + $0x68] sm:$0xff]
        %v824 = vld [vmem:[%s533 + $0x70] sm:$0xff]
        %v825 = vld [vmem:[%s533 + $0x78] sm:$0xff]
        %v826 = vadd.f32 %v732, %v810
        %v827 = vadd.f32 %v737, %v811
        %v828 = vadd.f32 %v742, %v812
        %v829 = vadd.f32 %v747, %v813
        %v830 = vadd.f32 %v752, %v814
        %v831 = vadd.f32 %v757, %v815
        %v832 = vadd.f32 %v762, %v816
        %v833 = vadd.f32 %v767, %v817
        %v834 = vadd.f32 %v772, %v818
        %v835 = vadd.f32 %v777, %v819
        %v836 = vadd.f32 %v782, %v820
        %v837 = vadd.f32 %v787, %v821
        %v838 = vadd.f32 %v792, %v822
        %v839 = vadd.f32 %v797, %v823
        %v840 = vadd.f32 %v802, %v824
        %v841 = vadd.f32 %v807, %v825
        %v842 = vsub.f32 0.0, %v826
        %v843 = vsub.f32 0.0, %v827
        %v844 = vsub.f32 0.0, %v828
        %v845 = vsub.f32 0.0, %v829
        %v846 = vsub.f32 0.0, %v830
        %v847 = vsub.f32 0.0, %v831
        %v848 = vsub.f32 0.0, %v832
        %v849 = vsub.f32 0.0, %v833
        %v850 = vsub.f32 0.0, %v834
        %v851 = vsub.f32 0.0, %v835
        %v852 = vsub.f32 0.0, %v836
        %v853 = vsub.f32 0.0, %v837
        %v854 = vsub.f32 0.0, %v838
        %v855 = vsub.f32 0.0, %v839
        %v856 = vsub.f32 0.0, %v840
        %v857 = vsub.f32 0.0, %v841
        %v858 = vmul.f32 %v842, 1.442695
        %v859 = vpow.pop %v858
        %v860 = vmul.f32 %v843, 1.442695
        %v861 = vpow.pop %v860
        %v862 = vmul.f32 %v844, 1.442695
        %v863 = vpow.pop %v862
        %v864 = vmul.f32 %v845, 1.442695
        %v865 = vpow.pop %v864
        %v866 = vmul.f32 %v846, 1.442695
        %v867 = vpow.pop %v866
        %v868 = vmul.f32 %v847, 1.442695
        %v869 = vpow.pop %v868
        %v870 = vmul.f32 %v848, 1.442695
        %v871 = vpow.pop %v870
        %v872 = vmul.f32 %v849, 1.442695
        %v873 = vpow.pop %v872
        %v874 = vmul.f32 %v850, 1.442695
        %v875 = vpow.pop %v874
        %v876 = vmul.f32 %v851, 1.442695
        %v877 = vpow.pop %v876
        %v878 = vmul.f32 %v852, 1.442695
        %v879 = vpow.pop %v878
        %v880 = vmul.f32 %v853, 1.442695
        %v881 = vpow.pop %v880
        %v882 = vmul.f32 %v854, 1.442695
        %v883 = vpow.pop %v882
        %v884 = vmul.f32 %v855, 1.442695
        %v885 = vpow.pop %v884
        %v886 = vmul.f32 %v856, 1.442695
        %v887 = vpow.pop %v886
        %v888 = vmul.f32 %v857, 1.442695
        %v889 = vpow.pop %v888
        %v890 = vadd.f32 %v859, 1.0
        %v891 = vadd.f32 %v861, 1.0
        %v892 = vadd.f32 %v863, 1.0
        %v893 = vadd.f32 %v865, 1.0
        %v894 = vadd.f32 %v867, 1.0
        %v895 = vadd.f32 %v869, 1.0
        %v896 = vadd.f32 %v871, 1.0
        %v897 = vadd.f32 %v873, 1.0
        %v898 = vadd.f32 %v875, 1.0
        %v899 = vadd.f32 %v877, 1.0
        %v900 = vadd.f32 %v879, 1.0
        %v901 = vadd.f32 %v881, 1.0
        %v902 = vadd.f32 %v883, 1.0
        %v903 = vadd.f32 %v885, 1.0
        %v904 = vadd.f32 %v887, 1.0
        %v905 = vadd.f32 %v889, 1.0
        %v906 = vrcp.pop %v890
        %v907 = vmul.f32 1.0, %v906
        %v908 = vrcp.pop %v891
        %v909 = vmul.f32 1.0, %v908
        %v910 = vrcp.pop %v892
        %v911 = vmul.f32 1.0, %v910
        %v912 = vrcp.pop %v893
        %v913 = vmul.f32 1.0, %v912
        %v914 = vrcp.pop %v894
        %v915 = vmul.f32 1.0, %v914
        %v916 = vrcp.pop %v895
        %v917 = vmul.f32 1.0, %v916
        %v918 = vrcp.pop %v896
        %v919 = vmul.f32 1.0, %v918
        %v920 = vrcp.pop %v897
        %v921 = vmul.f32 1.0, %v920
        %v922 = vrcp.pop %v898
        %v923 = vmul.f32 1.0, %v922
        %v924 = vrcp.pop %v899
        %v925 = vmul.f32 1.0, %v924
        %v926 = vrcp.pop %v900
        %v927 = vmul.f32 1.0, %v926
        %v928 = vrcp.pop %v901
        %v929 = vmul.f32 1.0, %v928
        %v930 = vrcp.pop %v902
        %v931 = vmul.f32 1.0, %v930
        %v932 = vrcp.pop %v903
        %v933 = vmul.f32 1.0, %v932
        %v934 = vrcp.pop %v904
        %v935 = vmul.f32 1.0, %v934
        %v936 = vrcp.pop %v905
        %v937 = vmul.f32 1.0, %v936
        %v938 = vld [vmem:[%s540] sm:$0xff]
        %v939 = vld [vmem:[%s540 + $0x8] sm:$0xff]
        %v940 = vld [vmem:[%s540 + $0x10] sm:$0xff]
        %v941 = vld [vmem:[%s540 + $0x18] sm:$0xff]
        %v942 = vld [vmem:[%s540 + $0x20] sm:$0xff]
        %v943 = vld [vmem:[%s540 + $0x28] sm:$0xff]
        %v944 = vld [vmem:[%s540 + $0x30] sm:$0xff]
        %v945 = vld [vmem:[%s540 + $0x38] sm:$0xff]
        %v946 = vld [vmem:[%s540 + $0x40] sm:$0xff]
        %v947 = vld [vmem:[%s540 + $0x48] sm:$0xff]
        %v948 = vld [vmem:[%s540 + $0x50] sm:$0xff]
        %v949 = vld [vmem:[%s540 + $0x58] sm:$0xff]
        %v950 = vld [vmem:[%s540 + $0x60] sm:$0xff]
        %v951 = vld [vmem:[%s540 + $0x68] sm:$0xff]
        %v952 = vld [vmem:[%s540 + $0x70] sm:$0xff]
        %v953 = vld [vmem:[%s540 + $0x78] sm:$0xff]
        %955 = vset.pattern.permute.xlu0 0
        %956 = vperm.xlu0 %955, %v938
        %v957 = vpop.permute.xlu0 %956
        %960 = vset.pattern.permute.xlu0 0
        %961 = vperm.xlu0 %960, %v939
        %v962 = vpop.permute.xlu0 %961
        %965 = vset.pattern.permute.xlu0 0
        %966 = vperm.xlu0 %965, %v940
        %v967 = vpop.permute.xlu0 %966
        %970 = vset.pattern.permute.xlu0 0
        %971 = vperm.xlu0 %970, %v941
        %v972 = vpop.permute.xlu0 %971
        %975 = vset.pattern.permute.xlu0 0
        %976 = vperm.xlu0 %975, %v942
        %v977 = vpop.permute.xlu0 %976
        %980 = vset.pattern.permute.xlu0 0
        %981 = vperm.xlu0 %980, %v943
        %v982 = vpop.permute.xlu0 %981
        %985 = vset.pattern.permute.xlu0 0
        %986 = vperm.xlu0 %985, %v944
        %v987 = vpop.permute.xlu0 %986
        %990 = vset.pattern.permute.xlu0 0
        %991 = vperm.xlu0 %990, %v945
        %v992 = vpop.permute.xlu0 %991
        %995 = vset.pattern.permute.xlu0 0
        %996 = vperm.xlu0 %995, %v946
        %v997 = vpop.permute.xlu0 %996
        %1000 = vset.pattern.permute.xlu0 0
        %1001 = vperm.xlu0 %1000, %v947
        %v1002 = vpop.permute.xlu0 %1001
        %1005 = vset.pattern.permute.xlu0 0
        %1006 = vperm.xlu0 %1005, %v948
        %v1007 = vpop.permute.xlu0 %1006
        %1010 = vset.pattern.permute.xlu0 0
        %1011 = vperm.xlu0 %1010, %v949
        %v1012 = vpop.permute.xlu0 %1011
        %1015 = vset.pattern.permute.xlu0 0
        %1016 = vperm.xlu0 %1015, %v950
        %v1017 = vpop.permute.xlu0 %1016
        %1020 = vset.pattern.permute.xlu0 0
        %1021 = vperm.xlu0 %1020, %v951
        %v1022 = vpop.permute.xlu0 %1021
        %1025 = vset.pattern.permute.xlu0 0
        %1026 = vperm.xlu0 %1025, %v952
        %v1027 = vpop.permute.xlu0 %1026
        %1030 = vset.pattern.permute.xlu0 0
        %1031 = vperm.xlu0 %1030, %v953
        %v1032 = vpop.permute.xlu0 %1031
        %v1034 = vmul.f32 %v907, %v957
        %v1035 = vmul.f32 %v909, %v962
        %v1036 = vmul.f32 %v911, %v967
        %v1037 = vmul.f32 %v913, %v972
        %v1038 = vmul.f32 %v915, %v977
        %v1039 = vmul.f32 %v917, %v982
        %v1040 = vmul.f32 %v919, %v987
        %v1041 = vmul.f32 %v921, %v992
        %v1042 = vmul.f32 %v923, %v997
        %v1043 = vmul.f32 %v925, %v1002
        %v1044 = vmul.f32 %v927, %v1007
        %v1045 = vmul.f32 %v929, %v1012
        %v1046 = vmul.f32 %v931, %v1017
        %v1047 = vmul.f32 %v933, %v1022
        %v1048 = vmul.f32 %v935, %v1027
        %v1049 = vmul.f32 %v937, %v1032
        %v1050 = vmax.f32 %v1034, 0.0
        %v1051 = vmax.f32 %v1035, 0.0
        %v1052 = vmax.f32 %v1036, 0.0
        %v1053 = vmax.f32 %v1037, 0.0
        %v1054 = vmax.f32 %v1038, 0.0
        %v1055 = vmax.f32 %v1039, 0.0
        %v1056 = vmax.f32 %v1040, 0.0
        %v1057 = vmax.f32 %v1041, 0.0
        %v1058 = vmax.f32 %v1042, 0.0
        %v1059 = vmax.f32 %v1043, 0.0
        %v1060 = vmax.f32 %v1044, 0.0
        %v1061 = vmax.f32 %v1045, 0.0
        %v1062 = vmax.f32 %v1046, 0.0
        %v1063 = vmax.f32 %v1047, 0.0
        %v1064 = vmax.f32 %v1048, 0.0
        %v1065 = vmax.f32 %v1049, 0.0
        %s1066 = scalar_lea.vmem %s533, 128 [#allocation2]
        %v1067 = vld [vmem:[%s1066] sm:$0xff]
        %v1068 = vld [vmem:[%s1066 + $0x8] sm:$0xff]
        %v1069 = vld [vmem:[%s1066 + $0x10] sm:$0xff]
        %v1070 = vld [vmem:[%s1066 + $0x18] sm:$0xff]
        %v1071 = vld [vmem:[%s1066 + $0x20] sm:$0xff]
        %v1072 = vld [vmem:[%s1066 + $0x28] sm:$0xff]
        %v1073 = vld [vmem:[%s1066 + $0x30] sm:$0xff]
        %v1074 = vld [vmem:[%s1066 + $0x38] sm:$0xff]
        %v1075 = vld [vmem:[%s1066 + $0x40] sm:$0xff]
        %v1076 = vld [vmem:[%s1066 + $0x48] sm:$0xff]
        %v1077 = vld [vmem:[%s1066 + $0x50] sm:$0xff]
        %v1078 = vld [vmem:[%s1066 + $0x58] sm:$0xff]
        %v1079 = vld [vmem:[%s1066 + $0x60] sm:$0xff]
        %v1080 = vld [vmem:[%s1066 + $0x68] sm:$0xff]
        %v1081 = vld [vmem:[%s1066 + $0x70] sm:$0xff]
        %v1082 = vld [vmem:[%s1066 + $0x78] sm:$0xff]
        %v1083 = vadd.f32 %v732, %v1067
        %v1084 = vadd.f32 %v737, %v1068
        %v1085 = vadd.f32 %v742, %v1069
        %v1086 = vadd.f32 %v747, %v1070
        %v1087 = vadd.f32 %v752, %v1071
        %v1088 = vadd.f32 %v757, %v1072
        %v1089 = vadd.f32 %v762, %v1073
        %v1090 = vadd.f32 %v767, %v1074
        %v1091 = vadd.f32 %v772, %v1075
        %v1092 = vadd.f32 %v777, %v1076
        %v1093 = vadd.f32 %v782, %v1077
        %v1094 = vadd.f32 %v787, %v1078
        %v1095 = vadd.f32 %v792, %v1079
        %v1096 = vadd.f32 %v797, %v1080
        %v1097 = vadd.f32 %v802, %v1081
        %v1098 = vadd.f32 %v807, %v1082
        %v1099 = vsub.f32 0.0, %v1083
        %v1100 = vsub.f32 0.0, %v1084
        %v1101 = vsub.f32 0.0, %v1085
        %v1102 = vsub.f32 0.0, %v1086
        %v1103 = vsub.f32 0.0, %v1087
        %v1104 = vsub.f32 0.0, %v1088
        %v1105 = vsub.f32 0.0, %v1089
        %v1106 = vsub.f32 0.0, %v1090
        %v1107 = vsub.f32 0.0, %v1091
        %v1108 = vsub.f32 0.0, %v1092
        %v1109 = vsub.f32 0.0, %v1093
        %v1110 = vsub.f32 0.0, %v1094
        %v1111 = vsub.f32 0.0, %v1095
        %v1112 = vsub.f32 0.0, %v1096
        %v1113 = vsub.f32 0.0, %v1097
        %v1114 = vsub.f32 0.0, %v1098
        %v1115 = vmul.f32 %v1099, 1.442695
        %v1116 = vpow.pop %v1115
        %v1117 = vmul.f32 %v1100, 1.442695
        %v1118 = vpow.pop %v1117
        %v1119 = vmul.f32 %v1101, 1.442695
        %v1120 = vpow.pop %v1119
        %v1121 = vmul.f32 %v1102, 1.442695
        %v1122 = vpow.pop %v1121
        %v1123 = vmul.f32 %v1103, 1.442695
        %v1124 = vpow.pop %v1123
        %v1125 = vmul.f32 %v1104, 1.442695
        %v1126 = vpow.pop %v1125
        %v1127 = vmul.f32 %v1105, 1.442695
        %v1128 = vpow.pop %v1127
        %v1129 = vmul.f32 %v1106, 1.442695
        %v1130 = vpow.pop %v1129
        %v1131 = vmul.f32 %v1107, 1.442695
        %v1132 = vpow.pop %v1131
        %v1133 = vmul.f32 %v1108, 1.442695
        %v1134 = vpow.pop %v1133
        %v1135 = vmul.f32 %v1109, 1.442695
        %v1136 = vpow.pop %v1135
        %v1137 = vmul.f32 %v1110, 1.442695
        %v1138 = vpow.pop %v1137
        %v1139 = vmul.f32 %v1111, 1.442695
        %v1140 = vpow.pop %v1139
        %v1141 = vmul.f32 %v1112, 1.442695
        %v1142 = vpow.pop %v1141
        %v1143 = vmul.f32 %v1113, 1.442695
        %v1144 = vpow.pop %v1143
        %v1145 = vmul.f32 %v1114, 1.442695
        %v1146 = vpow.pop %v1145
        %v1147 = vadd.f32 %v1116, 1.0
        %v1148 = vadd.f32 %v1118, 1.0
        %v1149 = vadd.f32 %v1120, 1.0
        %v1150 = vadd.f32 %v1122, 1.0
        %v1151 = vadd.f32 %v1124, 1.0
        %v1152 = vadd.f32 %v1126, 1.0
        %v1153 = vadd.f32 %v1128, 1.0
        %v1154 = vadd.f32 %v1130, 1.0
        %v1155 = vadd.f32 %v1132, 1.0
        %v1156 = vadd.f32 %v1134, 1.0
        %v1157 = vadd.f32 %v1136, 1.0
        %v1158 = vadd.f32 %v1138, 1.0
        %v1159 = vadd.f32 %v1140, 1.0
        %v1160 = vadd.f32 %v1142, 1.0
        %v1161 = vadd.f32 %v1144, 1.0
        %v1162 = vadd.f32 %v1146, 1.0
        %v1163 = vrcp.pop %v1147
        %v1164 = vmul.f32 1.0, %v1163
        %v1165 = vrcp.pop %v1148
        %v1166 = vmul.f32 1.0, %v1165
        %v1167 = vrcp.pop %v1149
        %v1168 = vmul.f32 1.0, %v1167
        %v1169 = vrcp.pop %v1150
        %v1170 = vmul.f32 1.0, %v1169
        %v1171 = vrcp.pop %v1151
        %v1172 = vmul.f32 1.0, %v1171
        %v1173 = vrcp.pop %v1152
        %v1174 = vmul.f32 1.0, %v1173
        %v1175 = vrcp.pop %v1153
        %v1176 = vmul.f32 1.0, %v1175
        %v1177 = vrcp.pop %v1154
        %v1178 = vmul.f32 1.0, %v1177
        %v1179 = vrcp.pop %v1155
        %v1180 = vmul.f32 1.0, %v1179
        %v1181 = vrcp.pop %v1156
        %v1182 = vmul.f32 1.0, %v1181
        %v1183 = vrcp.pop %v1157
        %v1184 = vmul.f32 1.0, %v1183
        %v1185 = vrcp.pop %v1158
        %v1186 = vmul.f32 1.0, %v1185
        %v1187 = vrcp.pop %v1159
        %v1188 = vmul.f32 1.0, %v1187
        %v1189 = vrcp.pop %v1160
        %v1190 = vmul.f32 1.0, %v1189
        %v1191 = vrcp.pop %v1161
        %v1192 = vmul.f32 1.0, %v1191
        %v1193 = vrcp.pop %v1162
        %v1194 = vmul.f32 1.0, %v1193
        %s1195 = scalar_lea.vmem %s540, 128 [#allocation3]
        %v1196 = vld [vmem:[%s1195] sm:$0xff]
        %v1197 = vld [vmem:[%s1195 + $0x8] sm:$0xff]
        %v1198 = vld [vmem:[%s1195 + $0x10] sm:$0xff]
        %v1199 = vld [vmem:[%s1195 + $0x18] sm:$0xff]
        %v1200 = vld [vmem:[%s1195 + $0x20] sm:$0xff]
        %v1201 = vld [vmem:[%s1195 + $0x28] sm:$0xff]
        %v1202 = vld [vmem:[%s1195 + $0x30] sm:$0xff]
        %v1203 = vld [vmem:[%s1195 + $0x38] sm:$0xff]
        %v1204 = vld [vmem:[%s1195 + $0x40] sm:$0xff]
        %v1205 = vld [vmem:[%s1195 + $0x48] sm:$0xff]
        %v1206 = vld [vmem:[%s1195 + $0x50] sm:$0xff]
        %v1207 = vld [vmem:[%s1195 + $0x58] sm:$0xff]
        %v1208 = vld [vmem:[%s1195 + $0x60] sm:$0xff]
        %v1209 = vld [vmem:[%s1195 + $0x68] sm:$0xff]
        %v1210 = vld [vmem:[%s1195 + $0x70] sm:$0xff]
        %v1211 = vld [vmem:[%s1195 + $0x78] sm:$0xff]
        %1213 = vset.pattern.permute.xlu0 0
        %1214 = vperm.xlu0 %1213, %v1196
        %v1215 = vpop.permute.xlu0 %1214
        %1218 = vset.pattern.permute.xlu0 0
        %1219 = vperm.xlu0 %1218, %v1197
        %v1220 = vpop.permute.xlu0 %1219
        %1223 = vset.pattern.permute.xlu0 0
        %1224 = vperm.xlu0 %1223, %v1198
        %v1225 = vpop.permute.xlu0 %1224
        %1228 = vset.pattern.permute.xlu0 0
        %1229 = vperm.xlu0 %1228, %v1199
        %v1230 = vpop.permute.xlu0 %1229
        %1233 = vset.pattern.permute.xlu0 0
        %1234 = vperm.xlu0 %1233, %v1200
        %v1235 = vpop.permute.xlu0 %1234
        %1238 = vset.pattern.permute.xlu0 0
        %1239 = vperm.xlu0 %1238, %v1201
        %v1240 = vpop.permute.xlu0 %1239
        %1243 = vset.pattern.permute.xlu0 0
        %1244 = vperm.xlu0 %1243, %v1202
        %v1245 = vpop.permute.xlu0 %1244
        %1248 = vset.pattern.permute.xlu0 0
        %1249 = vperm.xlu0 %1248, %v1203
        %v1250 = vpop.permute.xlu0 %1249
        %1253 = vset.pattern.permute.xlu0 0
        %1254 = vperm.xlu0 %1253, %v1204
        %v1255 = vpop.permute.xlu0 %1254
        %1258 = vset.pattern.permute.xlu0 0
        %1259 = vperm.xlu0 %1258, %v1205
        %v1260 = vpop.permute.xlu0 %1259
        %1263 = vset.pattern.permute.xlu0 0
        %1264 = vperm.xlu0 %1263, %v1206
        %v1265 = vpop.permute.xlu0 %1264
        %1268 = vset.pattern.permute.xlu0 0
        %1269 = vperm.xlu0 %1268, %v1207
        %v1270 = vpop.permute.xlu0 %1269
        %1273 = vset.pattern.permute.xlu0 0
        %1274 = vperm.xlu0 %1273, %v1208
        %v1275 = vpop.permute.xlu0 %1274
        %1278 = vset.pattern.permute.xlu0 0
        %1279 = vperm.xlu0 %1278, %v1209
        %v1280 = vpop.permute.xlu0 %1279
        %1283 = vset.pattern.permute.xlu0 0
        %1284 = vperm.xlu0 %1283, %v1210
        %v1285 = vpop.permute.xlu0 %1284
        %1288 = vset.pattern.permute.xlu0 0
        %1289 = vperm.xlu0 %1288, %v1211
        %v1290 = vpop.permute.xlu0 %1289
        %v1292 = vmul.f32 %v1164, %v1215
        %v1293 = vmul.f32 %v1166, %v1220
        %v1294 = vmul.f32 %v1168, %v1225
        %v1295 = vmul.f32 %v1170, %v1230
        %v1296 = vmul.f32 %v1172, %v1235
        %v1297 = vmul.f32 %v1174, %v1240
        %v1298 = vmul.f32 %v1176, %v1245
        %v1299 = vmul.f32 %v1178, %v1250
        %v1300 = vmul.f32 %v1180, %v1255
        %v1301 = vmul.f32 %v1182, %v1260
        %v1302 = vmul.f32 %v1184, %v1265
        %v1303 = vmul.f32 %v1186, %v1270
        %v1304 = vmul.f32 %v1188, %v1275
        %v1305 = vmul.f32 %v1190, %v1280
        %v1306 = vmul.f32 %v1192, %v1285
        %v1307 = vmul.f32 %v1194, %v1290
        %v1308 = vmax.f32 %v1050, %v1292
        %v1309 = vmax.f32 %v1051, %v1293
        %v1310 = vmax.f32 %v1052, %v1294
        %v1311 = vmax.f32 %v1053, %v1295
        %v1312 = vmax.f32 %v1054, %v1296
        %v1313 = vmax.f32 %v1055, %v1297
        %v1314 = vmax.f32 %v1056, %v1298
        %v1315 = vmax.f32 %v1057, %v1299
        %v1316 = vmax.f32 %v1058, %v1300
        %v1317 = vmax.f32 %v1059, %v1301
        %v1318 = vmax.f32 %v1060, %v1302
        %v1319 = vmax.f32 %v1061, %v1303
        %v1320 = vmax.f32 %v1062, %v1304
        %v1321 = vmax.f32 %v1063, %v1305
        %v1322 = vmax.f32 %v1064, %v1306
        %v1323 = vmax.f32 %v1065, %v1307
        %1324 = vst [vmem:[%s586] sm:$0xff] %v1308
        %1325 = vst [vmem:[%s586 + $0x8] sm:$0xff] %v1309
        %1326 = vst [vmem:[%s586 + $0x10] sm:$0xff] %v1310
        %1327 = vst [vmem:[%s586 + $0x18] sm:$0xff] %v1311
        %1328 = vst [vmem:[%s586 + $0x20] sm:$0xff] %v1312
        %1329 = vst [vmem:[%s586 + $0x28] sm:$0xff] %v1313
        %1330 = vst [vmem:[%s586 + $0x30] sm:$0xff] %v1314
        %1331 = vst [vmem:[%s586 + $0x38] sm:$0xff] %v1315
        %1332 = vst [vmem:[%s586 + $0x40] sm:$0xff] %v1316
        %1333 = vst [vmem:[%s586 + $0x48] sm:$0xff] %v1317
        %1334 = vst [vmem:[%s586 + $0x50] sm:$0xff] %v1318
        %1335 = vst [vmem:[%s586 + $0x58] sm:$0xff] %v1319
        %1336 = vst [vmem:[%s586 + $0x60] sm:$0xff] %v1320
        %1337 = vst [vmem:[%s586 + $0x68] sm:$0xff] %v1321
        %1338 = vst [vmem:[%s586 + $0x70] sm:$0xff] %v1322
        %1339 = vst [vmem:[%s586 + $0x78] sm:$0xff] %v1323
        %s1340 = smul.u32 16, %s16
        %p1341 = scmp.lt.s32.totalorder %s1340, 63
        %s1342 = scalar_select %p1341, %s1340, 63
        %s1343 = smul.addr %s1342, 8
        %s1344 = scalar_lea.vmem %s5, %s1343
        // Predicated region
        $region117: #{best_gnn_forward.12} parent=107 // pred_check
          %p1345 = pneg %p154
        $region118: #{best_gnn_forward.12} parent=107 // pred_check_branch
          %1347 = sbr.rel (%p1345) target = $region120
        $region119: #{best_gnn_forward.12} parent=107 // pred_region
          %s1348 = smul.u32 16, %s16
        $region120: #{best_gnn_forward.12} parent=107 // pred_fallthru
          _
      $region108: #{best_gnn_forward.12} parent=5 // pred_fallthru
        _
      %p1349 = scmp.le.s32.totalorder 2, %s11
      // Predicated region
      $region121: #{best_gnn_forward.12} parent=5 // pred_check
        %p1350 = pneg %p1349
      $region122: #{best_gnn_forward.12} parent=5 // pred_check_branch
        %1352 = sbr.rel (%p1350) target = $region124
      $region123: #{best_gnn_forward.12} parent=5 // pred_region
        %s1353 = ssub.s32 %s11, 2
        // Predicated region
        $region125: #{best_gnn_forward.12} parent=123 // pred_check
          %p1354 = pneg %p160
        $region126: #{best_gnn_forward.12} parent=123 // pred_check_branch
          %1356 = sbr.rel (%p1354) target = $region128
        $region127: #{best_gnn_forward.12} parent=123 // pred_region
          %s1357 = smul.u32 16, %s17
          %p1358 = scmp.lt.s32.totalorder %s1357, 63
          %s1359 = scalar_select %p1358, %s1357, 63
          %s1360 = smul.addr %s1359, 8
          %s1361 = scalar_lea.vmem %s5, %s1360
        $region128: #{best_gnn_forward.12} parent=123 // pred_fallthru
          _
      $region124: #{best_gnn_forward.12} parent=5 // pred_fallthru
        _
    $region6: #{best_gnn_forward.12} parent=1 // loop_footer
      %s15 = sadd.s32 1, %s11
    $region7: #{best_gnn_forward.12} parent=1 // loop_footer_branch
      %10 = sbr.rel target = $region3
    $region8: #{best_gnn_forward.12} parent=1 // loop_exit
      _

// kernel: best_gnn_forward.14
$region0: #{best_gnn_forward.14}
  #allocation0 [shape = 'u32[]', space=smem, size = 0x4, offset = 0x4, fixed_abs, tag = 'smem constant byte address 0x4 - core index']
  #allocation1 [shape = 'u32[144,128]{1,0:T(1,128)}', space=vmem, size = 0x12000, scoped, tag = 'internal scratch']
  %s0 = inlined_call_operand.vmem [shape: f32[512,128], index: 0, kind: input, shape index: {}]
  %s1 = inlined_call_operand.vmem [shape: f32[128,128], index: 1, kind: input, shape index: {}]
  %s2 = inlined_call_operand.vmem [shape: f32[1,128], index: 2, kind: input, shape index: {}]
  %s3 = inlined_call_operand.vmem [shape: f32[2,512,128], index: 3, kind: input, shape index: {}]
  %s4 = inlined_call_operand.vmem [shape: f32[2,512,1], index: 4, kind: input, shape index: {}]
  %s5 = inlined_call_operand.vmem [shape: f32[512,128], index: 5, kind: output, shape index: {}]
  %s6 = sld [smem:[#allocation0]]
  $region129: #{best_gnn_forward.14} parent=0
    _
  %s8 = ssub.s32 1, %s6
  %s9 = scalar_select 0, %s8, %s6
  $region1: #{best_gnn_forward.14} parent=0
    #allocation2 [shape = 'u8[262144]{0}', space=vmem, size = 0x40000, scoped, tag = 'input window, operand 3']
    #allocation3 [shape = 'u8[262144]{0}', space=vmem, size = 0x40000, scoped, tag = 'input window, operand 4']
    loop: start=0, step=1, limit=6
    $region2: #{best_gnn_forward.14} parent=1 // loop_pre_header
      _
    $region3: #{best_gnn_forward.14} parent=1 // loop_header
      %s11 = sphi 0, %s15
      %p12 = scmp.ge.s32.totalorder %s11, 6
      %s21 = sphi 0, %s23
      %s24 = sphi 0, %s21
      %s25 = sphi 0, %s24
      %s41 = sphi 0, %s25
      %s45 = sphi 0, %s45
      %s47 = sphi 0, %s45
      %s48 = sphi 0, %s47
      %s62 = sphi 0, %s48
      %s66 = sphi 0, %s66
      %s68 = sphi 0, %s66
      %s69 = sphi 0, %s68
      %s83 = sphi 0, %s69
      %s89 = sphi 0, %s91
      %s92 = sphi 0, %s89
      %s93 = sphi 0, %s92
      %s109 = sphi 0, %s93
      %s115 = sphi 0, %s117
      %s118 = sphi 0, %s115
      %s119 = sphi 0, %s118
      %s135 = sphi 0, %s119
      %s141 = sphi 0, %s143
      %s144 = sphi 0, %s141
      %s145 = sphi 0, %s144
      %s161 = sphi 0, %s145
    $region4: #{best_gnn_forward.14} parent=1 // loop_header_branch
      %14 = sbr.rel (%p12) target = $region8
    $region5: #{best_gnn_forward.14} parent=1 // loop_body
      %s16 = ssub.s32 %s11, 1
      %s17 = ssub.s32 %s11, 2
      %s18 = sadd.s32 %s11, 1
      %s19 = ssub.s32 %s11, %s18
      %p20 = scmp.eq.s32.totalorder %s19, 0
      %s22 = sadd.s32 %s21, 1
      %s23 = scalar_select %p20, %s21, %s22
      %p26 = pneg %p20
      %p27 = scmp.eq.s32.totalorder %s11, 3
      %p28 = por %p26, %p27
      %p29 = scmp.ne.s32.totalorder %s21, %s24
      %p30 = scmp.eq.s32.totalorder %s11, 0
      %p31 = por %p29, %p30
      %p32 = scmp.ne.s32.totalorder %s21, %s24
      %p33 = scmp.eq.s32.totalorder %s16, 3
      %p34 = por %p32, %p33
      %p35 = scmp.ne.s32.totalorder %s24, %s25
      %p36 = scmp.eq.s32.totalorder %s16, 0
      %p37 = por %p35, %p36
      %p38 = scmp.ne.s32.totalorder %s24, %s25
      %p39 = scmp.eq.s32.totalorder %s17, 3
      %p40 = por %p38, %p39
      %p42 = scmp.ne.s32.totalorder %s25, %s41
      %p43 = scmp.eq.s32.totalorder %s17, 0
      %p44 = por %p42, %p43
      %s46 = sadd.s32 %s45, 1
      %p49 = scmp.eq.s32.totalorder %s11, 3
      %p50 = scmp.ne.s32.totalorder %s45, %s47
      %p51 = scmp.eq.s32.totalorder %s11, 0
      %p52 = por %p50, %p51
      %p53 = scmp.ne.s32.totalorder %s45, %s47
      %p54 = scmp.eq.s32.totalorder %s16, 3
      %p55 = por %p53, %p54
      %p56 = scmp.ne.s32.totalorder %s47, %s48
      %p57 = scmp.eq.s32.totalorder %s16, 0
      %p58 = por %p56, %p57
      %p59 = scmp.ne.s32.totalorder %s47, %s48
      %p60 = scmp.eq.s32.totalorder %s17, 3
      %p61 = por %p59, %p60
      %p63 = scmp.ne.s32.totalorder %s48, %s62
      %p64 = scmp.eq.s32.totalorder %s17, 0
      %p65 = por %p63, %p64
      %s67 = sadd.s32 %s66, 1
      %p70 = scmp.eq.s32.totalorder %s11, 3
      %p71 = scmp.ne.s32.totalorder %s66, %s68
      %p72 = scmp.eq.s32.totalorder %s11, 0
      %p73 = por %p71, %p72
      %p74 = scmp.ne.s32.totalorder %s66, %s68
      %p75 = scmp.eq.s32.totalorder %s16, 3
      %p76 = por %p74, %p75
      %p77 = scmp.ne.s32.totalorder %s68, %s69
      %p78 = scmp.eq.s32.totalorder %s16, 0
      %p79 = por %p77, %p78
      %p80 = scmp.ne.s32.totalorder %s68, %s69
      %p81 = scmp.eq.s32.totalorder %s17, 3
      %p82 = por %p80, %p81
      %p84 = scmp.ne.s32.totalorder %s69, %s83
      %p85 = scmp.eq.s32.totalorder %s17, 0
      %p86 = por %p84, %p85
      %s87 = ssub.s32 %s11, %s18
      %p88 = scmp.eq.s32.totalorder %s87, 0
      %s90 = sadd.s32 %s89, 1
      %s91 = scalar_select %p88, %s89, %s90
      %p94 = pneg %p88
      %p95 = scmp.eq.s32.totalorder %s11, 3
      %p96 = por %p94, %p95
      %p97 = scmp.ne.s32.totalorder %s89, %s92
      %p98 = scmp.eq.s32.totalorder %s11, 0
      %p99 = por %p97, %p98
      %p100 = scmp.ne.s32.totalorder %s89, %s92
      %p101 = scmp.eq.s32.totalorder %s16, 3
      %p102 = por %p100, %p101
      %p103 = scmp.ne.s32.totalorder %s92, %s93
      %p104 = scmp.eq.s32.totalorder %s16, 0
      %p105 = por %p103, %p104
      %p106 = scmp.ne.s32.totalorder %s92, %s93
      %p107 = scmp.eq.s32.totalorder %s17, 3
      %p108 = por %p106, %p107
      %p110 = scmp.ne.s32.totalorder %s93, %s109
      %p111 = scmp.eq.s32.totalorder %s17, 0
      %p112 = por %p110, %p111
      %s113 = ssub.s32 %s11, %s18
      %p114 = scmp.eq.s32.totalorder %s113, 0
      %s116 = sadd.s32 %s115, 1
      %s117 = scalar_select %p114, %s115, %s116
      %p120 = pneg %p114
      %p121 = scmp.eq.s32.totalorder %s11, 3
      %p122 = por %p120, %p121
      %p123 = scmp.ne.s32.totalorder %s115, %s118
      %p124 = scmp.eq.s32.totalorder %s11, 0
      %p125 = por %p123, %p124
      %p126 = scmp.ne.s32.totalorder %s115, %s118
      %p127 = scmp.eq.s32.totalorder %s16, 3
      %p128 = por %p126, %p127
      %p129 = scmp.ne.s32.totalorder %s118, %s119
      %p130 = scmp.eq.s32.totalorder %s16, 0
      %p131 = por %p129, %p130
      %p132 = scmp.ne.s32.totalorder %s118, %s119
      %p133 = scmp.eq.s32.totalorder %s17, 3
      %p134 = por %p132, %p133
      %p136 = scmp.ne.s32.totalorder %s119, %s135
      %p137 = scmp.eq.s32.totalorder %s17, 0
      %p138 = por %p136, %p137
      %s139 = ssub.s32 %s11, %s18
      %p140 = scmp.eq.s32.totalorder %s139, 0
      %s142 = sadd.s32 %s141, 1
      %s143 = scalar_select %p140, %s141, %s142
      %p146 = pneg %p140
      %p147 = scmp.eq.s32.totalorder %s11, 3
      %p148 = por %p146, %p147
      %p149 = scmp.ne.s32.totalorder %s141, %s144
      %p150 = scmp.eq.s32.totalorder %s11, 0
      %p151 = por %p149, %p150
      %p152 = scmp.ne.s32.totalorder %s141, %s144
      %p153 = scmp.eq.s32.totalorder %s16, 3
      %p154 = por %p152, %p153
      %p155 = scmp.ne.s32.totalorder %s144, %s145
      %p156 = scmp.eq.s32.totalorder %s16, 0
      %p157 = por %p155, %p156
      %p158 = scmp.ne.s32.totalorder %s144, %s145
      %p159 = scmp.eq.s32.totalorder %s17, 3
      %p160 = por %p158, %p159
      %p162 = scmp.ne.s32.totalorder %s145, %s161
      %p163 = scmp.eq.s32.totalorder %s17, 0
      %p164 = por %p162, %p163
      %p165 = scmp.le.s32.totalorder 1, %s11
      %p166 = scmp.lt.s32.totalorder %s11, 5
      %p167 = pnand %p165, %p166
      %p168 = pneg %p167
      // Predicated region
      $region9: #{best_gnn_forward.14} parent=5 // pred_check
        _
      $region10: #{best_gnn_forward.14} parent=5 // pred_check_branch
        %170 = sbr.rel (%p167) target = $region12
      $region11: #{best_gnn_forward.14} parent=5 // pred_region
        %s171 = ssub.s32 %s11, 1
        // Predicated region
        $region13: #{best_gnn_forward.14} parent=11 // pred_check
          %p172 = pneg %p58
        $region14: #{best_gnn_forward.14} parent=11 // pred_check_branch
          %174 = sbr.rel (%p172) target = $region16
        $region15: #{best_gnn_forward.14} parent=11 // pred_region
          _
        $region16: #{best_gnn_forward.14} parent=11 // pred_fallthru
          _
        // Predicated region
        $region17: #{best_gnn_forward.14} parent=11 // pred_check
          %p175 = pneg %p79
        $region18: #{best_gnn_forward.14} parent=11 // pred_check_branch
          %177 = sbr.rel (%p175) target = $region20
        $region19: #{best_gnn_forward.14} parent=11 // pred_region
          _
        $region20: #{best_gnn_forward.14} parent=11 // pred_fallthru
          _
      $region12: #{best_gnn_forward.14} parent=5 // pred_fallthru
        _
      %p178 = scmp.lt.s32.totalorder %s11, 4
      // Predicated region
      $region21: #{best_gnn_forward.14} parent=5 // pred_check
        %p179 = pneg %p178
      $region22: #{best_gnn_forward.14} parent=5 // pred_check_branch
        %181 = sbr.rel (%p179) target = $region24
      $region23: #{best_gnn_forward.14} parent=5 // pred_region
        // Predicated region
        $region25: #{best_gnn_forward.14} parent=23 // pred_check
          %p182 = pneg %p31
        $region26: #{best_gnn_forward.14} parent=23 // pred_check_branch
          %184 = sbr.rel (%p182) target = $region28
        $region27: #{best_gnn_forward.14} parent=23 // pred_region
          %s185 = smul.u32 16, %s11
          %p186 = scmp.lt.s32.totalorder %s185, 63
          %s187 = scalar_select %p186, %s185, 63
          %s188 = smul.addr %s187, 8
          %s189 = scalar_lea.vmem %s0, %s188
          %s190 = smul.u32 16, %s11
        $region28: #{best_gnn_forward.14} parent=23 // pred_fallthru
          _
        // Predicated region
        $region29: #{best_gnn_forward.14} parent=23 // pred_check
          %p191 = pneg %p99
        $region30: #{best_gnn_forward.14} parent=23 // pred_check_branch
          %193 = sbr.rel (%p191) target = $region32
        $region31: #{best_gnn_forward.14} parent=23 // pred_region
          %s194 = sand.u32 %s89, 1
          %s195 = sand.u32 %s89, 1
          %s196 = smul.addr %s195, 256
          %s197 = scalar_lea.vmem [#allocation2], %s196
          %s198 = smul.u32 16, %s11
          %s199 = smul.addr %s198, 8
          %s200 = scalar_lea.vmem %s3, %s199
          // Predicated region
          $region33: #{best_gnn_forward.14} parent=31 // pred_check
            _
          $region34: #{best_gnn_forward.14} parent=31 // pred_check_branch
            %202 = sbr.rel (0) target = $region36
          $region35: #{best_gnn_forward.14} parent=31 // pred_region
            // Predicated region
            $region37: #{best_gnn_forward.14} parent=35 // pred_check
              _
            $region38: #{best_gnn_forward.14} parent=35 // pred_check_branch
              %204 = sbr.rel (0) target = $region40
            $region39: #{best_gnn_forward.14} parent=35 // pred_region
              // Predicated region
              $region52: #{best_gnn_forward.14} parent=39 // pred_check
                _
              $region53: #{best_gnn_forward.14} parent=39 // pred_check_branch
                %281 = sbr.rel (0) target = $region55
              $region54: #{best_gnn_forward.14} parent=39 // pred_region
                loop: start=0, step=1, limit=1
                $region56: #{best_gnn_forward.14} parent=54 // loop_pre_header
                  _
                $region57: #{best_gnn_forward.14} parent=54 // loop_header
                  %s283 = sphi 0, %s287
                  %p284 = scmp.ge.s32.totalorder %s283, 1
                  %s288 = sphi %s200, %s200
                  %s289 = sphi %s197, %s197
                $region58: #{best_gnn_forward.14} parent=54 // loop_header_branch
                  %286 = sbr.rel (%p284) target = $region62
                $region59: #{best_gnn_forward.14} parent=54 // loop_body
                  %v290 = vld [vmem:[%s288] sm:$0xff]
                  %291 = vst [vmem:[%s289] sm:$0xff] %v290
                  %v292 = vld [vmem:[%s288 + $0x8] sm:$0xff]
                  %293 = vst [vmem:[%s289 + $0x8] sm:$0xff] %v292
                  %v294 = vld [vmem:[%s288 + $0x10] sm:$0xff]
                  %295 = vst [vmem:[%s289 + $0x10] sm:$0xff] %v294
                  %v296 = vld [vmem:[%s288 + $0x18] sm:$0xff]
                  %297 = vst [vmem:[%s289 + $0x18] sm:$0xff] %v296
                  %v298 = vld [vmem:[%s288 + $0x20] sm:$0xff]
                  %299 = vst [vmem:[%s289 + $0x20] sm:$0xff] %v298
                  %v300 = vld [vmem:[%s288 + $0x28] sm:$0xff]
                  %301 = vst [vmem:[%s289 + $0x28] sm:$0xff] %v300
                  %v302 = vld [vmem:[%s288 + $0x30] sm:$0xff]
                  %303 = vst [vmem:[%s289 + $0x30] sm:$0xff] %v302
                  %v304 = vld [vmem:[%s288 + $0x38] sm:$0xff]
                  %305 = vst [vmem:[%s289 + $0x38] sm:$0xff] %v304
                  %v306 = vld [vmem:[%s288 + $0x40] sm:$0xff]
                  %307 = vst [vmem:[%s289 + $0x40] sm:$0xff] %v306
                  %v308 = vld [vmem:[%s288 + $0x48] sm:$0xff]
                  %309 = vst [vmem:[%s289 + $0x48] sm:$0xff] %v308
                  %v310 = vld [vmem:[%s288 + $0x50] sm:$0xff]
                  %311 = vst [vmem:[%s289 + $0x50] sm:$0xff] %v310
                  %v312 = vld [vmem:[%s288 + $0x58] sm:$0xff]
                  %313 = vst [vmem:[%s289 + $0x58] sm:$0xff] %v312
                  %v314 = vld [vmem:[%s288 + $0x60] sm:$0xff]
                  %315 = vst [vmem:[%s289 + $0x60] sm:$0xff] %v314
                  %v316 = vld [vmem:[%s288 + $0x68] sm:$0xff]
                  %317 = vst [vmem:[%s289 + $0x68] sm:$0xff] %v316
                  %v318 = vld [vmem:[%s288 + $0x70] sm:$0xff]
                  %319 = vst [vmem:[%s289 + $0x70] sm:$0xff] %v318
                  %v320 = vld [vmem:[%s288 + $0x78] sm:$0xff]
                  %321 = vst [vmem:[%s289 + $0x78] sm:$0xff] %v320
                  %v322 = vld [vmem:[%s288 + $0x200] sm:$0xff]
                  %323 = vst [vmem:[%s289 + $0x80] sm:$0xff] %v322
                  %v324 = vld [vmem:[%s288 + $0x208] sm:$0xff]
                  %325 = vst [vmem:[%s289 + $0x88] sm:$0xff] %v324
                  %v326 = vld [vmem:[%s288 + $0x210] sm:$0xff]
                  %327 = vst [vmem:[%s289 + $0x90] sm:$0xff] %v326
                  %v328 = vld [vmem:[%s288 + $0x218] sm:$0xff]
                  %329 = vst [vmem:[%s289 + $0x98] sm:$0xff] %v328
                  %v330 = vld [vmem:[%s288 + $0x220] sm:$0xff]
                  %331 = vst [vmem:[%s289 + $0xa0] sm:$0xff] %v330
                  %v332 = vld [vmem:[%s288 + $0x228] sm:$0xff]
                  %333 = vst [vmem:[%s289 + $0xa8] sm:$0xff] %v332
                  %v334 = vld [vmem:[%s288 + $0x230] sm:$0xff]
                  %335 = vst [vmem:[%s289 + $0xb0] sm:$0xff] %v334
                  %v336 = vld [vmem:[%s288 + $0x238] sm:$0xff]
                  %337 = vst [vmem:[%s289 + $0xb8] sm:$0xff] %v336
                  %v338 = vld [vmem:[%s288 + $0x240] sm:$0xff]
                  %339 = vst [vmem:[%s289 + $0xc0] sm:$0xff] %v338
                  %v340 = vld [vmem:[%s288 + $0x248] sm:$0xff]
                  %341 = vst [vmem:[%s289 + $0xc8] sm:$0xff] %v340
                  %v342 = vld [vmem:[%s288 + $0x250] sm:$0xff]
                  %343 = vst [vmem:[%s289 + $0xd0] sm:$0xff] %v342
                  %v344 = vld [vmem:[%s288 + $0x258] sm:$0xff]
                  %345 = vst [vmem:[%s289 + $0xd8] sm:$0xff] %v344
                  %v346 = vld [vmem:[%s288 + $0x260] sm:$0xff]
                  %347 = vst [vmem:[%s289 + $0xe0] sm:$0xff] %v346
                  %v348 = vld [vmem:[%s288 + $0x268] sm:$0xff]
                  %349 = vst [vmem:[%s289 + $0xe8] sm:$0xff] %v348
                  %v350 = vld [vmem:[%s288 + $0x270] sm:$0xff]
                  %351 = vst [vmem:[%s289 + $0xf0] sm:$0xff] %v350
                  %v352 = vld [vmem:[%s288 + $0x278] sm:$0xff]
                  %353 = vst [vmem:[%s289 + $0xf8] sm:$0xff] %v352
                $region60: #{best_gnn_forward.14} parent=54 // loop_footer
                  %s287 = sadd.s32 1, %s283
                $region61: #{best_gnn_forward.14} parent=54 // loop_footer_branch
                  %282 = sbr.rel target = $region57
                $region62: #{best_gnn_forward.14} parent=54 // loop_exit
                  _
              $region55: #{best_gnn_forward.14} parent=39 // pred_fallthru
                _
              // Predicated region
              $region63: #{best_gnn_forward.14} parent=39 // pred_check
                _
              $region64: #{best_gnn_forward.14} parent=39 // pred_check_branch
                %355 = sbr.rel target = $region66
              $region65: #{best_gnn_forward.14} parent=39 // pred_region
                _
              $region66: #{best_gnn_forward.14} parent=39 // pred_fallthru
                _
            $region40: #{best_gnn_forward.14} parent=35 // pred_fallthru
              _
            // Predicated region
            $region41: #{best_gnn_forward.14} parent=35 // pred_check
              _
            $region42: #{best_gnn_forward.14} parent=35 // pred_check_branch
              %206 = sbr.rel target = $region44
            $region43: #{best_gnn_forward.14} parent=35 // pred_region
              loop: start=0, step=1, limit=1
              $region45: #{best_gnn_forward.14} parent=43 // loop_pre_header
                _
              $region46: #{best_gnn_forward.14} parent=43 // loop_header
                %s209 = sphi 0, %s213
                %p210 = scmp.ge.s32.totalorder %s209, 1
                %s214 = sphi %s200, %s200
                %s215 = sphi %s197, %s197
              $region47: #{best_gnn_forward.14} parent=43 // loop_header_branch
                %212 = sbr.rel (%p210) target = $region51
              $region48: #{best_gnn_forward.14} parent=43 // loop_body
                %v216 = vld [vmem:[%s214] sm:$0xff]
                %217 = vst [vmem:[%s215] sm:$0xff] %v216
                %v218 = vld [vmem:[%s214 + $0x8] sm:$0xff]
                %219 = vst [vmem:[%s215 + $0x8] sm:$0xff] %v218
                %v220 = vld [vmem:[%s214 + $0x10] sm:$0xff]
                %221 = vst [vmem:[%s215 + $0x10] sm:$0xff] %v220
                %v222 = vld [vmem:[%s214 + $0x18] sm:$0xff]
                %223 = vst [vmem:[%s215 + $0x18] sm:$0xff] %v222
                %v224 = vld [vmem:[%s214 + $0x20] sm:$0xff]
                %225 = vst [vmem:[%s215 + $0x20] sm:$0xff] %v224
                %v226 = vld [vmem:[%s214 + $0x28] sm:$0xff]
                %227 = vst [vmem:[%s215 + $0x28] sm:$0xff] %v226
                %v228 = vld [vmem:[%s214 + $0x30] sm:$0xff]
                %229 = vst [vmem:[%s215 + $0x30] sm:$0xff] %v228
                %v230 = vld [vmem:[%s214 + $0x38] sm:$0xff]
                %231 = vst [vmem:[%s215 + $0x38] sm:$0xff] %v230
                %v232 = vld [vmem:[%s214 + $0x40] sm:$0xff]
                %233 = vst [vmem:[%s215 + $0x40] sm:$0xff] %v232
                %v234 = vld [vmem:[%s214 + $0x48] sm:$0xff]
                %235 = vst [vmem:[%s215 + $0x48] sm:$0xff] %v234
                %v236 = vld [vmem:[%s214 + $0x50] sm:$0xff]
                %237 = vst [vmem:[%s215 + $0x50] sm:$0xff] %v236
                %v238 = vld [vmem:[%s214 + $0x58] sm:$0xff]
                %239 = vst [vmem:[%s215 + $0x58] sm:$0xff] %v238
                %v240 = vld [vmem:[%s214 + $0x60] sm:$0xff]
                %241 = vst [vmem:[%s215 + $0x60] sm:$0xff] %v240
                %v242 = vld [vmem:[%s214 + $0x68] sm:$0xff]
                %243 = vst [vmem:[%s215 + $0x68] sm:$0xff] %v242
                %v244 = vld [vmem:[%s214 + $0x70] sm:$0xff]
                %245 = vst [vmem:[%s215 + $0x70] sm:$0xff] %v244
                %v246 = vld [vmem:[%s214 + $0x78] sm:$0xff]
                %247 = vst [vmem:[%s215 + $0x78] sm:$0xff] %v246
                %v248 = vld [vmem:[%s214 + $0x200] sm:$0xff]
                %249 = vst [vmem:[%s215 + $0x80] sm:$0xff] %v248
                %v250 = vld [vmem:[%s214 + $0x208] sm:$0xff]
                %251 = vst [vmem:[%s215 + $0x88] sm:$0xff] %v250
                %v252 = vld [vmem:[%s214 + $0x210] sm:$0xff]
                %253 = vst [vmem:[%s215 + $0x90] sm:$0xff] %v252
                %v254 = vld [vmem:[%s214 + $0x218] sm:$0xff]
                %255 = vst [vmem:[%s215 + $0x98] sm:$0xff] %v254
                %v256 = vld [vmem:[%s214 + $0x220] sm:$0xff]
                %257 = vst [vmem:[%s215 + $0xa0] sm:$0xff] %v256
                %v258 = vld [vmem:[%s214 + $0x228] sm:$0xff]
                %259 = vst [vmem:[%s215 + $0xa8] sm:$0xff] %v258
                %v260 = vld [vmem:[%s214 + $0x230] sm:$0xff]
                %261 = vst [vmem:[%s215 + $0xb0] sm:$0xff] %v260
                %v262 = vld [vmem:[%s214 + $0x238] sm:$0xff]
                %263 = vst [vmem:[%s215 + $0xb8] sm:$0xff] %v262
                %v264 = vld [vmem:[%s214 + $0x240] sm:$0xff]
                %265 = vst [vmem:[%s215 + $0xc0] sm:$0xff] %v264
                %v266 = vld [vmem:[%s214 + $0x248] sm:$0xff]
                %267 = vst [vmem:[%s215 + $0xc8] sm:$0xff] %v266
                %v268 = vld [vmem:[%s214 + $0x250] sm:$0xff]
                %269 = vst [vmem:[%s215 + $0xd0] sm:$0xff] %v268
                %v270 = vld [vmem:[%s214 + $0x258] sm:$0xff]
                %271 = vst [vmem:[%s215 + $0xd8] sm:$0xff] %v270
                %v272 = vld [vmem:[%s214 + $0x260] sm:$0xff]
                %273 = vst [vmem:[%s215 + $0xe0] sm:$0xff] %v272
                %v274 = vld [vmem:[%s214 + $0x268] sm:$0xff]
                %275 = vst [vmem:[%s215 + $0xe8] sm:$0xff] %v274
                %v276 = vld [vmem:[%s214 + $0x270] sm:$0xff]
                %277 = vst [vmem:[%s215 + $0xf0] sm:$0xff] %v276
                %v278 = vld [vmem:[%s214 + $0x278] sm:$0xff]
                %279 = vst [vmem:[%s215 + $0xf8] sm:$0xff] %v278
              $region49: #{best_gnn_forward.14} parent=43 // loop_footer
                %s213 = sadd.s32 1, %s209
              $region50: #{best_gnn_forward.14} parent=43 // loop_footer_branch
                %208 = sbr.rel target = $region46
              $region51: #{best_gnn_forward.14} parent=43 // loop_exit
                _
            $region44: #{best_gnn_forward.14} parent=35 // pred_fallthru
              _
          $region36: #{best_gnn_forward.14} parent=31 // pred_fallthru
            _
          %356 = vnop
        $region32: #{best_gnn_forward.14} parent=23 // pred_fallthru
          _
        // Predicated region
        $region67: #{best_gnn_forward.14} parent=23 // pred_check
          %p357 = pneg %p125
        $region68: #{best_gnn_forward.14} parent=23 // pred_check_branch
          %359 = sbr.rel (%p357) target = $region70
        $region69: #{best_gnn_forward.14} parent=23 // pred_region
          %s360 = sand.u32 %s115, 1
          %s361 = sand.u32 %s115, 1
          %s362 = smul.addr %s361, 256
          %s363 = scalar_lea.vmem [#allocation3], %s362
          %s364 = smul.u32 16, %s11
          %s365 = smul.addr %s364, 8
          %s366 = scalar_lea.vmem %s4, %s365
          // Predicated region
          $region71: #{best_gnn_forward.14} parent=69 // pred_check
            _
          $region72: #{best_gnn_forward.14} parent=69 // pred_check_branch
            %368 = sbr.rel (0) target = $region74
          $region73: #{best_gnn_forward.14} parent=69 // pred_region
            // Predicated region
            $region75: #{best_gnn_forward.14} parent=73 // pred_check
              _
            $region76: #{best_gnn_forward.14} parent=73 // pred_check_branch
              %370 = sbr.rel (0) target = $region78
            $region77: #{best_gnn_forward.14} parent=73 // pred_region
              // Predicated region
              $region90: #{best_gnn_forward.14} parent=77 // pred_check
                _
              $region91: #{best_gnn_forward.14} parent=77 // pred_check_branch
                %447 = sbr.rel (0) target = $region93
              $region92: #{best_gnn_forward.14} parent=77 // pred_region
                loop: start=0, step=1, limit=1
                $region94: #{best_gnn_forward.14} parent=92 // loop_pre_header
                  _
                $region95: #{best_gnn_forward.14} parent=92 // loop_header
                  %s449 = sphi 0, %s453
                  %p450 = scmp.ge.s32.totalorder %s449, 1
                  %s454 = sphi %s366, %s366
                  %s455 = sphi %s363, %s363
                $region96: #{best_gnn_forward.14} parent=92 // loop_header_branch
                  %452 = sbr.rel (%p450) target = $region100
                $region97: #{best_gnn_forward.14} parent=92 // loop_body
                  %v456 = vld [vmem:[%s454] sm:$0xff]
                  %457 = vst [vmem:[%s455] sm:$0xff] %v456
                  %v458 = vld [vmem:[%s454 + $0x8] sm:$0xff]
                  %459 = vst [vmem:[%s455 + $0x8] sm:$0xff] %v458
                  %v460 = vld [vmem:[%s454 + $0x10] sm:$0xff]
                  %461 = vst [vmem:[%s455 + $0x10] sm:$0xff] %v460
                  %v462 = vld [vmem:[%s454 + $0x18] sm:$0xff]
                  %463 = vst [vmem:[%s455 + $0x18] sm:$0xff] %v462
                  %v464 = vld [vmem:[%s454 + $0x20] sm:$0xff]
                  %465 = vst [vmem:[%s455 + $0x20] sm:$0xff] %v464
                  %v466 = vld [vmem:[%s454 + $0x28] sm:$0xff]
                  %467 = vst [vmem:[%s455 + $0x28] sm:$0xff] %v466
                  %v468 = vld [vmem:[%s454 + $0x30] sm:$0xff]
                  %469 = vst [vmem:[%s455 + $0x30] sm:$0xff] %v468
                  %v470 = vld [vmem:[%s454 + $0x38] sm:$0xff]
                  %471 = vst [vmem:[%s455 + $0x38] sm:$0xff] %v470
                  %v472 = vld [vmem:[%s454 + $0x40] sm:$0xff]
                  %473 = vst [vmem:[%s455 + $0x40] sm:$0xff] %v472
                  %v474 = vld [vmem:[%s454 + $0x48] sm:$0xff]
                  %475 = vst [vmem:[%s455 + $0x48] sm:$0xff] %v474
                  %v476 = vld [vmem:[%s454 + $0x50] sm:$0xff]
                  %477 = vst [vmem:[%s455 + $0x50] sm:$0xff] %v476
                  %v478 = vld [vmem:[%s454 + $0x58] sm:$0xff]
                  %479 = vst [vmem:[%s455 + $0x58] sm:$0xff] %v478
                  %v480 = vld [vmem:[%s454 + $0x60] sm:$0xff]
                  %481 = vst [vmem:[%s455 + $0x60] sm:$0xff] %v480
                  %v482 = vld [vmem:[%s454 + $0x68] sm:$0xff]
                  %483 = vst [vmem:[%s455 + $0x68] sm:$0xff] %v482
                  %v484 = vld [vmem:[%s454 + $0x70] sm:$0xff]
                  %485 = vst [vmem:[%s455 + $0x70] sm:$0xff] %v484
                  %v486 = vld [vmem:[%s454 + $0x78] sm:$0xff]
                  %487 = vst [vmem:[%s455 + $0x78] sm:$0xff] %v486
                  %v488 = vld [vmem:[%s454 + $0x200] sm:$0xff]
                  %489 = vst [vmem:[%s455 + $0x80] sm:$0xff] %v488
                  %v490 = vld [vmem:[%s454 + $0x208] sm:$0xff]
                  %491 = vst [vmem:[%s455 + $0x88] sm:$0xff] %v490
                  %v492 = vld [vmem:[%s454 + $0x210] sm:$0xff]
                  %493 = vst [vmem:[%s455 + $0x90] sm:$0xff] %v492
                  %v494 = vld [vmem:[%s454 + $0x218] sm:$0xff]
                  %495 = vst [vmem:[%s455 + $0x98] sm:$0xff] %v494
                  %v496 = vld [vmem:[%s454 + $0x220] sm:$0xff]
                  %497 = vst [vmem:[%s455 + $0xa0] sm:$0xff] %v496
                  %v498 = vld [vmem:[%s454 + $0x228] sm:$0xff]
                  %499 = vst [vmem:[%s455 + $0xa8] sm:$0xff] %v498
                  %v500 = vld [vmem:[%s454 + $0x230] sm:$0xff]
                  %501 = vst [vmem:[%s455 + $0xb0] sm:$0xff] %v500
                  %v502 = vld [vmem:[%s454 + $0x238] sm:$0xff]
                  %503 = vst [vmem:[%s455 + $0xb8] sm:$0xff] %v502
                  %v504 = vld [vmem:[%s454 + $0x240] sm:$0xff]
                  %505 = vst [vmem:[%s455 + $0xc0] sm:$0xff] %v504
                  %v506 = vld [vmem:[%s454 + $0x248] sm:$0xff]
                  %507 = vst [vmem:[%s455 + $0xc8] sm:$0xff] %v506
                  %v508 = vld [vmem:[%s454 + $0x250] sm:$0xff]
                  %509 = vst [vmem:[%s455 + $0xd0] sm:$0xff] %v508
                  %v510 = vld [vmem:[%s454 + $0x258] sm:$0xff]
                  %511 = vst [vmem:[%s455 + $0xd8] sm:$0xff] %v510
                  %v512 = vld [vmem:[%s454 + $0x260] sm:$0xff]
                  %513 = vst [vmem:[%s455 + $0xe0] sm:$0xff] %v512
                  %v514 = vld [vmem:[%s454 + $0x268] sm:$0xff]
                  %515 = vst [vmem:[%s455 + $0xe8] sm:$0xff] %v514
                  %v516 = vld [vmem:[%s454 + $0x270] sm:$0xff]
                  %517 = vst [vmem:[%s455 + $0xf0] sm:$0xff] %v516
                  %v518 = vld [vmem:[%s454 + $0x278] sm:$0xff]
                  %519 = vst [vmem:[%s455 + $0xf8] sm:$0xff] %v518
                $region98: #{best_gnn_forward.14} parent=92 // loop_footer
                  %s453 = sadd.s32 1, %s449
                $region99: #{best_gnn_forward.14} parent=92 // loop_footer_branch
                  %448 = sbr.rel target = $region95
                $region100: #{best_gnn_forward.14} parent=92 // loop_exit
                  _
              $region93: #{best_gnn_forward.14} parent=77 // pred_fallthru
                _
              // Predicated region
              $region101: #{best_gnn_forward.14} parent=77 // pred_check
                _
              $region102: #{best_gnn_forward.14} parent=77 // pred_check_branch
                %521 = sbr.rel target = $region104
              $region103: #{best_gnn_forward.14} parent=77 // pred_region
                _
              $region104: #{best_gnn_forward.14} parent=77 // pred_fallthru
                _
            $region78: #{best_gnn_forward.14} parent=73 // pred_fallthru
              _
            // Predicated region
            $region79: #{best_gnn_forward.14} parent=73 // pred_check
              _
            $region80: #{best_gnn_forward.14} parent=73 // pred_check_branch
              %372 = sbr.rel target = $region82
            $region81: #{best_gnn_forward.14} parent=73 // pred_region
              loop: start=0, step=1, limit=1
              $region83: #{best_gnn_forward.14} parent=81 // loop_pre_header
                _
              $region84: #{best_gnn_forward.14} parent=81 // loop_header
                %s375 = sphi 0, %s379
                %p376 = scmp.ge.s32.totalorder %s375, 1
                %s380 = sphi %s366, %s366
                %s381 = sphi %s363, %s363
              $region85: #{best_gnn_forward.14} parent=81 // loop_header_branch
                %378 = sbr.rel (%p376) target = $region89
              $region86: #{best_gnn_forward.14} parent=81 // loop_body
                %v382 = vld [vmem:[%s380] sm:$0xff]
                %383 = vst [vmem:[%s381] sm:$0xff] %v382
                %v384 = vld [vmem:[%s380 + $0x8] sm:$0xff]
                %385 = vst [vmem:[%s381 + $0x8] sm:$0xff] %v384
                %v386 = vld [vmem:[%s380 + $0x10] sm:$0xff]
                %387 = vst [vmem:[%s381 + $0x10] sm:$0xff] %v386
                %v388 = vld [vmem:[%s380 + $0x18] sm:$0xff]
                %389 = vst [vmem:[%s381 + $0x18] sm:$0xff] %v388
                %v390 = vld [vmem:[%s380 + $0x20] sm:$0xff]
                %391 = vst [vmem:[%s381 + $0x20] sm:$0xff] %v390
                %v392 = vld [vmem:[%s380 + $0x28] sm:$0xff]
                %393 = vst [vmem:[%s381 + $0x28] sm:$0xff] %v392
                %v394 = vld [vmem:[%s380 + $0x30] sm:$0xff]
                %395 = vst [vmem:[%s381 + $0x30] sm:$0xff] %v394
                %v396 = vld [vmem:[%s380 + $0x38] sm:$0xff]
                %397 = vst [vmem:[%s381 + $0x38] sm:$0xff] %v396
                %v398 = vld [vmem:[%s380 + $0x40] sm:$0xff]
                %399 = vst [vmem:[%s381 + $0x40] sm:$0xff] %v398
                %v400 = vld [vmem:[%s380 + $0x48] sm:$0xff]
                %401 = vst [vmem:[%s381 + $0x48] sm:$0xff] %v400
                %v402 = vld [vmem:[%s380 + $0x50] sm:$0xff]
                %403 = vst [vmem:[%s381 + $0x50] sm:$0xff] %v402
                %v404 = vld [vmem:[%s380 + $0x58] sm:$0xff]
                %405 = vst [vmem:[%s381 + $0x58] sm:$0xff] %v404
                %v406 = vld [vmem:[%s380 + $0x60] sm:$0xff]
                %407 = vst [vmem:[%s381 + $0x60] sm:$0xff] %v406
                %v408 = vld [vmem:[%s380 + $0x68] sm:$0xff]
                %409 = vst [vmem:[%s381 + $0x68] sm:$0xff] %v408
                %v410 = vld [vmem:[%s380 + $0x70] sm:$0xff]
                %411 = vst [vmem:[%s381 + $0x70] sm:$0xff] %v410
                %v412 = vld [vmem:[%s380 + $0x78] sm:$0xff]
                %413 = vst [vmem:[%s381 + $0x78] sm:$0xff] %v412
                %v414 = vld [vmem:[%s380 + $0x200] sm:$0xff]
                %415 = vst [vmem:[%s381 + $0x80] sm:$0xff] %v414
                %v416 = vld [vmem:[%s380 + $0x208] sm:$0xff]
                %417 = vst [vmem:[%s381 + $0x88] sm:$0xff] %v416
                %v418 = vld [vmem:[%s380 + $0x210] sm:$0xff]
                %419 = vst [vmem:[%s381 + $0x90] sm:$0xff] %v418
                %v420 = vld [vmem:[%s380 + $0x218] sm:$0xff]
                %421 = vst [vmem:[%s381 + $0x98] sm:$0xff] %v420
                %v422 = vld [vmem:[%s380 + $0x220] sm:$0xff]
                %423 = vst [vmem:[%s381 + $0xa0] sm:$0xff] %v422
                %v424 = vld [vmem:[%s380 + $0x228] sm:$0xff]
                %425 = vst [vmem:[%s381 + $0xa8] sm:$0xff] %v424
                %v426 = vld [vmem:[%s380 + $0x230] sm:$0xff]
                %427 = vst [vmem:[%s381 + $0xb0] sm:$0xff] %v426
                %v428 = vld [vmem:[%s380 + $0x238] sm:$0xff]
                %429 = vst [vmem:[%s381 + $0xb8] sm:$0xff] %v428
                %v430 = vld [vmem:[%s380 + $0x240] sm:$0xff]
                %431 = vst [vmem:[%s381 + $0xc0] sm:$0xff] %v430
                %v432 = vld [vmem:[%s380 + $0x248] sm:$0xff]
                %433 = vst [vmem:[%s381 + $0xc8] sm:$0xff] %v432
                %v434 = vld [vmem:[%s380 + $0x250] sm:$0xff]
                %435 = vst [vmem:[%s381 + $0xd0] sm:$0xff] %v434
                %v436 = vld [vmem:[%s380 + $0x258] sm:$0xff]
                %437 = vst [vmem:[%s381 + $0xd8] sm:$0xff] %v436
                %v438 = vld [vmem:[%s380 + $0x260] sm:$0xff]
                %439 = vst [vmem:[%s381 + $0xe0] sm:$0xff] %v438
                %v440 = vld [vmem:[%s380 + $0x268] sm:$0xff]
                %441 = vst [vmem:[%s381 + $0xe8] sm:$0xff] %v440
                %v442 = vld [vmem:[%s380 + $0x270] sm:$0xff]
                %443 = vst [vmem:[%s381 + $0xf0] sm:$0xff] %v442
                %v444 = vld [vmem:[%s380 + $0x278] sm:$0xff]
                %445 = vst [vmem:[%s381 + $0xf8] sm:$0xff] %v444
              $region87: #{best_gnn_forward.14} parent=81 // loop_footer
                %s379 = sadd.s32 1, %s375
              $region88: #{best_gnn_forward.14} parent=81 // loop_footer_branch
                %374 = sbr.rel target = $region84
              $region89: #{best_gnn_forward.14} parent=81 // loop_exit
                _
            $region82: #{best_gnn_forward.14} parent=73 // pred_fallthru
              _
          $region74: #{best_gnn_forward.14} parent=69 // pred_fallthru
            _
          %522 = vnop
        $region70: #{best_gnn_forward.14} parent=23 // pred_fallthru
          _
      $region24: #{best_gnn_forward.14} parent=5 // pred_fallthru
        _
      %p523 = scmp.le.s32.totalorder 1, %s11
      %p524 = scmp.lt.s32.totalorder %s11, 5
      %p525 = pnand %p523, %p524
      %p526 = pneg %p525
      // Predicated region
      $region105: #{best_gnn_forward.14} parent=5 // pred_check
        _
      $region106: #{best_gnn_forward.14} parent=5 // pred_check_branch
        %528 = sbr.rel (%p525) target = $region108
      $region107: #{best_gnn_forward.14} parent=5 // pred_region
        %s529 = ssub.s32 %s11, 1
        %s530 = sand.u32 %s92, 1
        %s531 = sand.u32 %s92, 1
        %s532 = smul.addr %s531, 256
        %s533 = scalar_lea.vmem [#allocation2], %s532
        // Predicated region
        $region109: #{best_gnn_forward.14} parent=107 // pred_check
          %p534 = pneg %p105
        $region110: #{best_gnn_forward.14} parent=107 // pred_check_branch
          %536 = sbr.rel (%p534) target = $region112
        $region111: #{best_gnn_forward.14} parent=107 // pred_region
          _
        $region112: #{best_gnn_forward.14} parent=107 // pred_fallthru
          _
        %s537 = sand.u32 %s118, 1
        %s538 = sand.u32 %s118, 1
        %s539 = smul.addr %s538, 256
        %s540 = scalar_lea.vmem [#allocation3], %s539
        // Predicated region
        $region113: #{best_gnn_forward.14} parent=107 // pred_check
          %p541 = pneg %p131
        $region114: #{best_gnn_forward.14} parent=107 // pred_check_branch
          %543 = sbr.rel (%p541) target = $region116
        $region115: #{best_gnn_forward.14} parent=107 // pred_region
          _
        $region116: #{best_gnn_forward.14} parent=107 // pred_fallthru
          _
        %s544 = smul.u32 16, %s16
        %p545 = scmp.lt.s32.totalorder %s544, 63
        %s546 = scalar_select %p545, %s544, 63
        %s547 = smul.addr %s546, 8
        %s548 = scalar_lea.vmem %s0, %s547
        %p549 = pneg %p37
        %p550 = pneg %p34
        %p551 = pneg %p58
        %p552 = pneg %p55
        %p553 = pneg %p79
        %p554 = pneg %p76
        %s555 = sand.u32 %s92, 1
        %s556 = sand.u32 %s92, 1
        %s557 = smul.addr %s556, 256
        %s558 = scalar_lea.vmem [#allocation2], %s557
        %p559 = pneg %p105
        %p560 = pneg %p102
        %s561 = sand.u32 %s118, 1
        %s562 = sand.u32 %s118, 1
        %s563 = smul.addr %s562, 256
        %s564 = scalar_lea.vmem [#allocation3], %s563
        %p565 = pneg %p131
        %p566 = pneg %p128
        %p567 = pneg %p157
        %p568 = pneg %p154
        %s569 = smul.u32 16, %s16
        %p570 = scmp.lt.s32.totalorder %s569, 63
        %s571 = scalar_select %p570, %s569, 63
        %s572 = smul.addr %s571, 8
        %s573 = scalar_lea.vmem %s5, %s572
        %s574 = smul.u32 16, %s16
        %p575 = scmp.lt.s32.totalorder %s574, 63
        %s576 = scalar_select %p575, %s574, 63
        %s577 = smul.addr %s576, 8
        %s578 = scalar_lea.vmem %s0, %s577
        %s579 = smul.u32 16, %s16
        %s580 = smul.u32 16, %s16
        %s581 = smul.u32 16, %s16
        %s582 = smul.u32 16, %s16
        %p583 = scmp.lt.s32.totalorder %s582, 63
        %s584 = scalar_select %p583, %s582, 63
        %s585 = smul.addr %s584, 8
        %s586 = scalar_lea.vmem %s5, %s585
        %s587 = smul.u32 16, %s16
        %v588 = vld [vmem:[%s578] sm:$0xff]
        %v589 = vld [vmem:[%s578 + $0x8] sm:$0xff]
        %v590 = vld [vmem:[%s578 + $0x10] sm:$0xff]
        %v591 = vld [vmem:[%s578 + $0x18] sm:$0xff]
        %v592 = vld [vmem:[%s578 + $0x20] sm:$0xff]
        %v593 = vld [vmem:[%s578 + $0x28] sm:$0xff]
        %v594 = vld [vmem:[%s578 + $0x30] sm:$0xff]
        %v595 = vld [vmem:[%s578 + $0x38] sm:$0xff]
        %v596 = vld [vmem:[%s578 + $0x40] sm:$0xff]
        %v597 = vld [vmem:[%s578 + $0x48] sm:$0xff]
        %v598 = vld [vmem:[%s578 + $0x50] sm:$0xff]
        %v599 = vld [vmem:[%s578 + $0x58] sm:$0xff]
        %v600 = vld [vmem:[%s578 + $0x60] sm:$0xff]
        %v601 = vld [vmem:[%s578 + $0x68] sm:$0xff]
        %v602 = vld [vmem:[%s578 + $0x70] sm:$0xff]
        %v603 = vld [vmem:[%s578 + $0x78] sm:$0xff]
        %v604 = vld [vmem:[%s1] sm:$0xff]
        %v605 = vld [vmem:[%s1 + $0x8] sm:$0xff]
        %v606 = vld [vmem:[%s1 + $0x10] sm:$0xff]
        %v607 = vld [vmem:[%s1 + $0x18] sm:$0xff]
        %v608 = vld [vmem:[%s1 + $0x20] sm:$0xff]
        %v609 = vld [vmem:[%s1 + $0x28] sm:$0xff]
        %v610 = vld [vmem:[%s1 + $0x30] sm:$0xff]
        %v611 = vld [vmem:[%s1 + $0x38] sm:$0xff]
        %v612 = vld [vmem:[%s1 + $0x40] sm:$0xff]
        %v613 = vld [vmem:[%s1 + $0x48] sm:$0xff]
        %v614 = vld [vmem:[%s1 + $0x50] sm:$0xff]
        %v615 = vld [vmem:[%s1 + $0x58] sm:$0xff]
        %v616 = vld [vmem:[%s1 + $0x60] sm:$0xff]
        %v617 = vld [vmem:[%s1 + $0x68] sm:$0xff]
        %v618 = vld [vmem:[%s1 + $0x70] sm:$0xff]
        %v619 = vld [vmem:[%s1 + $0x78] sm:$0xff]
        %v620 = vld [vmem:[%s2] sm:$0x1]
        %v622 = vlaneseq
        %v623 = vshrl.u32 %v622, 7
        %v624 = vsub.s32 0, %v623
        %v625 = vrot.slane %v620, %v624
        %627 = vmatprep.subr.mxu0 0.0
        %628 = vmatpush1.msra.mxu0 %v604
        %629 = vmatprep.subr.mxu0 0.0
        %630 = vmatpush1.msra.mxu0 %v605
        %631 = vmatprep.subr.mxu0 0.0
        %632 = vmatpush1.msra.mxu0 %v606
        %633 = vmatprep.subr.mxu0 0.0
        %634 = vmatpush1.msra.mxu0 %v607
        %635 = vmatprep.subr.mxu0 0.0
        %636 = vmatpush1.msra.mxu0 %v608
        %637 = vmatprep.subr.mxu0 0.0
        %638 = vmatpush1.msra.mxu0 %v609
        %639 = vmatprep.subr.mxu0 0.0
        %640 = vmatpush1.msra.mxu0 %v610
        %641 = vmatprep.subr.mxu0 0.0
        %642 = vmatpush1.msra.mxu0 %v611
        %643 = vmatprep.subr.mxu0 0.0
        %644 = vmatpush1.msra.mxu0 %v612
        %645 = vmatprep.subr.mxu0 0.0
        %646 = vmatpush1.msra.mxu0 %v613
        %647 = vmatprep.subr.mxu0 0.0
        %648 = vmatpush1.msra.mxu0 %v614
        %649 = vmatprep.subr.mxu0 0.0
        %650 = vmatpush1.msra.mxu0 %v615
        %651 = vmatprep.subr.mxu0 0.0
        %652 = vmatpush1.msra.mxu0 %v616
        %653 = vmatprep.subr.mxu0 0.0
        %654 = vmatpush1.msra.mxu0 %v617
        %655 = vmatprep.subr.mxu0 0.0
        %656 = vmatpush1.msra.mxu0 %v618
        %657 = vmatprep.subr.mxu0 0.0
        %658 = vmatpush1.msra.mxu0 %v619
        %659 = vmatprep.subr.mxu0 0.0
        %660 = vmatpush1.msra.mxu0 0.0
        %661 = vmatprep.subr.mxu0 0.0
        %662 = vmatpush1.msra.mxu0 0.0
        %663 = vmatprep.subr.mxu0 0.0
        %664 = vmatpush1.msra.mxu0 0.0
        %665 = vmatprep.subr.mxu0 0.0
        %666 = vmatpush1.msra.mxu0 0.0
        %667 = vmatprep.subr.mxu0 0.0
        %668 = vmatpush1.msra.mxu0 0.0
        %669 = vmatprep.subr.mxu0 0.0
        %670 = vmatpush1.msra.mxu0 0.0
        %671 = vmatprep.subr.mxu0 0.0
        %672 = vmatpush1.msra.mxu0 0.0
        %673 = vmatprep.subr.mxu0 0.0
        %674 = vmatpush1.msra.mxu0 0.0
        %675 = vmatprep.subr.mxu0 0.0
        %676 = vmatpush1.msra.mxu0 0.0
        %677 = vmatprep.subr.mxu0 0.0
        %678 = vmatpush1.msra.mxu0 0.0
        %679 = vmatprep.subr.mxu0 0.0
        %680 = vmatpush1.msra.mxu0 0.0
        %681 = vmatprep.subr.mxu0 0.0
        %682 = vmatpush1.msra.mxu0 0.0
        %683 = vmatprep.subr.mxu0 0.0
        %684 = vmatpush1.msra.mxu0 0.0
        %685 = vmatprep.subr.mxu0 0.0
        %686 = vmatpush1.msra.mxu0 0.0
        %687 = vmatprep.subr.mxu0 0.0
        %688 = vmatpush1.msra.mxu0 0.0
        %689 = vmatprep.subr.mxu0 0.0
        %690 = vmatpush1.msra.mxu0 0.0
        %691 = vmatprep.mubr.f32.mxu0 0.0
        %692 = vmatmul.mubr.f32.gmra.mrb[0].mxu0 %v588
        %v693 = vpop.f32.mrb[0].mxu0
        %v694 = vadd.f32 %v625, %v693
        %v695 = vpop.f32.mrb[0].mxu0
        %696 = vmatprep.mubr.f32.mxu0 0.0
        %697 = vmatmul.mubr.f32.gmra.mrb[0].mxu0 %v589
        %v698 = vpop.f32.mrb[0].mxu0
        %v699 = vadd.f32 %v625, %v698
        %v700 = vpop.f32.mrb[0].mxu0
        %701 = vmatprep.mubr.f32.mxu0 0.0
        %702 = vmatmul.mubr.f32.gmra.mrb[0].mxu0 %v590
        %v703 = vpop.f32.mrb[0].mxu0
        %v704 = vadd.f32 %v625, %v703
        %v705 = vpop.f32.mrb[0].mxu0
        %706 = vmatprep.mubr.f32.mxu0 0.0
        %707 = vmatmul.mubr.f32.gmra.mrb[0].mxu0 %v591
        %v708 = vpop.f32.mrb[0].mxu0
        %v709 = vadd.f32 %v625, %v708
        %v710 = vpop.f32.mrb[0].mxu0
        %711 = vmatprep.mubr.f32.mxu0 0.0
        %712 = vmatmul.mubr.f32.gmra.mrb[0].mxu0 %v592
        %v713 = vpop.f32.mrb[0].mxu0
        %v714 = vadd.f32 %v625, %v713
        %v715 = vpop.f32.mrb[0].mxu0
        %716 = vmatprep.mubr.f32.mxu0 0.0
        %717 = vmatmul.mubr.f32.gmra.mrb[0].mxu0 %v593
        %v718 = vpop.f32.mrb[0].mxu0
        %v719 = vadd.f32 %v625, %v718
        %v720 = vpop.f32.mrb[0].mxu0
        %721 = vmatprep.mubr.f32.mxu0 0.0
        %722 = vmatmul.mubr.f32.gmra.mrb[0].mxu0 %v594
        %v723 = vpop.f32.mrb[0].mxu0
        %v724 = vadd.f32 %v625, %v723
        %v725 = vpop.f32.mrb[0].mxu0
        %726 = vmatprep.mubr.f32.mxu0 0.0
        %727 = vmatmul.mubr.f32.gmra.mrb[0].mxu0 %v595
        %v728 = vpop.f32.mrb[0].mxu0
        %v729 = vadd.f32 %v625, %v728
        %v730 = vpop.f32.mrb[0].mxu0
        %731 = vmatprep.mubr.f32.mxu0 0.0
        %732 = vmatmul.mubr.f32.gmra.mrb[0].mxu0 %v596
        %v733 = vpop.f32.mrb[0].mxu0
        %v734 = vadd.f32 %v625, %v733
        %v735 = vpop.f32.mrb[0].mxu0
        %736 = vmatprep.mubr.f32.mxu0 0.0
        %737 = vmatmul.mubr.f32.gmra.mrb[0].mxu0 %v597
        %v738 = vpop.f32.mrb[0].mxu0
        %v739 = vadd.f32 %v625, %v738
        %v740 = vpop.f32.mrb[0].mxu0
        %741 = vmatprep.mubr.f32.mxu0 0.0
        %742 = vmatmul.mubr.f32.gmra.mrb[0].mxu0 %v598
        %v743 = vpop.f32.mrb[0].mxu0
        %v744 = vadd.f32 %v625, %v743
        %v745 = vpop.f32.mrb[0].mxu0
        %746 = vmatprep.mubr.f32.mxu0 0.0
        %747 = vmatmul.mubr.f32.gmra.mrb[0].mxu0 %v599
        %v748 = vpop.f32.mrb[0].mxu0
        %v749 = vadd.f32 %v625, %v748
        %v750 = vpop.f32.mrb[0].mxu0
        %751 = vmatprep.mubr.f32.mxu0 0.0
        %752 = vmatmul.mubr.f32.gmra.mrb[0].mxu0 %v600
        %v753 = vpop.f32.mrb[0].mxu0
        %v754 = vadd.f32 %v625, %v753
        %v755 = vpop.f32.mrb[0].mxu0
        %756 = vmatprep.mubr.f32.mxu0 0.0
        %757 = vmatmul.mubr.f32.gmra.mrb[0].mxu0 %v601
        %v758 = vpop.f32.mrb[0].mxu0
        %v759 = vadd.f32 %v625, %v758
        %v760 = vpop.f32.mrb[0].mxu0
        %761 = vmatprep.mubr.f32.mxu0 0.0
        %762 = vmatmul.mubr.f32.gmra.mrb[0].mxu0 %v602
        %v763 = vpop.f32.mrb[0].mxu0
        %v764 = vadd.f32 %v625, %v763
        %v765 = vpop.f32.mrb[0].mxu0
        %766 = vmatprep.mubr.f32.mxu0 0.0
        %767 = vmatmul.mubr.f32.gmra.mrb[0].mxu0 %v603
        %v768 = vpop.f32.mrb[0].mxu0
        %v769 = vadd.f32 %v625, %v768
        %v770 = vpop.f32.mrb[0].mxu0
        %771 = vdwg.mxu0
        %v772 = vld [vmem:[%s533] sm:$0xff]
        %v773 = vld [vmem:[%s533 + $0x8] sm:$0xff]
        %v774 = vld [vmem:[%s533 + $0x10] sm:$0xff]
        %v775 = vld [vmem:[%s533 + $0x18] sm:$0xff]
        %v776 = vld [vmem:[%s533 + $0x20] sm:$0xff]
        %v777 = vld [vmem:[%s533 + $0x28] sm:$0xff]
        %v778 = vld [vmem:[%s533 + $0x30] sm:$0xff]
        %v779 = vld [vmem:[%s533 + $0x38] sm:$0xff]
        %v780 = vld [vmem:[%s533 + $0x40] sm:$0xff]
        %v781 = vld [vmem:[%s533 + $0x48] sm:$0xff]
        %v782 = vld [vmem:[%s533 + $0x50] sm:$0xff]
        %v783 = vld [vmem:[%s533 + $0x58] sm:$0xff]
        %v784 = vld [vmem:[%s533 + $0x60] sm:$0xff]
        %v785 = vld [vmem:[%s533 + $0x68] sm:$0xff]
        %v786 = vld [vmem:[%s533 + $0x70] sm:$0xff]
        %v787 = vld [vmem:[%s533 + $0x78] sm:$0xff]
        %v788 = vadd.f32 %v694, %v772
        %v789 = vadd.f32 %v699, %v773
        %v790 = vadd.f32 %v704, %v774
        %v791 = vadd.f32 %v709, %v775
        %v792 = vadd.f32 %v714, %v776
        %v793 = vadd.f32 %v719, %v777
        %v794 = vadd.f32 %v724, %v778
        %v795 = vadd.f32 %v729, %v779
        %v796 = vadd.f32 %v734, %v780
        %v797 = vadd.f32 %v739, %v781
        %v798 = vadd.f32 %v744, %v782
        %v799 = vadd.f32 %v749, %v783
        %v800 = vadd.f32 %v754, %v784
        %v801 = vadd.f32 %v759, %v785
        %v802 = vadd.f32 %v764, %v786
        %v803 = vadd.f32 %v769, %v787
        %v804 = vsub.f32 0.0, %v788
        %v805 = vsub.f32 0.0, %v789
        %v806 = vsub.f32 0.0, %v790
        %v807 = vsub.f32 0.0, %v791
        %v808 = vsub.f32 0.0, %v792
        %v809 = vsub.f32 0.0, %v793
        %v810 = vsub.f32 0.0, %v794
        %v811 = vsub.f32 0.0, %v795
        %v812 = vsub.f32 0.0, %v796
        %v813 = vsub.f32 0.0, %v797
        %v814 = vsub.f32 0.0, %v798
        %v815 = vsub.f32 0.0, %v799
        %v816 = vsub.f32 0.0, %v800
        %v817 = vsub.f32 0.0, %v801
        %v818 = vsub.f32 0.0, %v802
        %v819 = vsub.f32 0.0, %v803
        %v820 = vmul.f32 %v804, 1.442695
        %v821 = vpow.pop %v820
        %v822 = vmul.f32 %v805, 1.442695
        %v823 = vpow.pop %v822
        %v824 = vmul.f32 %v806, 1.442695
        %v825 = vpow.pop %v824
        %v826 = vmul.f32 %v807, 1.442695
        %v827 = vpow.pop %v826
        %v828 = vmul.f32 %v808, 1.442695
        %v829 = vpow.pop %v828
        %v830 = vmul.f32 %v809, 1.442695
        %v831 = vpow.pop %v830
        %v832 = vmul.f32 %v810, 1.442695
        %v833 = vpow.pop %v832
        %v834 = vmul.f32 %v811, 1.442695
        %v835 = vpow.pop %v834
        %v836 = vmul.f32 %v812, 1.442695
        %v837 = vpow.pop %v836
        %v838 = vmul.f32 %v813, 1.442695
        %v839 = vpow.pop %v838
        %v840 = vmul.f32 %v814, 1.442695
        %v841 = vpow.pop %v840
        %v842 = vmul.f32 %v815, 1.442695
        %v843 = vpow.pop %v842
        %v844 = vmul.f32 %v816, 1.442695
        %v845 = vpow.pop %v844
        %v846 = vmul.f32 %v817, 1.442695
        %v847 = vpow.pop %v846
        %v848 = vmul.f32 %v818, 1.442695
        %v849 = vpow.pop %v848
        %v850 = vmul.f32 %v819, 1.442695
        %v851 = vpow.pop %v850
        %v852 = vadd.f32 %v821, 1.0
        %v853 = vadd.f32 %v823, 1.0
        %v854 = vadd.f32 %v825, 1.0
        %v855 = vadd.f32 %v827, 1.0
        %v856 = vadd.f32 %v829, 1.0
        %v857 = vadd.f32 %v831, 1.0
        %v858 = vadd.f32 %v833, 1.0
        %v859 = vadd.f32 %v835, 1.0
        %v860 = vadd.f32 %v837, 1.0
        %v861 = vadd.f32 %v839, 1.0
        %v862 = vadd.f32 %v841, 1.0
        %v863 = vadd.f32 %v843, 1.0
        %v864 = vadd.f32 %v845, 1.0
        %v865 = vadd.f32 %v847, 1.0
        %v866 = vadd.f32 %v849, 1.0
        %v867 = vadd.f32 %v851, 1.0
        %v868 = vrcp.pop %v852
        %v869 = vmul.f32 1.0, %v868
        %v870 = vrcp.pop %v853
        %v871 = vmul.f32 1.0, %v870
        %v872 = vrcp.pop %v854
        %v873 = vmul.f32 1.0, %v872
        %v874 = vrcp.pop %v855
        %v875 = vmul.f32 1.0, %v874
        %v876 = vrcp.pop %v856
        %v877 = vmul.f32 1.0, %v876
        %v878 = vrcp.pop %v857
        %v879 = vmul.f32 1.0, %v878
        %v880 = vrcp.pop %v858
        %v881 = vmul.f32 1.0, %v880
        %v882 = vrcp.pop %v859
        %v883 = vmul.f32 1.0, %v882
        %v884 = vrcp.pop %v860
        %v885 = vmul.f32 1.0, %v884
        %v886 = vrcp.pop %v861
        %v887 = vmul.f32 1.0, %v886
        %v888 = vrcp.pop %v862
        %v889 = vmul.f32 1.0, %v888
        %v890 = vrcp.pop %v863
        %v891 = vmul.f32 1.0, %v890
        %v892 = vrcp.pop %v864
        %v893 = vmul.f32 1.0, %v892
        %v894 = vrcp.pop %v865
        %v895 = vmul.f32 1.0, %v894
        %v896 = vrcp.pop %v866
        %v897 = vmul.f32 1.0, %v896
        %v898 = vrcp.pop %v867
        %v899 = vmul.f32 1.0, %v898
        %v900 = vld [vmem:[%s540] sm:$0xff]
        %v901 = vld [vmem:[%s540 + $0x8] sm:$0xff]
        %v902 = vld [vmem:[%s540 + $0x10] sm:$0xff]
        %v903 = vld [vmem:[%s540 + $0x18] sm:$0xff]
        %v904 = vld [vmem:[%s540 + $0x20] sm:$0xff]
        %v905 = vld [vmem:[%s540 + $0x28] sm:$0xff]
        %v906 = vld [vmem:[%s540 + $0x30] sm:$0xff]
        %v907 = vld [vmem:[%s540 + $0x38] sm:$0xff]
        %v908 = vld [vmem:[%s540 + $0x40] sm:$0xff]
        %v909 = vld [vmem:[%s540 + $0x48] sm:$0xff]
        %v910 = vld [vmem:[%s540 + $0x50] sm:$0xff]
        %v911 = vld [vmem:[%s540 + $0x58] sm:$0xff]
        %v912 = vld [vmem:[%s540 + $0x60] sm:$0xff]
        %v913 = vld [vmem:[%s540 + $0x68] sm:$0xff]
        %v914 = vld [vmem:[%s540 + $0x70] sm:$0xff]
        %v915 = vld [vmem:[%s540 + $0x78] sm:$0xff]
        %917 = vset.pattern.permute.xlu0 0
        %918 = vperm.xlu0 %917, %v900
        %v919 = vpop.permute.xlu0 %918
        %922 = vset.pattern.permute.xlu0 0
        %923 = vperm.xlu0 %922, %v901
        %v924 = vpop.permute.xlu0 %923
        %927 = vset.pattern.permute.xlu0 0
        %928 = vperm.xlu0 %927, %v902
        %v929 = vpop.permute.xlu0 %928
        %932 = vset.pattern.permute.xlu0 0
        %933 = vperm.xlu0 %932, %v903
        %v934 = vpop.permute.xlu0 %933
        %937 = vset.pattern.permute.xlu0 0
        %938 = vperm.xlu0 %937, %v904
        %v939 = vpop.permute.xlu0 %938
        %942 = vset.pattern.permute.xlu0 0
        %943 = vperm.xlu0 %942, %v905
        %v944 = vpop.permute.xlu0 %943
        %947 = vset.pattern.permute.xlu0 0
        %948 = vperm.xlu0 %947, %v906
        %v949 = vpop.permute.xlu0 %948
        %952 = vset.pattern.permute.xlu0 0
        %953 = vperm.xlu0 %952, %v907
        %v954 = vpop.permute.xlu0 %953
        %957 = vset.pattern.permute.xlu0 0
        %958 = vperm.xlu0 %957, %v908
        %v959 = vpop.permute.xlu0 %958
        %962 = vset.pattern.permute.xlu0 0
        %963 = vperm.xlu0 %962, %v909
        %v964 = vpop.permute.xlu0 %963
        %967 = vset.pattern.permute.xlu0 0
        %968 = vperm.xlu0 %967, %v910
        %v969 = vpop.permute.xlu0 %968
        %972 = vset.pattern.permute.xlu0 0
        %973 = vperm.xlu0 %972, %v911
        %v974 = vpop.permute.xlu0 %973
        %977 = vset.pattern.permute.xlu0 0
        %978 = vperm.xlu0 %977, %v912
        %v979 = vpop.permute.xlu0 %978
        %982 = vset.pattern.permute.xlu0 0
        %983 = vperm.xlu0 %982, %v913
        %v984 = vpop.permute.xlu0 %983
        %987 = vset.pattern.permute.xlu0 0
        %988 = vperm.xlu0 %987, %v914
        %v989 = vpop.permute.xlu0 %988
        %992 = vset.pattern.permute.xlu0 0
        %993 = vperm.xlu0 %992, %v915
        %v994 = vpop.permute.xlu0 %993
        %v996 = vmul.f32 %v869, %v919
        %v997 = vmul.f32 %v871, %v924
        %v998 = vmul.f32 %v873, %v929
        %v999 = vmul.f32 %v875, %v934
        %v1000 = vmul.f32 %v877, %v939
        %v1001 = vmul.f32 %v879, %v944
        %v1002 = vmul.f32 %v881, %v949
        %v1003 = vmul.f32 %v883, %v954
        %v1004 = vmul.f32 %v885, %v959
        %v1005 = vmul.f32 %v887, %v964
        %v1006 = vmul.f32 %v889, %v969
        %v1007 = vmul.f32 %v891, %v974
        %v1008 = vmul.f32 %v893, %v979
        %v1009 = vmul.f32 %v895, %v984
        %v1010 = vmul.f32 %v897, %v989
        %v1011 = vmul.f32 %v899, %v994
        %v1012 = vmax.f32 %v996, 0.0
        %v1013 = vmax.f32 %v997, 0.0
        %v1014 = vmax.f32 %v998, 0.0
        %v1015 = vmax.f32 %v999, 0.0
        %v1016 = vmax.f32 %v1000, 0.0
        %v1017 = vmax.f32 %v1001, 0.0
        %v1018 = vmax.f32 %v1002, 0.0
        %v1019 = vmax.f32 %v1003, 0.0
        %v1020 = vmax.f32 %v1004, 0.0
        %v1021 = vmax.f32 %v1005, 0.0
        %v1022 = vmax.f32 %v1006, 0.0
        %v1023 = vmax.f32 %v1007, 0.0
        %v1024 = vmax.f32 %v1008, 0.0
        %v1025 = vmax.f32 %v1009, 0.0
        %v1026 = vmax.f32 %v1010, 0.0
        %v1027 = vmax.f32 %v1011, 0.0
        %s1028 = scalar_lea.vmem %s533, 128 [#allocation2]
        %v1029 = vld [vmem:[%s1028] sm:$0xff]
        %v1030 = vld [vmem:[%s1028 + $0x8] sm:$0xff]
        %v1031 = vld [vmem:[%s1028 + $0x10] sm:$0xff]
        %v1032 = vld [vmem:[%s1028 + $0x18] sm:$0xff]
        %v1033 = vld [vmem:[%s1028 + $0x20] sm:$0xff]
        %v1034 = vld [vmem:[%s1028 + $0x28] sm:$0xff]
        %v1035 = vld [vmem:[%s1028 + $0x30] sm:$0xff]
        %v1036 = vld [vmem:[%s1028 + $0x38] sm:$0xff]
        %v1037 = vld [vmem:[%s1028 + $0x40] sm:$0xff]
        %v1038 = vld [vmem:[%s1028 + $0x48] sm:$0xff]
        %v1039 = vld [vmem:[%s1028 + $0x50] sm:$0xff]
        %v1040 = vld [vmem:[%s1028 + $0x58] sm:$0xff]
        %v1041 = vld [vmem:[%s1028 + $0x60] sm:$0xff]
        %v1042 = vld [vmem:[%s1028 + $0x68] sm:$0xff]
        %v1043 = vld [vmem:[%s1028 + $0x70] sm:$0xff]
        %v1044 = vld [vmem:[%s1028 + $0x78] sm:$0xff]
        %v1045 = vadd.f32 %v694, %v1029
        %v1046 = vadd.f32 %v699, %v1030
        %v1047 = vadd.f32 %v704, %v1031
        %v1048 = vadd.f32 %v709, %v1032
        %v1049 = vadd.f32 %v714, %v1033
        %v1050 = vadd.f32 %v719, %v1034
        %v1051 = vadd.f32 %v724, %v1035
        %v1052 = vadd.f32 %v729, %v1036
        %v1053 = vadd.f32 %v734, %v1037
        %v1054 = vadd.f32 %v739, %v1038
        %v1055 = vadd.f32 %v744, %v1039
        %v1056 = vadd.f32 %v749, %v1040
        %v1057 = vadd.f32 %v754, %v1041
        %v1058 = vadd.f32 %v759, %v1042
        %v1059 = vadd.f32 %v764, %v1043
        %v1060 = vadd.f32 %v769, %v1044
        %v1061 = vsub.f32 0.0, %v1045
        %v1062 = vsub.f32 0.0, %v1046
        %v1063 = vsub.f32 0.0, %v1047
        %v1064 = vsub.f32 0.0, %v1048
        %v1065 = vsub.f32 0.0, %v1049
        %v1066 = vsub.f32 0.0, %v1050
        %v1067 = vsub.f32 0.0, %v1051
        %v1068 = vsub.f32 0.0, %v1052
        %v1069 = vsub.f32 0.0, %v1053
        %v1070 = vsub.f32 0.0, %v1054
        %v1071 = vsub.f32 0.0, %v1055
        %v1072 = vsub.f32 0.0, %v1056
        %v1073 = vsub.f32 0.0, %v1057
        %v1074 = vsub.f32 0.0, %v1058
        %v1075 = vsub.f32 0.0, %v1059
        %v1076 = vsub.f32 0.0, %v1060
        %v1077 = vmul.f32 %v1061, 1.442695
        %v1078 = vpow.pop %v1077
        %v1079 = vmul.f32 %v1062, 1.442695
        %v1080 = vpow.pop %v1079
        %v1081 = vmul.f32 %v1063, 1.442695
        %v1082 = vpow.pop %v1081
        %v1083 = vmul.f32 %v1064, 1.442695
        %v1084 = vpow.pop %v1083
        %v1085 = vmul.f32 %v1065, 1.442695
        %v1086 = vpow.pop %v1085
        %v1087 = vmul.f32 %v1066, 1.442695
        %v1088 = vpow.pop %v1087
        %v1089 = vmul.f32 %v1067, 1.442695
        %v1090 = vpow.pop %v1089
        %v1091 = vmul.f32 %v1068, 1.442695
        %v1092 = vpow.pop %v1091
        %v1093 = vmul.f32 %v1069, 1.442695
        %v1094 = vpow.pop %v1093
        %v1095 = vmul.f32 %v1070, 1.442695
        %v1096 = vpow.pop %v1095
        %v1097 = vmul.f32 %v1071, 1.442695
        %v1098 = vpow.pop %v1097
        %v1099 = vmul.f32 %v1072, 1.442695
        %v1100 = vpow.pop %v1099
        %v1101 = vmul.f32 %v1073, 1.442695
        %v1102 = vpow.pop %v1101
        %v1103 = vmul.f32 %v1074, 1.442695
        %v1104 = vpow.pop %v1103
        %v1105 = vmul.f32 %v1075, 1.442695
        %v1106 = vpow.pop %v1105
        %v1107 = vmul.f32 %v1076, 1.442695
        %v1108 = vpow.pop %v1107
        %v1109 = vadd.f32 %v1078, 1.0
        %v1110 = vadd.f32 %v1080, 1.0
        %v1111 = vadd.f32 %v1082, 1.0
        %v1112 = vadd.f32 %v1084, 1.0
        %v1113 = vadd.f32 %v1086, 1.0
        %v1114 = vadd.f32 %v1088, 1.0
        %v1115 = vadd.f32 %v1090, 1.0
        %v1116 = vadd.f32 %v1092, 1.0
        %v1117 = vadd.f32 %v1094, 1.0
        %v1118 = vadd.f32 %v1096, 1.0
        %v1119 = vadd.f32 %v1098, 1.0
        %v1120 = vadd.f32 %v1100, 1.0
        %v1121 = vadd.f32 %v1102, 1.0
        %v1122 = vadd.f32 %v1104, 1.0
        %v1123 = vadd.f32 %v1106, 1.0
        %v1124 = vadd.f32 %v1108, 1.0
        %v1125 = vrcp.pop %v1109
        %v1126 = vmul.f32 1.0, %v1125
        %v1127 = vrcp.pop %v1110
        %v1128 = vmul.f32 1.0, %v1127
        %v1129 = vrcp.pop %v1111
        %v1130 = vmul.f32 1.0, %v1129
        %v1131 = vrcp.pop %v1112
        %v1132 = vmul.f32 1.0, %v1131
        %v1133 = vrcp.pop %v1113
        %v1134 = vmul.f32 1.0, %v1133
        %v1135 = vrcp.pop %v1114
        %v1136 = vmul.f32 1.0, %v1135
        %v1137 = vrcp.pop %v1115
        %v1138 = vmul.f32 1.0, %v1137
        %v1139 = vrcp.pop %v1116
        %v1140 = vmul.f32 1.0, %v1139
        %v1141 = vrcp.pop %v1117
        %v1142 = vmul.f32 1.0, %v1141
        %v1143 = vrcp.pop %v1118
        %v1144 = vmul.f32 1.0, %v1143
        %v1145 = vrcp.pop %v1119
        %v1146 = vmul.f32 1.0, %v1145
        %v1147 = vrcp.pop %v1120
        %v1148 = vmul.f32 1.0, %v1147
        %v1149 = vrcp.pop %v1121
        %v1150 = vmul.f32 1.0, %v1149
        %v1151 = vrcp.pop %v1122
        %v1152 = vmul.f32 1.0, %v1151
        %v1153 = vrcp.pop %v1123
        %v1154 = vmul.f32 1.0, %v1153
        %v1155 = vrcp.pop %v1124
        %v1156 = vmul.f32 1.0, %v1155
        %s1157 = scalar_lea.vmem %s540, 128 [#allocation3]
        %v1158 = vld [vmem:[%s1157] sm:$0xff]
        %v1159 = vld [vmem:[%s1157 + $0x8] sm:$0xff]
        %v1160 = vld [vmem:[%s1157 + $0x10] sm:$0xff]
        %v1161 = vld [vmem:[%s1157 + $0x18] sm:$0xff]
        %v1162 = vld [vmem:[%s1157 + $0x20] sm:$0xff]
        %v1163 = vld [vmem:[%s1157 + $0x28] sm:$0xff]
        %v1164 = vld [vmem:[%s1157 + $0x30] sm:$0xff]
        %v1165 = vld [vmem:[%s1157 + $0x38] sm:$0xff]
        %v1166 = vld [vmem:[%s1157 + $0x40] sm:$0xff]
        %v1167 = vld [vmem:[%s1157 + $0x48] sm:$0xff]
        %v1168 = vld [vmem:[%s1157 + $0x50] sm:$0xff]
        %v1169 = vld [vmem:[%s1157 + $0x58] sm:$0xff]
        %v1170 = vld [vmem:[%s1157 + $0x60] sm:$0xff]
        %v1171 = vld [vmem:[%s1157 + $0x68] sm:$0xff]
        %v1172 = vld [vmem:[%s1157 + $0x70] sm:$0xff]
        %v1173 = vld [vmem:[%s1157 + $0x78] sm:$0xff]
        %1175 = vset.pattern.permute.xlu0 0
        %1176 = vperm.xlu0 %1175, %v1158
        %v1177 = vpop.permute.xlu0 %1176
        %1180 = vset.pattern.permute.xlu0 0
        %1181 = vperm.xlu0 %1180, %v1159
        %v1182 = vpop.permute.xlu0 %1181
        %1185 = vset.pattern.permute.xlu0 0
        %1186 = vperm.xlu0 %1185, %v1160
        %v1187 = vpop.permute.xlu0 %1186
        %1190 = vset.pattern.permute.xlu0 0
        %1191 = vperm.xlu0 %1190, %v1161
        %v1192 = vpop.permute.xlu0 %1191
        %1195 = vset.pattern.permute.xlu0 0
        %1196 = vperm.xlu0 %1195, %v1162
        %v1197 = vpop.permute.xlu0 %1196
        %1200 = vset.pattern.permute.xlu0 0
        %1201 = vperm.xlu0 %1200, %v1163
        %v1202 = vpop.permute.xlu0 %1201
        %1205 = vset.pattern.permute.xlu0 0
        %1206 = vperm.xlu0 %1205, %v1164
        %v1207 = vpop.permute.xlu0 %1206
        %1210 = vset.pattern.permute.xlu0 0
        %1211 = vperm.xlu0 %1210, %v1165
        %v1212 = vpop.permute.xlu0 %1211
        %1215 = vset.pattern.permute.xlu0 0
        %1216 = vperm.xlu0 %1215, %v1166
        %v1217 = vpop.permute.xlu0 %1216
        %1220 = vset.pattern.permute.xlu0 0
        %1221 = vperm.xlu0 %1220, %v1167
        %v1222 = vpop.permute.xlu0 %1221
        %1225 = vset.pattern.permute.xlu0 0
        %1226 = vperm.xlu0 %1225, %v1168
        %v1227 = vpop.permute.xlu0 %1226
        %1230 = vset.pattern.permute.xlu0 0
        %1231 = vperm.xlu0 %1230, %v1169
        %v1232 = vpop.permute.xlu0 %1231
        %1235 = vset.pattern.permute.xlu0 0
        %1236 = vperm.xlu0 %1235, %v1170
        %v1237 = vpop.permute.xlu0 %1236
        %1240 = vset.pattern.permute.xlu0 0
        %1241 = vperm.xlu0 %1240, %v1171
        %v1242 = vpop.permute.xlu0 %1241
        %1245 = vset.pattern.permute.xlu0 0
        %1246 = vperm.xlu0 %1245, %v1172
        %v1247 = vpop.permute.xlu0 %1246
        %1250 = vset.pattern.permute.xlu0 0
        %1251 = vperm.xlu0 %1250, %v1173
        %v1252 = vpop.permute.xlu0 %1251
        %v1254 = vmul.f32 %v1126, %v1177
        %v1255 = vmul.f32 %v1128, %v1182
        %v1256 = vmul.f32 %v1130, %v1187
        %v1257 = vmul.f32 %v1132, %v1192
        %v1258 = vmul.f32 %v1134, %v1197
        %v1259 = vmul.f32 %v1136, %v1202
        %v1260 = vmul.f32 %v1138, %v1207
        %v1261 = vmul.f32 %v1140, %v1212
        %v1262 = vmul.f32 %v1142, %v1217
        %v1263 = vmul.f32 %v1144, %v1222
        %v1264 = vmul.f32 %v1146, %v1227
        %v1265 = vmul.f32 %v1148, %v1232
        %v1266 = vmul.f32 %v1150, %v1237
        %v1267 = vmul.f32 %v1152, %v1242
        %v1268 = vmul.f32 %v1154, %v1247
        %v1269 = vmul.f32 %v1156, %v1252
        %v1270 = vmax.f32 %v1012, %v1254
        %v1271 = vmax.f32 %v1013, %v1255
        %v1272 = vmax.f32 %v1014, %v1256
        %v1273 = vmax.f32 %v1015, %v1257
        %v1274 = vmax.f32 %v1016, %v1258
        %v1275 = vmax.f32 %v1017, %v1259
        %v1276 = vmax.f32 %v1018, %v1260
        %v1277 = vmax.f32 %v1019, %v1261
        %v1278 = vmax.f32 %v1020, %v1262
        %v1279 = vmax.f32 %v1021, %v1263
        %v1280 = vmax.f32 %v1022, %v1264
        %v1281 = vmax.f32 %v1023, %v1265
        %v1282 = vmax.f32 %v1024, %v1266
        %v1283 = vmax.f32 %v1025, %v1267
        %v1284 = vmax.f32 %v1026, %v1268
        %v1285 = vmax.f32 %v1027, %v1269
        %1286 = vst [vmem:[%s586] sm:$0xff] %v1270
        %1287 = vst [vmem:[%s586 + $0x8] sm:$0xff] %v1271
        %1288 = vst [vmem:[%s586 + $0x10] sm:$0xff] %v1272
        %1289 = vst [vmem:[%s586 + $0x18] sm:$0xff] %v1273
        %1290 = vst [vmem:[%s586 + $0x20] sm:$0xff] %v1274
        %1291 = vst [vmem:[%s586 + $0x28] sm:$0xff] %v1275
        %1292 = vst [vmem:[%s586 + $0x30] sm:$0xff] %v1276
        %1293 = vst [vmem:[%s586 + $0x38] sm:$0xff] %v1277
        %1294 = vst [vmem:[%s586 + $0x40] sm:$0xff] %v1278
        %1295 = vst [vmem:[%s586 + $0x48] sm:$0xff] %v1279
        %1296 = vst [vmem:[%s586 + $0x50] sm:$0xff] %v1280
        %1297 = vst [vmem:[%s586 + $0x58] sm:$0xff] %v1281
        %1298 = vst [vmem:[%s586 + $0x60] sm:$0xff] %v1282
        %1299 = vst [vmem:[%s586 + $0x68] sm:$0xff] %v1283
        %1300 = vst [vmem:[%s586 + $0x70] sm:$0xff] %v1284
        %1301 = vst [vmem:[%s586 + $0x78] sm:$0xff] %v1285
        %s1302 = smul.u32 16, %s16
        %p1303 = scmp.lt.s32.totalorder %s1302, 63
        %s1304 = scalar_select %p1303, %s1302, 63
        %s1305 = smul.addr %s1304, 8
        %s1306 = scalar_lea.vmem %s5, %s1305
        // Predicated region
        $region117: #{best_gnn_forward.14} parent=107 // pred_check
          %p1307 = pneg %p154
        $region118: #{best_gnn_forward.14} parent=107 // pred_check_branch
          %1309 = sbr.rel (%p1307) target = $region120
        $region119: #{best_gnn_forward.14} parent=107 // pred_region
          %s1310 = smul.u32 16, %s16
        $region120: #{best_gnn_forward.14} parent=107 // pred_fallthru
          _
      $region108: #{best_gnn_forward.14} parent=5 // pred_fallthru
        _
      %p1311 = scmp.le.s32.totalorder 2, %s11
      // Predicated region
      $region121: #{best_gnn_forward.14} parent=5 // pred_check
        %p1312 = pneg %p1311
      $region122: #{best_gnn_forward.14} parent=5 // pred_check_branch
        %1314 = sbr.rel (%p1312) target = $region124
      $region123: #{best_gnn_forward.14} parent=5 // pred_region
        %s1315 = ssub.s32 %s11, 2
        // Predicated region
        $region125: #{best_gnn_forward.14} parent=123 // pred_check
          %p1316 = pneg %p160
        $region126: #{best_gnn_forward.14} parent=123 // pred_check_branch
          %1318 = sbr.rel (%p1316) target = $region128
        $region127: #{best_gnn_forward.14} parent=123 // pred_region
          %s1319 = smul.u32 16, %s17
          %p1320 = scmp.lt.s32.totalorder %s1319, 63
          %s1321 = scalar_select %p1320, %s1319, 63
          %s1322 = smul.addr %s1321, 8
          %s1323 = scalar_lea.vmem %s5, %s1322
        $region128: #{best_gnn_forward.14} parent=123 // pred_fallthru
          _
      $region124: #{best_gnn_forward.14} parent=5 // pred_fallthru
        _
    $region6: #{best_gnn_forward.14} parent=1 // loop_footer
      %s15 = sadd.s32 1, %s11
    $region7: #{best_gnn_forward.14} parent=1 // loop_footer_branch
      %10 = sbr.rel target = $region3
    $region8: #{best_gnn_forward.14} parent=1 // loop_exit
      _

// kernel: best_gnn_forward.21
$region0: #{best_gnn_forward.21}
  #allocation0 [shape = 'u32[]', space=smem, size = 0x4, offset = 0x4, fixed_abs, tag = 'smem constant byte address 0x4 - core index']
  #allocation1 [shape = 'u32[144,128]{1,0:T(1,128)}', space=vmem, size = 0x12000, scoped, tag = 'internal scratch']
  #allocation2 [shape = 'f32[8,128]{1,0:T(8,128)}', space=vmem, size = 0x1000, scoped, tag = 'scratch operand']
  %s0 = inlined_call_operand.vmem [shape: s32[512,1], index: 0, kind: input, shape index: {}]
  %s1 = inlined_call_operand.vmem [shape: f32[512,128], index: 1, kind: input, shape index: {}]
  %s2 = inlined_call_operand.vmem [shape: f32[128,128], index: 2, kind: input, shape index: {}]
  %s3 = inlined_call_operand.vmem [shape: f32[1,128], index: 3, kind: input, shape index: {}]
  %s4 = inlined_call_operand.vmem [shape: f32[8,128], index: 4, kind: output, shape index: {}]
  %s5 = sld [smem:[#allocation0]]
  $region57: #{best_gnn_forward.21} parent=0
    _
  %s7 = ssub.s32 1, %s5
  %s8 = scalar_select 0, %s7, %s5
  loop: start=0, step=1, limit=6
  $region2: #{best_gnn_forward.21} parent=0 // loop_pre_header
    _
  $region3: #{best_gnn_forward.21} parent=0 // loop_header
    %s10 = sphi 0, %s14
    %p11 = scmp.ge.s32.totalorder %s10, 6
    %s20 = sphi 0, %s22
    %s23 = sphi 0, %s20
    %s24 = sphi 0, %s23
    %s40 = sphi 0, %s24
    %s46 = sphi 0, %s48
    %s49 = sphi 0, %s46
    %s50 = sphi 0, %s49
    %s66 = sphi 0, %s50
    %s70 = sphi 0, %s70
    %s72 = sphi 0, %s70
    %s73 = sphi 0, %s72
    %s87 = sphi 0, %s73
    %s91 = sphi 0, %s91
    %s93 = sphi 0, %s91
    %s94 = sphi 0, %s93
    %s108 = sphi 0, %s94
    %s112 = sphi 0, %s112
    %s114 = sphi 0, %s112
    %s115 = sphi 0, %s114
    %s129 = sphi 0, %s115
  $region4: #{best_gnn_forward.21} parent=0 // loop_header_branch
    %13 = sbr.rel (%p11) target = $region8
  $region5: #{best_gnn_forward.21} parent=0 // loop_body
    %s15 = ssub.s32 %s10, 1
    %s16 = ssub.s32 %s10, 2
    %s17 = sadd.s32 %s10, 1
    %s18 = ssub.s32 %s10, %s17
    %p19 = scmp.eq.s32.totalorder %s18, 0
    %s21 = sadd.s32 %s20, 1
    %s22 = scalar_select %p19, %s20, %s21
    %p25 = pneg %p19
    %p26 = scmp.eq.s32.totalorder %s10, 3
    %p27 = por %p25, %p26
    %p28 = scmp.ne.s32.totalorder %s20, %s23
    %p29 = scmp.eq.s32.totalorder %s10, 0
    %p30 = por %p28, %p29
    %p31 = scmp.ne.s32.totalorder %s20, %s23
    %p32 = scmp.eq.s32.totalorder %s15, 3
    %p33 = por %p31, %p32
    %p34 = scmp.ne.s32.totalorder %s23, %s24
    %p35 = scmp.eq.s32.totalorder %s15, 0
    %p36 = por %p34, %p35
    %p37 = scmp.ne.s32.totalorder %s23, %s24
    %p38 = scmp.eq.s32.totalorder %s16, 3
    %p39 = por %p37, %p38
    %p41 = scmp.ne.s32.totalorder %s24, %s40
    %p42 = scmp.eq.s32.totalorder %s16, 0
    %p43 = por %p41, %p42
    %s44 = ssub.s32 %s10, %s17
    %p45 = scmp.eq.s32.totalorder %s44, 0
    %s47 = sadd.s32 %s46, 1
    %s48 = scalar_select %p45, %s46, %s47
    %p51 = pneg %p45
    %p52 = scmp.eq.s32.totalorder %s10, 3
    %p53 = por %p51, %p52
    %p54 = scmp.ne.s32.totalorder %s46, %s49
    %p55 = scmp.eq.s32.totalorder %s10, 0
    %p56 = por %p54, %p55
    %p57 = scmp.ne.s32.totalorder %s46, %s49
    %p58 = scmp.eq.s32.totalorder %s15, 3
    %p59 = por %p57, %p58
    %p60 = scmp.ne.s32.totalorder %s49, %s50
    %p61 = scmp.eq.s32.totalorder %s15, 0
    %p62 = por %p60, %p61
    %p63 = scmp.ne.s32.totalorder %s49, %s50
    %p64 = scmp.eq.s32.totalorder %s16, 3
    %p65 = por %p63, %p64
    %p67 = scmp.ne.s32.totalorder %s50, %s66
    %p68 = scmp.eq.s32.totalorder %s16, 0
    %p69 = por %p67, %p68
    %s71 = sadd.s32 %s70, 1
    %p74 = scmp.eq.s32.totalorder %s10, 3
    %p75 = scmp.ne.s32.totalorder %s70, %s72
    %p76 = scmp.eq.s32.totalorder %s10, 0
    %p77 = por %p75, %p76
    %p78 = scmp.ne.s32.totalorder %s70, %s72
    %p79 = scmp.eq.s32.totalorder %s15, 3
    %p80 = por %p78, %p79
    %p81 = scmp.ne.s32.totalorder %s72, %s73
    %p82 = scmp.eq.s32.totalorder %s15, 0
    %p83 = por %p81, %p82
    %p84 = scmp.ne.s32.totalorder %s72, %s73
    %p85 = scmp.eq.s32.totalorder %s16, 3
    %p86 = por %p84, %p85
    %p88 = scmp.ne.s32.totalorder %s73, %s87
    %p89 = scmp.eq.s32.totalorder %s16, 0
    %p90 = por %p88, %p89
    %s92 = sadd.s32 %s91, 1
    %p95 = scmp.eq.s32.totalorder %s10, 3
    %p96 = scmp.ne.s32.totalorder %s91, %s93
    %p97 = scmp.eq.s32.totalorder %s10, 0
    %p98 = por %p96, %p97
    %p99 = scmp.ne.s32.totalorder %s91, %s93
    %p100 = scmp.eq.s32.totalorder %s15, 3
    %p101 = por %p99, %p100
    %p102 = scmp.ne.s32.totalorder %s93, %s94
    %p103 = scmp.eq.s32.totalorder %s15, 0
    %p104 = por %p102, %p103
    %p105 = scmp.ne.s32.totalorder %s93, %s94
    %p106 = scmp.eq.s32.totalorder %s16, 3
    %p107 = por %p105, %p106
    %p109 = scmp.ne.s32.totalorder %s94, %s108
    %p110 = scmp.eq.s32.totalorder %s16, 0
    %p111 = por %p109, %p110
    %s113 = sadd.s32 %s112, 1
    %p116 = scmp.eq.s32.totalorder %s10, 3
    %p117 = scmp.ne.s32.totalorder %s112, %s114
    %p118 = scmp.eq.s32.totalorder %s10, 0
    %p119 = por %p117, %p118
    %p120 = scmp.ne.s32.totalorder %s112, %s114
    %p121 = scmp.eq.s32.totalorder %s15, 3
    %p122 = por %p120, %p121
    %p123 = scmp.ne.s32.totalorder %s114, %s115
    %p124 = scmp.eq.s32.totalorder %s15, 0
    %p125 = por %p123, %p124
    %p126 = scmp.ne.s32.totalorder %s114, %s115
    %p127 = scmp.eq.s32.totalorder %s16, 3
    %p128 = por %p126, %p127
    %p130 = scmp.ne.s32.totalorder %s115, %s129
    %p131 = scmp.eq.s32.totalorder %s16, 0
    %p132 = por %p130, %p131
    %p133 = scmp.le.s32.totalorder 1, %s10
    %p134 = scmp.lt.s32.totalorder %s10, 5
    %p135 = pnand %p133, %p134
    %p136 = pneg %p135
    // Predicated region
    $region9: #{best_gnn_forward.21} parent=5 // pred_check
      _
    $region10: #{best_gnn_forward.21} parent=5 // pred_check_branch
      %138 = sbr.rel (%p135) target = $region12
    $region11: #{best_gnn_forward.21} parent=5 // pred_region
      %s139 = ssub.s32 %s10, 1
      // Predicated region
      $region13: #{best_gnn_forward.21} parent=11 // pred_check
        %p140 = pneg %p83
      $region14: #{best_gnn_forward.21} parent=11 // pred_check_branch
        %142 = sbr.rel (%p140) target = $region16
      $region15: #{best_gnn_forward.21} parent=11 // pred_region
        _
      $region16: #{best_gnn_forward.21} parent=11 // pred_fallthru
        _
      // Predicated region
      $region17: #{best_gnn_forward.21} parent=11 // pred_check
        %p143 = pneg %p104
      $region18: #{best_gnn_forward.21} parent=11 // pred_check_branch
        %145 = sbr.rel (%p143) target = $region20
      $region19: #{best_gnn_forward.21} parent=11 // pred_region
        _
      $region20: #{best_gnn_forward.21} parent=11 // pred_fallthru
        _
    $region12: #{best_gnn_forward.21} parent=5 // pred_fallthru
      _
    %p146 = scmp.lt.s32.totalorder %s10, 4
    // Predicated region
    $region21: #{best_gnn_forward.21} parent=5 // pred_check
      %p147 = pneg %p146
    $region22: #{best_gnn_forward.21} parent=5 // pred_check_branch
      %149 = sbr.rel (%p147) target = $region24
    $region23: #{best_gnn_forward.21} parent=5 // pred_region
      // Predicated region
      $region25: #{best_gnn_forward.21} parent=23 // pred_check
        %p150 = pneg %p30
      $region26: #{best_gnn_forward.21} parent=23 // pred_check_branch
        %152 = sbr.rel (%p150) target = $region28
      $region27: #{best_gnn_forward.21} parent=23 // pred_region
        %s153 = smul.u32 16, %s10
        %p154 = scmp.lt.s32.totalorder %s153, 63
        %s155 = scalar_select %p154, %s153, 63
        %s156 = smul.addr %s155, 8
        %s157 = scalar_lea.vmem %s0, %s156
        %s158 = smul.u32 16, %s10
      $region28: #{best_gnn_forward.21} parent=23 // pred_fallthru
        _
      // Predicated region
      $region29: #{best_gnn_forward.21} parent=23 // pred_check
        %p159 = pneg %p56
      $region30: #{best_gnn_forward.21} parent=23 // pred_check_branch
        %161 = sbr.rel (%p159) target = $region32
      $region31: #{best_gnn_forward.21} parent=23 // pred_region
        %s162 = smul.u32 16, %s10
        %p163 = scmp.lt.s32.totalorder %s162, 63
        %s164 = scalar_select %p163, %s162, 63
        %s165 = smul.addr %s164, 8
        %s166 = scalar_lea.vmem %s1, %s165
        %s167 = smul.u32 16, %s10
      $region32: #{best_gnn_forward.21} parent=23 // pred_fallthru
        _
    $region24: #{best_gnn_forward.21} parent=5 // pred_fallthru
      _
    %p168 = scmp.le.s32.totalorder 1, %s10
    %p169 = scmp.lt.s32.totalorder %s10, 5
    %p170 = pnand %p168, %p169
    %p171 = pneg %p170
    // Predicated region
    $region33: #{best_gnn_forward.21} parent=5 // pred_check
      _
    $region34: #{best_gnn_forward.21} parent=5 // pred_check_branch
      %173 = sbr.rel (%p170) target = $region36
    $region35: #{best_gnn_forward.21} parent=5 // pred_region
      %s174 = ssub.s32 %s10, 1
      %s175 = smul.u32 16, %s15
      %p176 = scmp.lt.s32.totalorder %s175, 63
      %s177 = scalar_select %p176, %s175, 63
      %s178 = smul.addr %s177, 8
      %s179 = scalar_lea.vmem %s0, %s178
      %p180 = pneg %p36
      %p181 = pneg %p33
      %s182 = smul.u32 16, %s15
      %p183 = scmp.lt.s32.totalorder %s182, 63
      %s184 = scalar_select %p183, %s182, 63
      %s185 = smul.addr %s184, 8
      %s186 = scalar_lea.vmem %s1, %s185
      %p187 = pneg %p62
      %p188 = pneg %p59
      %p189 = pneg %p83
      %p190 = pneg %p80
      %p191 = pneg %p104
      %p192 = pneg %p101
      %p193 = pneg %p125
      %p194 = pneg %p122
      %s195 = smul.u32 16, %s15
      %p196 = scmp.lt.s32.totalorder %s195, 63
      %s197 = scalar_select %p196, %s195, 63
      %s198 = smul.addr %s197, 8
      %s199 = scalar_lea.vmem %s0, %s198
      %s200 = smul.u32 16, %s15
      %s201 = smul.u32 16, %s15
      %p202 = scmp.lt.s32.totalorder %s201, 63
      %s203 = scalar_select %p202, %s201, 63
      %s204 = smul.addr %s203, 8
      %s205 = scalar_lea.vmem %s1, %s204
      %s206 = smul.u32 16, %s15
      %p207 = scmp.eq.s32.totalorder %s15, 0
      // Predicated region
      $region37: #{best_gnn_forward.21} parent=35 // pred_check
        %p208 = pneg %p207
      $region38: #{best_gnn_forward.21} parent=35 // pred_check_branch
        %210 = sbr.rel (%p208) target = $region40
      $region39: #{best_gnn_forward.21} parent=35 // pred_region
        %211 = vst [vmem:[#allocation2] sm:$0xff] 0.0
      $region40: #{best_gnn_forward.21} parent=35 // pred_fallthru
        _
      %v212 = vld [vmem:[%s205] sm:$0xff]
      %v213 = vld [vmem:[%s205 + $0x8] sm:$0xff]
      %v214 = vld [vmem:[%s205 + $0x10] sm:$0xff]
      %v215 = vld [vmem:[%s205 + $0x18] sm:$0xff]
      %v216 = vld [vmem:[%s205 + $0x20] sm:$0xff]
      %v217 = vld [vmem:[%s205 + $0x28] sm:$0xff]
      %v218 = vld [vmem:[%s205 + $0x30] sm:$0xff]
      %v219 = vld [vmem:[%s205 + $0x38] sm:$0xff]
      %v220 = vld [vmem:[%s205 + $0x40] sm:$0xff]
      %v221 = vld [vmem:[%s205 + $0x48] sm:$0xff]
      %v222 = vld [vmem:[%s205 + $0x50] sm:$0xff]
      %v223 = vld [vmem:[%s205 + $0x58] sm:$0xff]
      %v224 = vld [vmem:[%s205 + $0x60] sm:$0xff]
      %v225 = vld [vmem:[%s205 + $0x68] sm:$0xff]
      %v226 = vld [vmem:[%s205 + $0x70] sm:$0xff]
      %v227 = vld [vmem:[%s205 + $0x78] sm:$0xff]
      %v228 = vld [vmem:[%s199] sm:$0xff]
      %v229 = vld [vmem:[%s199 + $0x8] sm:$0xff]
      %v230 = vld [vmem:[%s199 + $0x10] sm:$0xff]
      %v231 = vld [vmem:[%s199 + $0x18] sm:$0xff]
      %v232 = vld [vmem:[%s199 + $0x20] sm:$0xff]
      %v233 = vld [vmem:[%s199 + $0x28] sm:$0xff]
      %v234 = vld [vmem:[%s199 + $0x30] sm:$0xff]
      %v235 = vld [vmem:[%s199 + $0x38] sm:$0xff]
      %v236 = vld [vmem:[%s199 + $0x40] sm:$0xff]
      %v237 = vld [vmem:[%s199 + $0x48] sm:$0xff]
      %v238 = vld [vmem:[%s199 + $0x50] sm:$0xff]
      %v239 = vld [vmem:[%s199 + $0x58] sm:$0xff]
      %v240 = vld [vmem:[%s199 + $0x60] sm:$0xff]
      %v241 = vld [vmem:[%s199 + $0x68] sm:$0xff]
      %v242 = vld [vmem:[%s199 + $0x70] sm:$0xff]
      %v243 = vld [vmem:[%s199 + $0x78] sm:$0xff]
      %vm244 = vcmp.eq.s32.totalorder %v228, 0
      %vm245 = vcmp.eq.s32.totalorder %v229, 0
      %vm246 = vcmp.eq.s32.totalorder %v230, 0
      %vm247 = vcmp.eq.s32.totalorder %v231, 0
      %vm248 = vcmp.eq.s32.totalorder %v232, 0
      %vm249 = vcmp.eq.s32.totalorder %v233, 0
      %vm250 = vcmp.eq.s32.totalorder %v234, 0
      %vm251 = vcmp.eq.s32.totalorder %v235, 0
      %vm252 = vcmp.eq.s32.totalorder %v236, 0
      %vm253 = vcmp.eq.s32.totalorder %v237, 0
      %vm254 = vcmp.eq.s32.totalorder %v238, 0
      %vm255 = vcmp.eq.s32.totalorder %v239, 0
      %vm256 = vcmp.eq.s32.totalorder %v240, 0
      %vm257 = vcmp.eq.s32.totalorder %v241, 0
      %vm258 = vcmp.eq.s32.totalorder %v242, 0
      %vm259 = vcmp.eq.s32.totalorder %v243, 0
      %v260 = vsel %vm244, 1, 0
      %v261 = vsel %vm245, 1, 0
      %v262 = vsel %vm246, 1, 0
      %v263 = vsel %vm247, 1, 0
      %v264 = vsel %vm248, 1, 0
      %v265 = vsel %vm249, 1, 0
      %v266 = vsel %vm250, 1, 0
      %v267 = vsel %vm251, 1, 0
      %v268 = vsel %vm252, 1, 0
      %v269 = vsel %vm253, 1, 0
      %v270 = vsel %vm254, 1, 0
      %v271 = vsel %vm255, 1, 0
      %v272 = vsel %vm256, 1, 0
      %v273 = vsel %vm257, 1, 0
      %v274 = vsel %vm258, 1, 0
      %v275 = vsel %vm259, 1, 0
      %276 = vset.pattern.permute.xlu0 0
      %277 = vperm.xlu0 %276, %v260
      %v278 = vpop.permute.xlu0 %277
      %279 = vset.pattern.permute.xlu0 0
      %280 = vperm.xlu0 %279, %v261
      %v281 = vpop.permute.xlu0 %280
      %282 = vset.pattern.permute.xlu0 0
      %283 = vperm.xlu0 %282, %v262
      %v284 = vpop.permute.xlu0 %283
      %285 = vset.pattern.permute.xlu0 0
      %286 = vperm.xlu0 %285, %v263
      %v287 = vpop.permute.xlu0 %286
      %288 = vset.pattern.permute.xlu0 0
      %289 = vperm.xlu0 %288, %v264
      %v290 = vpop.permute.xlu0 %289
      %291 = vset.pattern.permute.xlu0 0
      %292 = vperm.xlu0 %291, %v265
      %v293 = vpop.permute.xlu0 %292
      %294 = vset.pattern.permute.xlu0 0
      %295 = vperm.xlu0 %294, %v266
      %v296 = vpop.permute.xlu0 %295
      %297 = vset.pattern.permute.xlu0 0
      %298 = vperm.xlu0 %297, %v267
      %v299 = vpop.permute.xlu0 %298
      %300 = vset.pattern.permute.xlu0 0
      %301 = vperm.xlu0 %300, %v268
      %v302 = vpop.permute.xlu0 %301
      %303 = vset.pattern.permute.xlu0 0
      %304 = vperm.xlu0 %303, %v269
      %v305 = vpop.permute.xlu0 %304
      %306 = vset.pattern.permute.xlu0 0
      %307 = vperm.xlu0 %306, %v270
      %v308 = vpop.permute.xlu0 %307
      %309 = vset.pattern.permute.xlu0 0
      %310 = vperm.xlu0 %309, %v271
      %v311 = vpop.permute.xlu0 %310
      %312 = vset.pattern.permute.xlu0 0
      %313 = vperm.xlu0 %312, %v272
      %v314 = vpop.permute.xlu0 %313
      %315 = vset.pattern.permute.xlu0 0
      %316 = vperm.xlu0 %315, %v273
      %v317 = vpop.permute.xlu0 %316
      %318 = vset.pattern.permute.xlu0 0
      %319 = vperm.xlu0 %318, %v274
      %v320 = vpop.permute.xlu0 %319
      %321 = vset.pattern.permute.xlu0 0
      %322 = vperm.xlu0 %321, %v275
      %v323 = vpop.permute.xlu0 %322
      %vm324 = vcmp.eq.s32.totalorder %v278, 1
      %vm325 = vcmp.eq.s32.totalorder %v281, 1
      %vm326 = vcmp.eq.s32.totalorder %v284, 1
      %vm327 = vcmp.eq.s32.totalorder %v287, 1
      %vm328 = vcmp.eq.s32.totalorder %v290, 1
      %vm329 = vcmp.eq.s32.totalorder %v293, 1
      %vm330 = vcmp.eq.s32.totalorder %v296, 1
      %vm331 = vcmp.eq.s32.totalorder %v299, 1
      %vm332 = vcmp.eq.s32.totalorder %v302, 1
      %vm333 = vcmp.eq.s32.totalorder %v305, 1
      %vm334 = vcmp.eq.s32.totalorder %v308, 1
      %vm335 = vcmp.eq.s32.totalorder %v311, 1
      %vm336 = vcmp.eq.s32.totalorder %v314, 1
      %vm337 = vcmp.eq.s32.totalorder %v317, 1
      %vm338 = vcmp.eq.s32.totalorder %v320, 1
      %vm339 = vcmp.eq.s32.totalorder %v323, 1
      %v340 = vsel %vm324, %v212, 0.0
      %v341 = vsel %vm325, %v213, 0.0
      %v342 = vsel %vm326, %v214, 0.0
      %v343 = vsel %vm327, %v215, 0.0
      %v344 = vsel %vm328, %v216, 0.0
      %v345 = vsel %vm329, %v217, 0.0
      %v346 = vsel %vm330, %v218, 0.0
      %v347 = vsel %vm331, %v219, 0.0
      %v348 = vsel %vm332, %v220, 0.0
      %v349 = vsel %vm333, %v221, 0.0
      %v350 = vsel %vm334, %v222, 0.0
      %v351 = vsel %vm335, %v223, 0.0
      %v352 = vsel %vm336, %v224, 0.0
      %v353 = vsel %vm337, %v225, 0.0
      %v354 = vsel %vm338, %v226, 0.0
      %v355 = vsel %vm339, %v227, 0.0
      %v356 = vmax.f32 %v340, %v344
      %v357 = vmax.f32 %v341, %v345
      %v358 = vmax.f32 %v342, %v346
      %v359 = vmax.f32 %v343, %v347
      %v360 = vmax.f32 %v356, %v348
      %v361 = vmax.f32 %v357, %v349
      %v362 = vmax.f32 %v358, %v350
      %v363 = vmax.f32 %v359, %v351
      %v364 = vmax.f32 %v360, %v352
      %v365 = vmax.f32 %v361, %v353
      %v366 = vmax.f32 %v362, %v354
      %v367 = vmax.f32 %v363, %v355
      %v368 = vmax.f32 %v364, %v365
      %v369 = vmax.f32 %v366, %v367
      %v370 = vmax.f32 %v368, %v369
      %v371 = vrot.slane %v370, 4
      %v372 = vmax.f32 %v370, %v371
      %v373 = vrot.slane %v372, 2
      %v374 = vmax.f32 %v372, %v373
      %v375 = vrot.slane %v374, 1
      %v376 = vmax.f32 %v374, %v375
      %v377 = vld [vmem:[#allocation2] sm:$0x1]
      %v378 = vmax.f32 %v377, %v376
      %379 = vst [vmem:[#allocation2] sm:$0x1] %v378
      %vm380 = vcmp.eq.s32.totalorder %v228, 1
      %vm381 = vcmp.eq.s32.totalorder %v229, 1
      %vm382 = vcmp.eq.s32.totalorder %v230, 1
      %vm383 = vcmp.eq.s32.totalorder %v231, 1
      %vm384 = vcmp.eq.s32.totalorder %v232, 1
      %vm385 = vcmp.eq.s32.totalorder %v233, 1
      %vm386 = vcmp.eq.s32.totalorder %v234, 1
      %vm387 = vcmp.eq.s32.totalorder %v235, 1
      %vm388 = vcmp.eq.s32.totalorder %v236, 1
      %vm389 = vcmp.eq.s32.totalorder %v237, 1
      %vm390 = vcmp.eq.s32.totalorder %v238, 1
      %vm391 = vcmp.eq.s32.totalorder %v239, 1
      %vm392 = vcmp.eq.s32.totalorder %v240, 1
      %vm393 = vcmp.eq.s32.totalorder %v241, 1
      %vm394 = vcmp.eq.s32.totalorder %v242, 1
      %vm395 = vcmp.eq.s32.totalorder %v243, 1
      %v396 = vsel %vm380, 1, 0
      %v397 = vsel %vm381, 1, 0
      %v398 = vsel %vm382, 1, 0
      %v399 = vsel %vm383, 1, 0
      %v400 = vsel %vm384, 1, 0
      %v401 = vsel %vm385, 1, 0
      %v402 = vsel %vm386, 1, 0
      %v403 = vsel %vm387, 1, 0
      %v404 = vsel %vm388, 1, 0
      %v405 = vsel %vm389, 1, 0
      %v406 = vsel %vm390, 1, 0
      %v407 = vsel %vm391, 1, 0
      %v408 = vsel %vm392, 1, 0
      %v409 = vsel %vm393, 1, 0
      %v410 = vsel %vm394, 1, 0
      %v411 = vsel %vm395, 1, 0
      %412 = vset.pattern.permute.xlu0 0
      %413 = vperm.xlu0 %412, %v396
      %v414 = vpop.permute.xlu0 %413
      %415 = vset.pattern.permute.xlu0 0
      %416 = vperm.xlu0 %415, %v397
      %v417 = vpop.permute.xlu0 %416
      %418 = vset.pattern.permute.xlu0 0
      %419 = vperm.xlu0 %418, %v398
      %v420 = vpop.permute.xlu0 %419
      %421 = vset.pattern.permute.xlu0 0
      %422 = vperm.xlu0 %421, %v399
      %v423 = vpop.permute.xlu0 %422
      %424 = vset.pattern.permute.xlu0 0
      %425 = vperm.xlu0 %424, %v400
      %v426 = vpop.permute.xlu0 %425
      %427 = vset.pattern.permute.xlu0 0
      %428 = vperm.xlu0 %427, %v401
      %v429 = vpop.permute.xlu0 %428
      %430 = vset.pattern.permute.xlu0 0
      %431 = vperm.xlu0 %430, %v402
      %v432 = vpop.permute.xlu0 %431
      %433 = vset.pattern.permute.xlu0 0
      %434 = vperm.xlu0 %433, %v403
      %v435 = vpop.permute.xlu0 %434
      %436 = vset.pattern.permute.xlu0 0
      %437 = vperm.xlu0 %436, %v404
      %v438 = vpop.permute.xlu0 %437
      %439 = vset.pattern.permute.xlu0 0
      %440 = vperm.xlu0 %439, %v405
      %v441 = vpop.permute.xlu0 %440
      %442 = vset.pattern.permute.xlu0 0
      %443 = vperm.xlu0 %442, %v406
      %v444 = vpop.permute.xlu0 %443
      %445 = vset.pattern.permute.xlu0 0
      %446 = vperm.xlu0 %445, %v407
      %v447 = vpop.permute.xlu0 %446
      %448 = vset.pattern.permute.xlu0 0
      %449 = vperm.xlu0 %448, %v408
      %v450 = vpop.permute.xlu0 %449
      %451 = vset.pattern.permute.xlu0 0
      %452 = vperm.xlu0 %451, %v409
      %v453 = vpop.permute.xlu0 %452
      %454 = vset.pattern.permute.xlu0 0
      %455 = vperm.xlu0 %454, %v410
      %v456 = vpop.permute.xlu0 %455
      %457 = vset.pattern.permute.xlu0 0
      %458 = vperm.xlu0 %457, %v411
      %v459 = vpop.permute.xlu0 %458
      %vm460 = vcmp.eq.s32.totalorder %v414, 1
      %vm461 = vcmp.eq.s32.totalorder %v417, 1
      %vm462 = vcmp.eq.s32.totalorder %v420, 1
      %vm463 = vcmp.eq.s32.totalorder %v423, 1
      %vm464 = vcmp.eq.s32.totalorder %v426, 1
      %vm465 = vcmp.eq.s32.totalorder %v429, 1
      %vm466 = vcmp.eq.s32.totalorder %v432, 1
      %vm467 = vcmp.eq.s32.totalorder %v435, 1
      %vm468 = vcmp.eq.s32.totalorder %v438, 1
      %vm469 = vcmp.eq.s32.totalorder %v441, 1
      %vm470 = vcmp.eq.s32.totalorder %v444, 1
      %vm471 = vcmp.eq.s32.totalorder %v447, 1
      %vm472 = vcmp.eq.s32.totalorder %v450, 1
      %vm473 = vcmp.eq.s32.totalorder %v453, 1
      %vm474 = vcmp.eq.s32.totalorder %v456, 1
      %vm475 = vcmp.eq.s32.totalorder %v459, 1
      %v476 = vsel %vm460, %v212, 0.0
      %v477 = vsel %vm461, %v213, 0.0
      %v478 = vsel %vm462, %v214, 0.0
      %v479 = vsel %vm463, %v215, 0.0
      %v480 = vsel %vm464, %v216, 0.0
      %v481 = vsel %vm465, %v217, 0.0
      %v482 = vsel %vm466, %v218, 0.0
      %v483 = vsel %vm467, %v219, 0.0
      %v484 = vsel %vm468, %v220, 0.0
      %v485 = vsel %vm469, %v221, 0.0
      %v486 = vsel %vm470, %v222, 0.0
      %v487 = vsel %vm471, %v223, 0.0
      %v488 = vsel %vm472, %v224, 0.0
      %v489 = vsel %vm473, %v225, 0.0
      %v490 = vsel %vm474, %v226, 0.0
      %v491 = vsel %vm475, %v227, 0.0
      %v492 = vmax.f32 %v476, %v480
      %v493 = vmax.f32 %v477, %v481
      %v494 = vmax.f32 %v478, %v482
      %v495 = vmax.f32 %v479, %v483
      %v496 = vmax.f32 %v492, %v484
      %v497 = vmax.f32 %v493, %v485
      %v498 = vmax.f32 %v494, %v486
      %v499 = vmax.f32 %v495, %v487
      %v500 = vmax.f32 %v496, %v488
      %v501 = vmax.f32 %v497, %v489
      %v502 = vmax.f32 %v498, %v490
      %v503 = vmax.f32 %v499, %v491
      %v504 = vmax.f32 %v500, %v501
      %v505 = vmax.f32 %v502, %v503
      %v506 = vmax.f32 %v504, %v505
      %v507 = vrot.slane %v506, 4
      %v508 = vmax.f32 %v506, %v507
      %v509 = vrot.slane %v508, 2
      %v510 = vmax.f32 %v508, %v509
      %v511 = vrot.slane %v510, 1
      %v512 = vmax.f32 %v510, %v511
      %v513 = vld [vmem:[#allocation2 + $0x1] sm:$0x1]
      %v514 = vmax.f32 %v513, %v512
      %515 = vst [vmem:[#allocation2 + $0x1] sm:$0x1] %v514
      %p516 = scmp.eq.s32.totalorder %s15, 3
      // Predicated region
      $region41: #{best_gnn_forward.21} parent=35 // pred_check
        %p517 = pneg %p516
      $region42: #{best_gnn_forward.21} parent=35 // pred_check_branch
        %519 = sbr.rel (%p517) target = $region44
      $region43: #{best_gnn_forward.21} parent=35 // pred_region
        %v520 = vld [vmem:[#allocation2] sm:$0xff]
        %v521 = vld [vmem:[%s2] sm:$0xff]
        %v522 = vld [vmem:[%s2 + $0x8] sm:$0xff]
        %v523 = vld [vmem:[%s2 + $0x10] sm:$0xff]
        %v524 = vld [vmem:[%s2 + $0x18] sm:$0xff]
        %v525 = vld [vmem:[%s2 + $0x20] sm:$0xff]
        %v526 = vld [vmem:[%s2 + $0x28] sm:$0xff]
        %v527 = vld [vmem:[%s2 + $0x30] sm:$0xff]
        %v528 = vld [vmem:[%s2 + $0x38] sm:$0xff]
        %v529 = vld [vmem:[%s2 + $0x40] sm:$0xff]
        %v530 = vld [vmem:[%s2 + $0x48] sm:$0xff]
        %v531 = vld [vmem:[%s2 + $0x50] sm:$0xff]
        %v532 = vld [vmem:[%s2 + $0x58] sm:$0xff]
        %v533 = vld [vmem:[%s2 + $0x60] sm:$0xff]
        %v534 = vld [vmem:[%s2 + $0x68] sm:$0xff]
        %v535 = vld [vmem:[%s2 + $0x70] sm:$0xff]
        %v536 = vld [vmem:[%s2 + $0x78] sm:$0xff]
        %v537 = vld [vmem:[%s3] sm:$0x1]
        %v539 = vlaneseq
        %v540 = vshrl.u32 %v539, 7
        %v541 = vsub.s32 0, %v540
        %v542 = vrot.slane %v537, %v541
        %544 = vmatprep.subr.mxu0 0.0
        %545 = vmatpush1.msra.mxu0 %v521
        %546 = vmatprep.subr.mxu0 0.0
        %547 = vmatpush1.msra.mxu0 %v522
        %548 = vmatprep.subr.mxu0 0.0
        %549 = vmatpush1.msra.mxu0 %v523
        %550 = vmatprep.subr.mxu0 0.0
        %551 = vmatpush1.msra.mxu0 %v524
        %552 = vmatprep.subr.mxu0 0.0
        %553 = vmatpush1.msra.mxu0 %v525
        %554 = vmatprep.subr.mxu0 0.0
        %555 = vmatpush1.msra.mxu0 %v526
        %556 = vmatprep.subr.mxu0 0.0
        %557 = vmatpush1.msra.mxu0 %v527
        %558 = vmatprep.subr.mxu0 0.0
        %559 = vmatpush1.msra.mxu0 %v528
        %560 = vmatprep.subr.mxu0 0.0
        %561 = vmatpush1.msra.mxu0 %v529
        %562 = vmatprep.subr.mxu0 0.0
        %563 = vmatpush1.msra.mxu0 %v530
        %564 = vmatprep.subr.mxu0 0.0
        %565 = vmatpush1.msra.mxu0 %v531
        %566 = vmatprep.subr.mxu0 0.0
        %567 = vmatpush1.msra.mxu0 %v532
        %568 = vmatprep.subr.mxu0 0.0
        %569 = vmatpush1.msra.mxu0 %v533
        %570 = vmatprep.subr.mxu0 0.0
        %571 = vmatpush1.msra.mxu0 %v534
        %572 = vmatprep.subr.mxu0 0.0
        %573 = vmatpush1.msra.mxu0 %v535
        %574 = vmatprep.subr.mxu0 0.0
        %575 = vmatpush1.msra.mxu0 %v536
        %576 = vmatprep.subr.mxu0 0.0
        %577 = vmatpush1.msra.mxu0 0.0
        %578 = vmatprep.subr.mxu0 0.0
        %579 = vmatpush1.msra.mxu0 0.0
        %580 = vmatprep.subr.mxu0 0.0
        %581 = vmatpush1.msra.mxu0 0.0
        %582 = vmatprep.subr.mxu0 0.0
        %583 = vmatpush1.msra.mxu0 0.0
        %584 = vmatprep.subr.mxu0 0.0
        %585 = vmatpush1.msra.mxu0 0.0
        %586 = vmatprep.subr.mxu0 0.0
        %587 = vmatpush1.msra.mxu0 0.0
        %588 = vmatprep.subr.mxu0 0.0
        %589 = vmatpush1.msra.mxu0 0.0
        %590 = vmatprep.subr.mxu0 0.0
        %591 = vmatpush1.msra.mxu0 0.0
        %592 = vmatprep.subr.mxu0 0.0
        %593 = vmatpush1.msra.mxu0 0.0
        %594 = vmatprep.subr.mxu0 0.0
        %595 = vmatpush1.msra.mxu0 0.0
        %596 = vmatprep.subr.mxu0 0.0
        %597 = vmatpush1.msra.mxu0 0.0
        %598 = vmatprep.subr.mxu0 0.0
        %599 = vmatpush1.msra.mxu0 0.0
        %600 = vmatprep.subr.mxu0 0.0
        %601 = vmatpush1.msra.mxu0 0.0
        %602 = vmatprep.subr.mxu0 0.0
        %603 = vmatpush1.msra.mxu0 0.0
        %604 = vmatprep.subr.mxu0 0.0
        %605 = vmatpush1.msra.mxu0 0.0
        %606 = vmatprep.subr.mxu0 0.0
        %607 = vmatpush1.msra.mxu0 0.0
        %608 = vmatprep.mubr.f32.mxu0 0.0
        %609 = vmatmul.mubr.f32.gmra.mrb[0].mxu0 %v520
        %v610 = vpop.f32.mrb[0].mxu0
        %v611 = vadd.f32 %v542, %v610
        %v612 = vpop.f32.mrb[0].mxu0
        %613 = vdwg.mxu0
        %614 = vst [vmem:[%s4] sm:$0xff] %v611
      $region44: #{best_gnn_forward.21} parent=35 // pred_fallthru
        _
      // Predicated region
      $region45: #{best_gnn_forward.21} parent=35 // pred_check
        %p615 = pneg %p122
      $region46: #{best_gnn_forward.21} parent=35 // pred_check_branch
        %617 = sbr.rel (%p615) target = $region48
      $region47: #{best_gnn_forward.21} parent=35 // pred_region
        _
      $region48: #{best_gnn_forward.21} parent=35 // pred_fallthru
        _
      // Predicated region
      $region49: #{best_gnn_forward.21} parent=35 // pred_check
        %p618 = pneg %p122
      $region50: #{best_gnn_forward.21} parent=35 // pred_check_branch
        %620 = sbr.rel (%p618) target = $region52
      $region51: #{best_gnn_forward.21} parent=35 // pred_region
        _
      $region52: #{best_gnn_forward.21} parent=35 // pred_fallthru
        _
    $region36: #{best_gnn_forward.21} parent=5 // pred_fallthru
      _
    %p621 = scmp.le.s32.totalorder 2, %s10
    // Predicated region
    $region53: #{best_gnn_forward.21} parent=5 // pred_check
      %p622 = pneg %p621
    $region54: #{best_gnn_forward.21} parent=5 // pred_check_branch
      %624 = sbr.rel (%p622) target = $region56
    $region55: #{best_gnn_forward.21} parent=5 // pred_region
      %s625 = ssub.s32 %s10, 2
    $region56: #{best_gnn_forward.21} parent=5 // pred_fallthru
      _
  $region6: #{best_gnn_forward.21} parent=0 // loop_footer
    %s14 = sadd.s32 1, %s10
  $region7: #{best_gnn_forward.21} parent=0 // loop_footer_branch
    %9 = sbr.rel target = $region3
  $region8: #{best_gnn_forward.21} parent=0 // loop_exit
    _

</llo_original>
